<compile_context>
chip_gen: v7x
topology: tpu7x:2x2x1
jax: 0.10.0
libtpu: 0.0.40
codegen_flags: <defaults>
</compile_context>

<pallas_src>
import functools
import math

import jax
import jax.numpy as jnp
from jax.experimental import pallas as pl
from jax.experimental.pallas import tpu as pltpu


_EPS = 1e-5
_VMEM_LIMIT = 48 * 1024 * 1024  # above v5e's 16 MiB default, below v7x physical
_PARALLEL = pltpu.CompilerParams(
    dimension_semantics=("parallel",),
    vmem_limit_bytes=_VMEM_LIMIT,
)


def _m_tile(M, cap=512):
    """Row-tile size: full M for small problems, fixed cap (multiple of 8) otherwise."""
    return M if M <= cap else cap


def _layer_norm_f32(s, g, b, eps):
    mu = jnp.mean(s, axis=-1, keepdims=True)
    var = jnp.mean(jnp.square(s - mu), axis=-1, keepdims=True)
    return (s - mu) * jax.lax.rsqrt(var + eps) * g + b


# ---------------------------------------------------------------------------
# Pallas kernels
# ---------------------------------------------------------------------------
def _self_attn_block_kernel(x_ref, wqkv_ref, bqkv_ref, wo_ref, bo_ref,
                            g_ref, b_ref, o_ref, merged_ref,
                            *, n_heads, scale, eps):
    """LayerNorm(x + SelfAttn(x)) for one batch element, fully fused:
    fused QKV projection, causal MHA, single W_o matmul, residual + LN."""
    x = x_ref[0].astype(jnp.float32)                           # (L, D)
    L, D = x.shape
    E = D // n_heads

    qkv = jnp.dot(x.astype(jnp.bfloat16), wqkv_ref[...],       # bf16 MXU, f32 acc
                  preferred_element_type=jnp.float32)
    qkv = qkv + bqkv_ref[...].astype(jnp.float32)               # (L, 3D)
    qkv_bf = qkv.astype(jnp.bfloat16)

    row = jax.lax.broadcasted_iota(jnp.int32, (L, L), 0)
    col = jax.lax.broadcasted_iota(jnp.int32, (L, L), 1)
    causal = col <= row
    neg_big = jnp.float32(-1e30)

    for h in range(n_heads):                                    # static unroll, H small
        q = qkv_bf[:, h * E:(h + 1) * E]
        k = qkv_bf[:, D + h * E:D + (h + 1) * E]
        v = qkv_bf[:, 2 * D + h * E:2 * D + (h + 1) * E]
        s = jax.lax.dot_general(q, k, (((1,), (1,)), ((), ())),
                                preferred_element_type=jnp.float32) * scale
        s = jnp.where(causal, s, neg_big)
        m = jnp.max(s, axis=-1, keepdims=True)
        e = jnp.exp(s - m)
        p = e * pl.reciprocal(jnp.sum(e, axis=-1, keepdims=True), approx=True)
        merged_ref[:, h * E:(h + 1) * E] = jnp.dot(
            p.astype(jnp.bfloat16), v, preferred_element_type=jnp.float32)

    # Single D-deep output projection (full MXU contraction depth).
    attn_out = jnp.dot(merged_ref[...].astype(jnp.bfloat16), wo_ref[...],
                       preferred_element_type=jnp.float32)
    attn_out = attn_out + bo_ref[...].astype(jnp.float32)

    y = _layer_norm_f32(x + attn_out, g_ref[...].astype(jnp.float32),
                        b_ref[...].astype(jnp.float32), eps)
    o_ref[0] = y.astype(o_ref.dtype)


def _cross_attn_block_kernel(x_ref, cr_ref, wq_ref, bq_ref, wkv_ref, bkv_ref,
                             wo_ref, bo_ref, g_ref, b_ref,
                             o_ref, a_ref, merged_ref,
                             *, n_heads, scale, eps):
    """LayerNorm(x + CrossAttn(x, cross)) for one batch element, fully fused.
    Attention weights (returned by the module) use exact normalization."""
    x = x_ref[0].astype(jnp.float32)                            # (Lq, D)
    Lq, D = x.shape
    E = D // n_heads

    q_all = jnp.dot(x.astype(jnp.bfloat16), wq_ref[...],
                    preferred_element_type=jnp.float32) + bq_ref[...].astype(jnp.float32)
    kv = jnp.dot(cr_ref[0].astype(jnp.bfloat16), wkv_ref[...],
                 preferred_element_type=jnp.float32) + bkv_ref[...].astype(jnp.float32)
    q_bf = q_all.astype(jnp.bfloat16)
    kv_bf = kv.astype(jnp.bfloat16)

    for h in range(n_heads):
        q = q_bf[:, h * E:(h + 1) * E]
        k = kv_bf[:, h * E:(h + 1) * E]
        v = kv_bf[:, D + h * E:D + (h + 1) * E]
        s = jax.lax.dot_general(q, k, (((1,), (1,)), ((), ())),
                                preferred_element_type=jnp.float32) * scale
        m = jnp.max(s, axis=-1, keepdims=True)
        e = jnp.exp(s - m)
        p = e / jnp.sum(e, axis=-1, keepdims=True)              # exact: returned output
        a_ref[0, h, :, :] = p.astype(a_ref.dtype)
        merged_ref[:, h * E:(h + 1) * E] = jnp.dot(
            p.astype(jnp.bfloat16), v, preferred_element_type=jnp.float32)

    attn_out = jnp.dot(merged_ref[...].astype(jnp.bfloat16), wo_ref[...],
                       preferred_element_type=jnp.float32)
    attn_out = attn_out + bo_ref[...].astype(jnp.float32)

    y = _layer_norm_f32(x + attn_out, g_ref[...].astype(jnp.float32),
                        b_ref[...].astype(jnp.float32), eps)
    o_ref[0] = y.astype(o_ref.dtype)


def _ffn_ln_kernel(x_ref, w1_ref, b1_ref, w2_ref, b2_ref, g_ref, b_ref, o_ref, *, eps):
    """LayerNorm(x + Lin2(relu(Lin1(x)))) — d_ff intermediate never leaves VMEM."""
    x = x_ref[...].astype(jnp.float32)
    h = jnp.dot(x.astype(jnp.bfloat16), w1_ref[...], preferred_element_type=jnp.float32)
    h = jnp.maximum(h + b1_ref[...].astype(jnp.float32), 0.0)
    z = jnp.dot(h.astype(jnp.bfloat16), w2_ref[...], preferred_element_type=jnp.float32)
    z = z + b2_ref[...].astype(jnp.float32)
    y = _layer_norm_f32(x + z, g_ref[...].astype(jnp.float32),
                        b_ref[...].astype(jnp.float32), eps)
    o_ref[...] = y.astype(o_ref.dtype)


def _conv3_kernel(x_ref, w0_ref, w1_ref, w2_ref, b_ref, o_ref):
    """Conv1d(k=3, pad=1) for one batch element.  The halo is built in-kernel
    from shifted views (no padded HBM copy); three bf16 matmuls, f32 accumulate."""
    x = x_ref[0].astype(jnp.float32)                            # (L, Din)
    L, Din = x.shape
    zrow = jnp.zeros((1, Din), jnp.float32)
    x_prev = jnp.concatenate([zrow, x[:L - 1, :]], axis=0)      # x[t-1], 0 at t=0
    x_next = jnp.concatenate([x[1:, :], zrow], axis=0)          # x[t+1], 0 at t=L-1
    acc = jnp.dot(x_prev.astype(jnp.bfloat16), w0_ref[...],
                  preferred_element_type=jnp.float32)
    acc = acc + jnp.dot(x.astype(jnp.bfloat16), w1_ref[...],
                        preferred_element_type=jnp.float32)
    acc = acc + jnp.dot(x_next.astype(jnp.bfloat16), w2_ref[...],
                        preferred_element_type=jnp.float32)
    acc = acc + b_ref[...].astype(jnp.float32)
    o_ref[0] = acc.astype(o_ref.dtype)


def _ln_linear_kernel(x_ref, g_ref, b_ref, w_ref, bias_ref, o_ref, *, eps):
    """Final LayerNorm + projection fused; projection width padded to 128 lanes."""
    x = x_ref[...].astype(jnp.float32)
    y = _layer_norm_f32(x, g_ref[...].astype(jnp.float32),
                        b_ref[...].astype(jnp.float32), eps)
    out = jnp.dot(y.astype(jnp.bfloat16), w_ref[...], preferred_element_type=jnp.float32)
    out = out + bias_ref[...].astype(jnp.float32)
    o_ref[...] = out.astype(o_ref.dtype)


# ---------------------------------------------------------------------------
# Kernel wrappers
# ---------------------------------------------------------------------------
def self_attn_block(x, sa, norm_g, norm_b, n_heads):
    B, L, D = x.shape
    scale = 1.0 / math.sqrt(D // n_heads)
    return pl.pallas_call(
        functools.partial(_self_attn_block_kernel, n_heads=n_heads, scale=scale, eps=_EPS),
        grid=(B,),
        in_specs=[
            pl.BlockSpec((1, L, D), lambda i: (i, 0, 0)),
            pl.BlockSpec((D, 3 * D), lambda i: (0, 0)),
            pl.BlockSpec((1, 3 * D), lambda i: (0, 0)),
            pl.BlockSpec((D, D), lambda i: (0, 0)),
            pl.BlockSpec((1, D), lambda i: (0, 0)),
            pl.BlockSpec((1, D), lambda i: (0, 0)),
            pl.BlockSpec((1, D), lambda i: (0, 0)),
        ],
        out_specs=pl.BlockSpec((1, L, D), lambda i: (i, 0, 0)),
        out_shape=jax.ShapeDtypeStruct((B, L, D), x.dtype),
        scratch_shapes=[pltpu.VMEM((L, D), jnp.float32)],
        compiler_params=_PARALLEL,
    )(x,
      sa["w_qkv"].astype(jnp.bfloat16), sa["b_qkv"].reshape(1, 3 * D),
      sa["wo"].astype(jnp.bfloat16), sa["bo"].reshape(1, D),
      norm_g.reshape(1, D), norm_b.reshape(1, D))


def cross_attn_block(x, cross, ca, norm_g, norm_b, n_heads):
    B, Lq, D = x.shape
    Lk = cross.shape[1]
    H = n_heads
    scale = 1.0 / math.sqrt(D // n_heads)
    out, attn = pl.pallas_call(
        functools.partial(_cross_attn_block_kernel, n_heads=n_heads, scale=scale, eps=_EPS),
        grid=(B,),
        in_specs=[
            pl.BlockSpec((1, Lq, D), lambda i: (i, 0, 0)),
            pl.BlockSpec((1, Lk, D), lambda i: (i, 0, 0)),
            pl.BlockSpec((D, D), lambda i: (0, 0)),
            pl.BlockSpec((1, D), lambda i: (0, 0)),
            pl.BlockSpec((D, 2 * D), lambda i: (0, 0)),
            pl.BlockSpec((1, 2 * D), lambda i: (0, 0)),
            pl.BlockSpec((D, D), lambda i: (0, 0)),
            pl.BlockSpec((1, D), lambda i: (0, 0)),
            pl.BlockSpec((1, D), lambda i: (0, 0)),
            pl.BlockSpec((1, D), lambda i: (0, 0)),
        ],
        out_specs=[
            pl.BlockSpec((1, Lq, D), lambda i: (i, 0, 0)),
            pl.BlockSpec((1, H, Lq, Lk), lambda i: (i, 0, 0, 0)),
        ],
        out_shape=[
            jax.ShapeDtypeStruct((B, Lq, D), x.dtype),
            jax.ShapeDtypeStruct((B, H, Lq, Lk), jnp.float32),
        ],
        scratch_shapes=[pltpu.VMEM((Lq, D), jnp.float32)],
        compiler_params=_PARALLEL,
    )(x, cross,
      ca["wq"].astype(jnp.bfloat16), ca["bq"].reshape(1, D),
      ca["w_kv"].astype(jnp.bfloat16), ca["b_kv"].reshape(1, 2 * D),
      ca["wo"].astype(jnp.bfloat16), ca["bo"].reshape(1, D),
      norm_g.reshape(1, D), norm_b.reshape(1, D))
    return out, attn


def ffn_residual_norm(x, p, eps=_EPS):
    lead = x.shape[:-1]
    D = x.shape[-1]
    F = p["ff1_w"].shape[1]
    x2 = x.reshape(-1, D)
    M = x2.shape[0]
    tm = _m_tile(M, cap=256)
    out = pl.pallas_call(
        functools.partial(_ffn_ln_kernel, eps=eps),
        grid=(pl.cdiv(M, tm),),
        in_specs=[
            pl.BlockSpec((tm, D), lambda i: (i, 0)),
            pl.BlockSpec((D, F), lambda i: (0, 0)),
            pl.BlockSpec((1, F), lambda i: (0, 0)),
            pl.BlockSpec((F, D), lambda i: (0, 0)),
            pl.BlockSpec((1, D), lambda i: (0, 0)),
            pl.BlockSpec((1, D), lambda i: (0, 0)),
            pl.BlockSpec((1, D), lambda i: (0, 0)),
        ],
        out_specs=pl.BlockSpec((tm, D), lambda i: (i, 0)),
        out_shape=jax.ShapeDtypeStruct((M, D), x.dtype),
        compiler_params=_PARALLEL,
    )(x2,
      p["ff1_w"].astype(jnp.bfloat16), p["ff1_b"].reshape(1, F),
      p["ff2_w"].astype(jnp.bfloat16), p["ff2_b"].reshape(1, D),
      p["norm3_g"].reshape(1, D), p["norm3_b"].reshape(1, D))
    return out.reshape(*lead, D)


def conv1d_same(x, w_taps_bf16, b):
    """PyTorch Conv1d(D_in, D_out, k=3, padding=1) on x:(B, L, D_in).
    w_taps_bf16: 3 bf16 tensors (D_in, D_out), pre-folded from (D_out, D_in, 3)."""
    B, L, Din = x.shape
    Dout = w_taps_bf16[0].shape[1]
    return pl.pallas_call(
        _conv3_kernel,
        grid=(B,),
        in_specs=[
            pl.BlockSpec((1, L, Din), lambda i: (i, 0, 0)),
            pl.BlockSpec((Din, Dout), lambda i: (0, 0)),
            pl.BlockSpec((Din, Dout), lambda i: (0, 0)),
            pl.BlockSpec((Din, Dout), lambda i: (0, 0)),
            pl.BlockSpec((1, Dout), lambda i: (0, 0)),
        ],
        out_specs=pl.BlockSpec((1, L, Dout), lambda i: (i, 0, 0)),
        out_shape=jax.ShapeDtypeStruct((B, L, Dout), x.dtype),
        compiler_params=_PARALLEL,
    )(x, w_taps_bf16[0], w_taps_bf16[1], w_taps_bf16[2], b.reshape(1, Dout))


def norm_project(x, g, b, w, bias, eps=_EPS):
    lead = x.shape[:-1]
    D = x.shape[-1]
    N = w.shape[1]
    Np = ((N + 127) // 128) * 128          # lane-dense output; sliced back below
    w_p = jnp.pad(w.astype(jnp.bfloat16), ((0, 0), (0, Np - N)))
    bias_p = jnp.pad(bias, ((0, Np - N),)).reshape(1, Np)
    x2 = x.reshape(-1, D)
    M = x2.shape[0]
    tm = _m_tile(M)
    out = pl.pallas_call(
        functools.partial(_ln_linear_kernel, eps=eps),
        grid=(pl.cdiv(M, tm),),
        in_specs=[
            pl.BlockSpec((tm, D), lambda i: (i, 0)),
            pl.BlockSpec((1, D), lambda i: (0, 0)),
            pl.BlockSpec((1, D), lambda i: (0, 0)),
            pl.BlockSpec((D, Np), lambda i: (0, 0)),
            pl.BlockSpec((1, Np), lambda i: (0, 0)),
        ],
        out_specs=pl.BlockSpec((tm, Np), lambda i: (i, 0)),
        out_shape=jax.ShapeDtypeStruct((M, Np), x.dtype),
        compiler_params=_PARALLEL,
    )(x2, g.reshape(1, D), b.reshape(1, D), w_p, bias_p)
    return out[:, :N].reshape(*lead, N)


# ---------------------------------------------------------------------------
# Decoder forward (matches PyTorch Decoder.forward semantics)
# ---------------------------------------------------------------------------
def decoder_layer_forward(x, cross, p, n_heads):
    x = self_attn_block(x, p["self_attn"], p["norm1_g"], p["norm1_b"], n_heads)
    x, attn = cross_attn_block(x, cross, p["cross_attn"], p["norm2_g"], p["norm2_b"], n_heads)
    x = ffn_residual_norm(x, p)                               # norm3(x + FFN(x))
    return x, attn


def decoder_forward(x, cross, params, n_heads,
                    x_mask=None, cross_mask=None, tau=None, delta=None):
    # Hoist conv-weight fold + bf16 cast out of the per-layer loop (conv is shared).
    conv_w = params["conv_w"]                                 # (D_out, D_in, 3) PyTorch layout
    w_taps = tuple(conv_w[:, :, t].T.astype(jnp.bfloat16) for t in range(3))
    attns = []
    for layer_p in params["layers"]:
        x = conv1d_same(x, w_taps, params["conv_b"])
        x, attn = decoder_layer_forward(x, cross, layer_p, n_heads)
        attns.append(attn)
    x = norm_project(x, params["norm_g"], params["norm_b"],   # self.norm + self.projection
                     params["proj_w"], params["proj_b"])
    return x, attns


decoder_forward_jit = jax.jit(decoder_forward, static_argnames=("n_heads",))


# ---------------------------------------------------------------------------
# Deterministic parameter construction
# ---------------------------------------------------------------------------
def init_params(key, d_model, n_heads, d_ff, c_out, n_layers):
    def dense(k, shape, scale=0.05):
        return (scale * jax.random.normal(k, shape)).astype(jnp.float32)

    keys = iter(jax.random.split(key, 14 * n_layers + 8))

    layers = []
    for _ in range(n_layers):
        layers.append({
            "self_attn": {
                "w_qkv": dense(next(keys), (d_model, 3 * d_model)),
                "b_qkv": dense(next(keys), (3 * d_model,)),
                "wo": dense(next(keys), (d_model, d_model)),
                "bo": dense(next(keys), (d_model,)),
            },
            "cross_attn": {
                "wq": dense(next(keys), (d_model, d_model)),
                "bq": dense(next(keys), (d_model,)),
                "w_kv": dense(next(keys), (d_model, 2 * d_model)),
                "b_kv": dense(next(keys), (2 * d_model,)),
                "wo": dense(next(keys), (d_model, d_model)),
                "bo": dense(next(keys), (d_model,)),
            },
            "ff1_w": dense(next(keys), (d_model, d_ff)), "ff1_b": dense(next(keys), (d_ff,)),
            "ff2_w": dense(next(keys), (d_ff, d_model)), "ff2_b": dense(next(keys), (d_model,)),
            "norm1_g": jnp.ones((d_model,), jnp.float32), "norm1_b": jnp.zeros((d_model,), jnp.float32),
            "norm2_g": jnp.ones((d_model,), jnp.float32), "norm2_b": jnp.zeros((d_model,), jnp.float32),
            "norm3_g": jnp.ones((d_model,), jnp.float32), "norm3_b": jnp.zeros((d_model,), jnp.float32),
        })

    return {
        "layers": layers,
        "conv_w": dense(next(keys), (d_model, d_model, 3)),
        "conv_b": dense(next(keys), (d_model,)),
        "norm_g": jnp.ones((d_model,), jnp.float32),
        "norm_b": jnp.zeros((d_model,), jnp.float32),
        "proj_w": dense(next(keys), (d_model, c_out)),
        "proj_b": dense(next(keys), (c_out,)),
    }


# ---------------------------------------------------------------------------
if __name__ == "__main__":
    B, L_dec, L_enc = 2, 8, 16
    d_model, n_heads, d_ff, c_out, n_layers = 32, 4, 64, 4, 2

    key = jax.random.PRNGKey(0)
    kx, kc, kp = jax.random.split(key, 3)
    x = jax.random.normal(kx, (B, L_dec, d_model), dtype=jnp.float32)
    cross = jax.random.normal(kc, (B, L_enc, d_model), dtype=jnp.float32)
    params = init_params(kp, d_model, n_heads, d_ff, c_out, n_layers)

    out, attns = decoder_forward_jit(x, cross, params, n_heads=n_heads)
    jax.block_until_ready(out)
    for a in attns:
        jax.block_until_ready(a)

    assert out.shape == (B, L_dec, c_out)
    assert len(attns) == n_layers and attns[0].shape == (B, n_heads, L_dec, L_enc)
    print("KERNEL_OK")
</pallas_src>

<mosaic_0001>
module attributes {stable_mosaic.version = 11 : i64} {
  func.func @_conv3_kernel(%arg0: i32, %arg1: memref<1x8x32xf32, #tpu.memory_space<vmem>>, %arg2: memref<32x32xbf16, #tpu.memory_space<vmem>>, %arg3: memref<32x32xbf16, #tpu.memory_space<vmem>>, %arg4: memref<32x32xbf16, #tpu.memory_space<vmem>>, %arg5: memref<1x32xf32, #tpu.memory_space<vmem>>, %arg6: memref<1x8x32xf32, #tpu.memory_space<vmem>>) attributes {dimension_semantics = [#tpu.dimension_semantics<parallel>], iteration_bounds = array<i64: 2>, scalar_prefetch = 0 : i64, scratch_operands = 0 : i64, tpu.core_type = #tpu.core_type<tc>, window_params = [{transform_indices = @transform_0, window_bounds = array<i64: 1, 8, 32>}, {pipeline_mode = #tpu.pipeline_mode<synchronous>, transform_indices = @transform_1, window_bounds = array<i64: 32, 32>}, {pipeline_mode = #tpu.pipeline_mode<synchronous>, transform_indices = @transform_2, window_bounds = array<i64: 32, 32>}, {pipeline_mode = #tpu.pipeline_mode<synchronous>, transform_indices = @transform_3, window_bounds = array<i64: 32, 32>}, {pipeline_mode = #tpu.pipeline_mode<synchronous>, transform_indices = @transform_4, window_bounds = array<i64: 1, 32>}, {transform_indices = @transform_5, window_bounds = array<i64: 1, 8, 32>}]} {
    %c0 = arith.constant 0 : index
    %c0_0 = arith.constant 0 : index
    %c0_1 = arith.constant 0 : index
    %0 = vector.load %arg1[%c0, %c0_0, %c0_1] : memref<1x8x32xf32, #tpu.memory_space<vmem>>, vector<1x8x32xf32>
    %1 = vector.shape_cast %0 : vector<1x8x32xf32> to vector<8x32xf32>
    %cst = arith.constant 0.000000e+00 : f32
    %2 = vector.broadcast %cst : f32 to vector<1x32xf32>
    %3 = vector.extract_strided_slice %1 {offsets = [0, 0], sizes = [7, 32], strides = [1, 1]} : vector<8x32xf32> to vector<7x32xf32>
    %4 = tpu.concatenate %2, %3 in 0 : vector<1x32xf32>, vector<7x32xf32> -> vector<8x32xf32>
    %5 = vector.extract_strided_slice %1 {offsets = [1, 0], sizes = [7, 32], strides = [1, 1]} : vector<8x32xf32> to vector<7x32xf32>
    %6 = tpu.concatenate %5, %2 in 0 : vector<7x32xf32>, vector<1x32xf32> -> vector<8x32xf32>
    %7 = arith.truncf %4 : vector<8x32xf32> to vector<8x32xbf16>
    %c0_2 = arith.constant 0 : index
    %c0_3 = arith.constant 0 : index
    %8 = vector.load %arg2[%c0_2, %c0_3] : memref<32x32xbf16, #tpu.memory_space<vmem>>, vector<32x32xbf16>
    %cst_4 = arith.constant dense<0.000000e+00> : vector<8x32xf32>
    %9 = tpu.matmul %7, %8, %cst_4 {dimension_numbers = #tpu.dot_dimension_numbers<[1], [0], [0], [1], [0, 0, 1, 1], [], []>} : vector<8x32xbf16>, vector<32x32xbf16>, vector<8x32xf32> -> vector<8x32xf32>
    %10 = arith.truncf %1 : vector<8x32xf32> to vector<8x32xbf16>
    %c0_5 = arith.constant 0 : index
    %c0_6 = arith.constant 0 : index
    %11 = vector.load %arg3[%c0_5, %c0_6] : memref<32x32xbf16, #tpu.memory_space<vmem>>, vector<32x32xbf16>
    %cst_7 = arith.constant dense<0.000000e+00> : vector<8x32xf32>
    %12 = tpu.matmul %10, %11, %cst_7 {dimension_numbers = #tpu.dot_dimension_numbers<[1], [0], [0], [1], [0, 0, 1, 1], [], []>} : vector<8x32xbf16>, vector<32x32xbf16>, vector<8x32xf32> -> vector<8x32xf32>
    %13 = arith.addf %9, %12 : vector<8x32xf32>
    %14 = arith.truncf %6 : vector<8x32xf32> to vector<8x32xbf16>
    %c0_8 = arith.constant 0 : index
    %c0_9 = arith.constant 0 : index
    %15 = vector.load %arg4[%c0_8, %c0_9] : memref<32x32xbf16, #tpu.memory_space<vmem>>, vector<32x32xbf16>
    %cst_10 = arith.constant dense<0.000000e+00> : vector<8x32xf32>
    %16 = tpu.matmul %14, %15, %cst_10 {dimension_numbers = #tpu.dot_dimension_numbers<[1], [0], [0], [1], [0, 0, 1, 1], [], []>} : vector<8x32xbf16>, vector<32x32xbf16>, vector<8x32xf32> -> vector<8x32xf32>
    %17 = arith.addf %13, %16 : vector<8x32xf32>
    %c0_11 = arith.constant 0 : index
    %c0_12 = arith.constant 0 : index
    %18 = vector.load %arg5[%c0_11, %c0_12] : memref<1x32xf32, #tpu.memory_space<vmem>>, vector<1x32xf32>
    %19 = vector.broadcast %18 : vector<1x32xf32> to vector<8x32xf32>
    %20 = arith.addf %17, %19 : vector<8x32xf32>
    %c0_13 = arith.constant 0 : index
    %c0_14 = arith.constant 0 : index
    %c0_15 = arith.constant 0 : index
    %21 = vector.load %arg6[%c0_13, %c0_14, %c0_15] : memref<1x8x32xf32, #tpu.memory_space<vmem>>, vector<1x8x32xf32>
    %22 = vector.shape_cast %21 : vector<1x8x32xf32> to vector<8x32xf32>
    %23 = vector.shape_cast %20 : vector<8x32xf32> to vector<1x8x32xf32>
    tpu.vector_store %arg6[%c0_13, %c0_14, %c0_15], %23 {strides = array<i32>} : memref<1x8x32xf32, #tpu.memory_space<vmem>>, vector<1x8x32xf32>,
    return
  }
  func.func @transform_0(%arg0: i32) -> (i32, i32, i32) {
    %c0_i32 = arith.constant 0 : i32
    %c0_i32_0 = arith.constant 0 : i32
    %c0_i32_1 = arith.constant 0 : i32
    return %arg0, %c0_i32, %c0_i32_0 : i32, i32, i32
  }
  func.func @transform_1(%arg0: i32) -> (i32, i32) {
    %c0_i32 = arith.constant 0 : i32
    %c0_i32_0 = arith.constant 0 : i32
    %c0_i32_1 = arith.constant 0 : i32
    return %c0_i32, %c0_i32_0 : i32, i32
  }
  func.func @transform_2(%arg0: i32) -> (i32, i32) {
    %c0_i32 = arith.constant 0 : i32
    %c0_i32_0 = arith.constant 0 : i32
    %c0_i32_1 = arith.constant 0 : i32
    return %c0_i32, %c0_i32_0 : i32, i32
  }
  func.func @transform_3(%arg0: i32) -> (i32, i32) {
    %c0_i32 = arith.constant 0 : i32
    %c0_i32_0 = arith.constant 0 : i32
    %c0_i32_1 = arith.constant 0 : i32
    return %c0_i32, %c0_i32_0 : i32, i32
  }
  func.func @transform_4(%arg0: i32) -> (i32, i32) {
    %c0_i32 = arith.constant 0 : i32
    %c0_i32_0 = arith.constant 0 : i32
    %c0_i32_1 = arith.constant 0 : i32
    return %c0_i32, %c0_i32_0 : i32, i32
  }
  func.func @transform_5(%arg0: i32) -> (i32, i32, i32) {
    %c0_i32 = arith.constant 0 : i32
    %c0_i32_0 = arith.constant 0 : i32
    %c0_i32_1 = arith.constant 0 : i32
    return %arg0, %c0_i32, %c0_i32_0 : i32, i32, i32
  }
}

module attributes {stable_mosaic.version = 11 : i64} {
  func.func @_ffn_ln_kernel(%arg0: i32, %arg1: memref<16x32xf32, #tpu.memory_space<vmem>>, %arg2: memref<32x64xbf16, #tpu.memory_space<vmem>>, %arg3: memref<1x64xf32, #tpu.memory_space<vmem>>, %arg4: memref<64x32xbf16, #tpu.memory_space<vmem>>, %arg5: memref<1x32xf32, #tpu.memory_space<vmem>>, %arg6: memref<1x32xf32, #tpu.memory_space<vmem>>, %arg7: memref<1x32xf32, #tpu.memory_space<vmem>>, %arg8: memref<16x32xf32, #tpu.memory_space<vmem>>) attributes {dimension_semantics = [#tpu.dimension_semantics<parallel>], iteration_bounds = array<i64: 1>, scalar_prefetch = 0 : i64, scratch_operands = 0 : i64, tpu.core_type = #tpu.core_type<tc>, window_params = [{transform_indices = @transform_0, window_bounds = array<i64: 16, 32>}, {pipeline_mode = #tpu.pipeline_mode<synchronous>, transform_indices = @transform_1, window_bounds = array<i64: 32, 64>}, {pipeline_mode = #tpu.pipeline_mode<synchronous>, transform_indices = @transform_2, window_bounds = array<i64: 1, 64>}, {pipeline_mode = #tpu.pipeline_mode<synchronous>, transform_indices = @transform_3, window_bounds = array<i64: 64, 32>}, {pipeline_mode = #tpu.pipeline_mode<synchronous>, transform_indices = @transform_4, window_bounds = array<i64: 1, 32>}, {pipeline_mode = #tpu.pipeline_mode<synchronous>, transform_indices = @transform_5, window_bounds = array<i64: 1, 32>}, {pipeline_mode = #tpu.pipeline_mode<synchronous>, transform_indices = @transform_6, window_bounds = array<i64: 1, 32>}, {transform_indices = @transform_7, window_bounds = array<i64: 16, 32>}]} {
    %c0 = arith.constant 0 : index
    %c0_0 = arith.constant 0 : index
    %0 = vector.load %arg1[%c0, %c0_0] : memref<16x32xf32, #tpu.memory_space<vmem>>, vector<16x32xf32>
    %1 = arith.truncf %0 : vector<16x32xf32> to vector<16x32xbf16>
    %c0_1 = arith.constant 0 : index
    %c0_2 = arith.constant 0 : index
    %2 = vector.load %arg2[%c0_1, %c0_2] : memref<32x64xbf16, #tpu.memory_space<vmem>>, vector<32x64xbf16>
    %cst = arith.constant dense<0.000000e+00> : vector<16x64xf32>
    %3 = tpu.matmul %1, %2, %cst {dimension_numbers = #tpu.dot_dimension_numbers<[1], [0], [0], [1], [0, 0, 1, 1], [], []>} : vector<16x32xbf16>, vector<32x64xbf16>, vector<16x64xf32> -> vector<16x64xf32>
    %c0_3 = arith.constant 0 : index
    %c0_4 = arith.constant 0 : index
    %4 = vector.load %arg3[%c0_3, %c0_4] : memref<1x64xf32, #tpu.memory_space<vmem>>, vector<1x64xf32>
    %5 = vector.broadcast %4 : vector<1x64xf32> to vector<16x64xf32>
    %6 = arith.addf %3, %5 : vector<16x64xf32>
    %cst_5 = arith.constant 0.000000e+00 : f32
    %7 = vector.broadcast %cst_5 : f32 to vector<16x64xf32>
    %8 = arith.maximumf %6, %7 : vector<16x64xf32>
    %9 = arith.truncf %8 : vector<16x64xf32> to vector<16x64xbf16>
    %c0_6 = arith.constant 0 : index
    %c0_7 = arith.constant 0 : index
    %10 = vector.load %arg4[%c0_6, %c0_7] : memref<64x32xbf16, #tpu.memory_space<vmem>>, vector<64x32xbf16>
    %cst_8 = arith.constant dense<0.000000e+00> : vector<16x32xf32>
    %11 = tpu.matmul %9, %10, %cst_8 {dimension_numbers = #tpu.dot_dimension_numbers<[1], [0], [0], [1], [0, 0, 1, 1], [], []>} : vector<16x64xbf16>, vector<64x32xbf16>, vector<16x32xf32> -> vector<16x32xf32>
    %c0_9 = arith.constant 0 : index
    %c0_10 = arith.constant 0 : index
    %12 = vector.load %arg5[%c0_9, %c0_10] : memref<1x32xf32, #tpu.memory_space<vmem>>, vector<1x32xf32>
    %13 = vector.broadcast %12 : vector<1x32xf32> to vector<16x32xf32>
    %14 = arith.addf %11, %13 : vector<16x32xf32>
    %15 = arith.addf %0, %14 : vector<16x32xf32>
    %c0_11 = arith.constant 0 : index
    %c0_12 = arith.constant 0 : index
    %16 = vector.load %arg6[%c0_11, %c0_12] : memref<1x32xf32, #tpu.memory_space<vmem>>, vector<1x32xf32>
    %c0_13 = arith.constant 0 : index
    %c0_14 = arith.constant 0 : index
    %17 = vector.load %arg7[%c0_13, %c0_14] : memref<1x32xf32, #tpu.memory_space<vmem>>, vector<1x32xf32>
    %cst_15 = arith.constant dense<0.000000e+00> : vector<16xf32>
    %18 = vector.multi_reduction <add>, %15, %cst_15 [1] : vector<16x32xf32> to vector<16xf32>
    %19 = vector.shape_cast %18 : vector<16xf32> to vector<16x1xf32>
    %cst_16 = arith.constant 3.200000e+01 : f32
    %20 = vector.broadcast %cst_16 : f32 to vector<16x1xf32>
    %21 = arith.divf %19, %20 : vector<16x1xf32>
    %22 = vector.broadcast %21 : vector<16x1xf32> to vector<16x32xf32>
    %23 = arith.subf %15, %22 : vector<16x32xf32>
    %24 = arith.mulf %23, %23 : vector<16x32xf32>
    %cst_17 = arith.constant dense<0.000000e+00> : vector<16xf32>
    %25 = vector.multi_reduction <add>, %24, %cst_17 [1] : vector<16x32xf32> to vector<16xf32>
    %26 = vector.shape_cast %25 : vector<16xf32> to vector<16x1xf32>
    %cst_18 = arith.constant 3.200000e+01 : f32
    %27 = vector.broadcast %cst_18 : f32 to vector<16x1xf32>
    %28 = arith.divf %26, %27 : vector<16x1xf32>
    %29 = vector.broadcast %21 : vector<16x1xf32> to vector<16x32xf32>
    %30 = arith.subf %15, %29 : vector<16x32xf32>
    %cst_19 = arith.constant 9.99999974E-6 : f32
    %31 = vector.broadcast %cst_19 : f32 to vector<16x1xf32>
    %32 = arith.addf %28, %31 : vector<16x1xf32>
    %33 = math.rsqrt %32 : vector<16x1xf32>
    %34 = vector.broadcast %33 : vector<16x1xf32> to vector<16x32xf32>
    %35 = arith.mulf %30, %34 : vector<16x32xf32>
    %36 = vector.broadcast %16 : vector<1x32xf32> to vector<16x32xf32>
    %37 = arith.mulf %35, %36 : vector<16x32xf32>
    %38 = vector.broadcast %17 : vector<1x32xf32> to vector<16x32xf32>
    %39 = arith.addf %37, %38 : vector<16x32xf32>
    %c0_20 = arith.constant 0 : index
    %c0_21 = arith.constant 0 : index
    %40 = vector.load %arg8[%c0_20, %c0_21] : memref<16x32xf32, #tpu.memory_space<vmem>>, vector<16x32xf32>
    tpu.vector_store %arg8[%c0_20, %c0_21], %39 {strides = array<i32>} : memref<16x32xf32, #tpu.memory_space<vmem>>, vector<16x32xf32>,
    return
  }
  func.func @transform_0(%arg0: i32) -> (i32, i32) {
    %c0_i32 = arith.constant 0 : i32
    %c0_i32_0 = arith.constant 0 : i32
    return %arg0, %c0_i32 : i32, i32
  }
  func.func @transform_1(%arg0: i32) -> (i32, i32) {
    %c0_i32 = arith.constant 0 : i32
    %c0_i32_0 = arith.constant 0 : i32
    %c0_i32_1 = arith.constant 0 : i32
    return %c0_i32, %c0_i32_0 : i32, i32
  }
  func.func @transform_2(%arg0: i32) -> (i32, i32) {
    %c0_i32 = arith.constant 0 : i32
    %c0_i32_0 = arith.constant 0 : i32
    %c0_i32_1 = arith.constant 0 : i32
    return %c0_i32, %c0_i32_0 : i32, i32
  }
  func.func @transform_3(%arg0: i32) -> (i32, i32) {
    %c0_i32 = arith.constant 0 : i32
    %c0_i32_0 = arith.constant 0 : i32
    %c0_i32_1 = arith.constant 0 : i32
    return %c0_i32, %c0_i32_0 : i32, i32
  }
  func.func @transform_4(%arg0: i32) -> (i32, i32) {
    %c0_i32 = arith.constant 0 : i32
    %c0_i32_0 = arith.constant 0 : i32
    %c0_i32_1 = arith.constant 0 : i32
    return %c0_i32, %c0_i32_0 : i32, i32
  }
  func.func @transform_5(%arg0: i32) -> (i32, i32) {
    %c0_i32 = arith.constant 0 : i32
    %c0_i32_0 = arith.constant 0 : i32
    %c0_i32_1 = arith.constant 0 : i32
    return %c0_i32, %c0_i32_0 : i32, i32
  }
  func.func @transform_6(%arg0: i32) -> (i32, i32) {
    %c0_i32 = arith.constant 0 : i32
    %c0_i32_0 = arith.constant 0 : i32
    %c0_i32_1 = arith.constant 0 : i32
    return %c0_i32, %c0_i32_0 : i32, i32
  }
  func.func @transform_7(%arg0: i32) -> (i32, i32) {
    %c0_i32 = arith.constant 0 : i32
    %c0_i32_0 = arith.constant 0 : i32
    return %arg0, %c0_i32 : i32, i32
  }
}

module attributes {stable_mosaic.version = 11 : i64} {
  func.func @_cross_attn_block_kernel(%arg0: i32, %arg1: memref<1x8x32xf32, #tpu.memory_space<vmem>>, %arg2: memref<1x16x32xf32, #tpu.memory_space<vmem>>, %arg3: memref<32x32xbf16, #tpu.memory_space<vmem>>, %arg4: memref<1x32xf32, #tpu.memory_space<vmem>>, %arg5: memref<32x64xbf16, #tpu.memory_space<vmem>>, %arg6: memref<1x64xf32, #tpu.memory_space<vmem>>, %arg7: memref<32x32xbf16, #tpu.memory_space<vmem>>, %arg8: memref<1x32xf32, #tpu.memory_space<vmem>>, %arg9: memref<1x32xf32, #tpu.memory_space<vmem>>, %arg10: memref<1x32xf32, #tpu.memory_space<vmem>>, %arg11: memref<1x8x32xf32, #tpu.memory_space<vmem>>, %arg12: memref<1x4x8x16xf32, #tpu.memory_space<vmem>>, %arg13: memref<8x32xf32, #tpu.memory_space<vmem>>) attributes {dimension_semantics = [#tpu.dimension_semantics<parallel>], iteration_bounds = array<i64: 2>, scalar_prefetch = 0 : i64, scratch_operands = 1 : i64, tpu.core_type = #tpu.core_type<tc>, window_params = [{transform_indices = @transform_0, window_bounds = array<i64: 1, 8, 32>}, {transform_indices = @transform_1, window_bounds = array<i64: 1, 16, 32>}, {pipeline_mode = #tpu.pipeline_mode<synchronous>, transform_indices = @transform_2, window_bounds = array<i64: 32, 32>}, {pipeline_mode = #tpu.pipeline_mode<synchronous>, transform_indices = @transform_3, window_bounds = array<i64: 1, 32>}, {pipeline_mode = #tpu.pipeline_mode<synchronous>, transform_indices = @transform_4, window_bounds = array<i64: 32, 64>}, {pipeline_mode = #tpu.pipeline_mode<synchronous>, transform_indices = @transform_5, window_bounds = array<i64: 1, 64>}, {pipeline_mode = #tpu.pipeline_mode<synchronous>, transform_indices = @transform_6, window_bounds = array<i64: 32, 32>}, {pipeline_mode = #tpu.pipeline_mode<synchronous>, transform_indices = @transform_7, window_bounds = array<i64: 1, 32>}, {pipeline_mode = #tpu.pipeline_mode<synchronous>, transform_indices = @transform_8, window_bounds = array<i64: 1, 32>}, {pipeline_mode = #tpu.pipeline_mode<synchronous>, transform_indices = @transform_9, window_bounds = array<i64: 1, 32>}, {transform_indices = @transform_10, window_bounds = array<i64: 1, 8, 32>}, {transform_indices = @transform_11, window_bounds = array<i64: 1, 4, 8, 16>}]} {
    %c0 = arith.constant 0 : index
    %c0_0 = arith.constant 0 : index
    %c0_1 = arith.constant 0 : index
    %0 = vector.load %arg1[%c0, %c0_0, %c0_1] : memref<1x8x32xf32, #tpu.memory_space<vmem>>, vector<1x8x32xf32>
    %1 = vector.shape_cast %0 : vector<1x8x32xf32> to vector<8x32xf32>
    %2 = arith.truncf %1 : vector<8x32xf32> to vector<8x32xbf16>
    %c0_2 = arith.constant 0 : index
    %c0_3 = arith.constant 0 : index
    %3 = vector.load %arg3[%c0_2, %c0_3] : memref<32x32xbf16, #tpu.memory_space<vmem>>, vector<32x32xbf16>
    %cst = arith.constant dense<0.000000e+00> : vector<8x32xf32>
    %4 = tpu.matmul %2, %3, %cst {dimension_numbers = #tpu.dot_dimension_numbers<[1], [0], [0], [1], [0, 0, 1, 1], [], []>} : vector<8x32xbf16>, vector<32x32xbf16>, vector<8x32xf32> -> vector<8x32xf32>
    %c0_4 = arith.constant 0 : index
    %c0_5 = arith.constant 0 : index
    %5 = vector.load %arg4[%c0_4, %c0_5] : memref<1x32xf32, #tpu.memory_space<vmem>>, vector<1x32xf32>
    %6 = vector.broadcast %5 : vector<1x32xf32> to vector<8x32xf32>
    %7 = arith.addf %4, %6 : vector<8x32xf32>
    %c0_6 = arith.constant 0 : index
    %c0_7 = arith.constant 0 : index
    %c0_8 = arith.constant 0 : index
    %8 = vector.load %arg2[%c0_6, %c0_7, %c0_8] : memref<1x16x32xf32, #tpu.memory_space<vmem>>, vector<1x16x32xf32>
    %9 = vector.shape_cast %8 : vector<1x16x32xf32> to vector<16x32xf32>
    %10 = arith.truncf %9 : vector<16x32xf32> to vector<16x32xbf16>
    %c0_9 = arith.constant 0 : index
    %c0_10 = arith.constant 0 : index
    %11 = vector.load %arg5[%c0_9, %c0_10] : memref<32x64xbf16, #tpu.memory_space<vmem>>, vector<32x64xbf16>
    %cst_11 = arith.constant dense<0.000000e+00> : vector<16x64xf32>
    %12 = tpu.matmul %10, %11, %cst_11 {dimension_numbers = #tpu.dot_dimension_numbers<[1], [0], [0], [1], [0, 0, 1, 1], [], []>} : vector<16x32xbf16>, vector<32x64xbf16>, vector<16x64xf32> -> vector<16x64xf32>
    %c0_12 = arith.constant 0 : index
    %c0_13 = arith.constant 0 : index
    %13 = vector.load %arg6[%c0_12, %c0_13] : memref<1x64xf32, #tpu.memory_space<vmem>>, vector<1x64xf32>
    %14 = vector.broadcast %13 : vector<1x64xf32> to vector<16x64xf32>
    %15 = arith.addf %12, %14 : vector<16x64xf32>
    %16 = arith.truncf %7 : vector<8x32xf32> to vector<8x32xbf16>
    %17 = arith.truncf %15 : vector<16x64xf32> to vector<16x64xbf16>
    %18 = vector.extract_strided_slice %16 {offsets = [0, 0], sizes = [8, 8], strides = [1, 1]} : vector<8x32xbf16> to vector<8x8xbf16>
    %19 = vector.extract_strided_slice %17 {offsets = [0, 0], sizes = [16, 8], strides = [1, 1]} : vector<16x64xbf16> to vector<16x8xbf16>
    %20 = vector.extract_strided_slice %17 {offsets = [0, 32], sizes = [16, 8], strides = [1, 1]} : vector<16x64xbf16> to vector<16x8xbf16>
    %cst_14 = arith.constant dense<0.000000e+00> : vector<8x16xf32>
    %21 = tpu.matmul %18, %19, %cst_14 {dimension_numbers = #tpu.dot_dimension_numbers<[1], [1], [0], [0], [0, 0, 1, 0], [], []>} : vector<8x8xbf16>, vector<16x8xbf16>, vector<8x16xf32> -> vector<8x16xf32>
    %cst_15 = arith.constant 0.353553385 : f32
    %22 = vector.broadcast %cst_15 : f32 to vector<8x16xf32>
    %23 = arith.mulf %21, %22 : vector<8x16xf32>
    %cst_16 = arith.constant dense<0xFF800000> : vector<8xf32>
    %24 = vector.multi_reduction <maximumf>, %23, %cst_16 [1] : vector<8x16xf32> to vector<8xf32>
    %25 = vector.shape_cast %24 : vector<8xf32> to vector<8x1xf32>
    %26 = vector.broadcast %25 : vector<8x1xf32> to vector<8x16xf32>
    %27 = arith.subf %23, %26 : vector<8x16xf32>
    %28 = math.exp %27 : vector<8x16xf32>
    %cst_17 = arith.constant dense<0.000000e+00> : vector<8xf32>
    %29 = vector.multi_reduction <add>, %28, %cst_17 [1] : vector<8x16xf32> to vector<8xf32>
    %30 = vector.shape_cast %29 : vector<8xf32> to vector<8x1xf32>
    %31 = vector.broadcast %30 : vector<8x1xf32> to vector<8x16xf32>
    %32 = arith.divf %28, %31 : vector<8x16xf32>
    %c0_18 = arith.constant 0 : index
    %c0_19 = arith.constant 0 : index
    %c0_20 = arith.constant 0 : index
    %c0_21 = arith.constant 0 : index
    %33 = vector.load %arg12[%c0_18, %c0_19, %c0_20, %c0_21] : memref<1x4x8x16xf32, #tpu.memory_space<vmem>>, vector<1x1x8x16xf32>
    %34 = vector.shape_cast %33 : vector<1x1x8x16xf32> to vector<8x16xf32>
    %35 = vector.shape_cast %32 : vector<8x16xf32> to vector<1x1x8x16xf32>
    tpu.vector_store %arg12[%c0_18, %c0_19, %c0_20, %c0_21], %35 {strides = array<i32>} : memref<1x4x8x16xf32, #tpu.memory_space<vmem>>, vector<1x1x8x16xf32>,
    %36 = arith.truncf %32 : vector<8x16xf32> to vector<8x16xbf16>
    %cst_22 = arith.constant dense<0.000000e+00> : vector<8x8xf32>
    %37 = tpu.matmul %36, %20, %cst_22 {dimension_numbers = #tpu.dot_dimension_numbers<[1], [0], [0], [1], [0, 0, 1, 1], [], []>} : vector<8x16xbf16>, vector<16x8xbf16>, vector<8x8xf32> -> vector<8x8xf32>
    %c0_23 = arith.constant 0 : index
    %c0_24 = arith.constant 0 : index
    %38 = vector.load %arg13[%c0_23, %c0_24] : memref<8x32xf32, #tpu.memory_space<vmem>>, vector<8x8xf32>
    tpu.vector_store %arg13[%c0_23, %c0_24], %37 {strides = array<i32>} : memref<8x32xf32, #tpu.memory_space<vmem>>, vector<8x8xf32>,
    %39 = vector.extract_strided_slice %16 {offsets = [0, 8], sizes = [8, 8], strides = [1, 1]} : vector<8x32xbf16> to vector<8x8xbf16>
    %40 = vector.extract_strided_slice %17 {offsets = [0, 8], sizes = [16, 8], strides = [1, 1]} : vector<16x64xbf16> to vector<16x8xbf16>
    %41 = vector.extract_strided_slice %17 {offsets = [0, 40], sizes = [16, 8], strides = [1, 1]} : vector<16x64xbf16> to vector<16x8xbf16>
    %cst_25 = arith.constant dense<0.000000e+00> : vector<8x16xf32>
    %42 = tpu.matmul %39, %40, %cst_25 {dimension_numbers = #tpu.dot_dimension_numbers<[1], [1], [0], [0], [0, 0, 1, 0], [], []>} : vector<8x8xbf16>, vector<16x8xbf16>, vector<8x16xf32> -> vector<8x16xf32>
    %cst_26 = arith.constant 0.353553385 : f32
    %43 = vector.broadcast %cst_26 : f32 to vector<8x16xf32>
    %44 = arith.mulf %42, %43 : vector<8x16xf32>
    %cst_27 = arith.constant dense<0xFF800000> : vector<8xf32>
    %45 = vector.multi_reduction <maximumf>, %44, %cst_27 [1] : vector<8x16xf32> to vector<8xf32>
    %46 = vector.shape_cast %45 : vector<8xf32> to vector<8x1xf32>
    %47 = vector.broadcast %46 : vector<8x1xf32> to vector<8x16xf32>
    %48 = arith.subf %44, %47 : vector<8x16xf32>
    %49 = math.exp %48 : vector<8x16xf32>
    %cst_28 = arith.constant dense<0.000000e+00> : vector<8xf32>
    %50 = vector.multi_reduction <add>, %49, %cst_28 [1] : vector<8x16xf32> to vector<8xf32>
    %51 = vector.shape_cast %50 : vector<8xf32> to vector<8x1xf32>
    %52 = vector.broadcast %51 : vector<8x1xf32> to vector<8x16xf32>
    %53 = arith.divf %49, %52 : vector<8x16xf32>
    %c0_29 = arith.constant 0 : index
    %c1 = arith.constant 1 : index
    %c0_30 = arith.constant 0 : index
    %c0_31 = arith.constant 0 : index
    %54 = vector.load %arg12[%c0_29, %c1, %c0_30, %c0_31] : memref<1x4x8x16xf32, #tpu.memory_space<vmem>>, vector<1x1x8x16xf32>
    %55 = vector.shape_cast %54 : vector<1x1x8x16xf32> to vector<8x16xf32>
    %56 = vector.shape_cast %53 : vector<8x16xf32> to vector<1x1x8x16xf32>
    tpu.vector_store %arg12[%c0_29, %c1, %c0_30, %c0_31], %56 {strides = array<i32>} : memref<1x4x8x16xf32, #tpu.memory_space<vmem>>, vector<1x1x8x16xf32>,
    %57 = arith.truncf %53 : vector<8x16xf32> to vector<8x16xbf16>
    %cst_32 = arith.constant dense<0.000000e+00> : vector<8x8xf32>
    %58 = tpu.matmul %57, %41, %cst_32 {dimension_numbers = #tpu.dot_dimension_numbers<[1], [0], [0], [1], [0, 0, 1, 1], [], []>} : vector<8x16xbf16>, vector<16x8xbf16>, vector<8x8xf32> -> vector<8x8xf32>
    %c0_33 = arith.constant 0 : index
    %c8 = arith.constant 8 : index
    %59 = vector.load %arg13[%c0_33, %c8] : memref<8x32xf32, #tpu.memory_space<vmem>>, vector<8x8xf32>
    tpu.vector_store %arg13[%c0_33, %c8], %58 {strides = array<i32>} : memref<8x32xf32, #tpu.memory_space<vmem>>, vector<8x8xf32>,
    %60 = vector.extract_strided_slice %16 {offsets = [0, 16], sizes = [8, 8], strides = [1, 1]} : vector<8x32xbf16> to vector<8x8xbf16>
    %61 = vector.extract_strided_slice %17 {offsets = [0, 16], sizes = [16, 8], strides = [1, 1]} : vector<16x64xbf16> to vector<16x8xbf16>
    %62 = vector.extract_strided_slice %17 {offsets = [0, 48], sizes = [16, 8], strides = [1, 1]} : vector<16x64xbf16> to vector<16x8xbf16>
    %cst_34 = arith.constant dense<0.000000e+00> : vector<8x16xf32>
    %63 = tpu.matmul %60, %61, %cst_34 {dimension_numbers = #tpu.dot_dimension_numbers<[1], [1], [0], [0], [0, 0, 1, 0], [], []>} : vector<8x8xbf16>, vector<16x8xbf16>, vector<8x16xf32> -> vector<8x16xf32>
    %cst_35 = arith.constant 0.353553385 : f32
    %64 = vector.broadcast %cst_35 : f32 to vector<8x16xf32>
    %65 = arith.mulf %63, %64 : vector<8x16xf32>
    %cst_36 = arith.constant dense<0xFF800000> : vector<8xf32>
    %66 = vector.multi_reduction <maximumf>, %65, %cst_36 [1] : vector<8x16xf32> to vector<8xf32>
    %67 = vector.shape_cast %66 : vector<8xf32> to vector<8x1xf32>
    %68 = vector.broadcast %67 : vector<8x1xf32> to vector<8x16xf32>
    %69 = arith.subf %65, %68 : vector<8x16xf32>
    %70 = math.exp %69 : vector<8x16xf32>
    %cst_37 = arith.constant dense<0.000000e+00> : vector<8xf32>
    %71 = vector.multi_reduction <add>, %70, %cst_37 [1] : vector<8x16xf32> to vector<8xf32>
    %72 = vector.shape_cast %71 : vector<8xf32> to vector<8x1xf32>
    %73 = vector.broadcast %72 : vector<8x1xf32> to vector<8x16xf32>
    %74 = arith.divf %70, %73 : vector<8x16xf32>
    %c0_38 = arith.constant 0 : index
    %c2 = arith.constant 2 : index
    %c0_39 = arith.constant 0 : index
    %c0_40 = arith.constant 0 : index
    %75 = vector.load %arg12[%c0_38, %c2, %c0_39, %c0_40] : memref<1x4x8x16xf32, #tpu.memory_space<vmem>>, vector<1x1x8x16xf32>
    %76 = vector.shape_cast %75 : vector<1x1x8x16xf32> to vector<8x16xf32>
    %77 = vector.shape_cast %74 : vector<8x16xf32> to vector<1x1x8x16xf32>
    tpu.vector_store %arg12[%c0_38, %c2, %c0_39, %c0_40], %77 {strides = array<i32>} : memref<1x4x8x16xf32, #tpu.memory_space<vmem>>, vector<1x1x8x16xf32>,
    %78 = arith.truncf %74 : vector<8x16xf32> to vector<8x16xbf16>
    %cst_41 = arith.constant dense<0.000000e+00> : vector<8x8xf32>
    %79 = tpu.matmul %78, %62, %cst_41 {dimension_numbers = #tpu.dot_dimension_numbers<[1], [0], [0], [1], [0, 0, 1, 1], [], []>} : vector<8x16xbf16>, vector<16x8xbf16>, vector<8x8xf32> -> vector<8x8xf32>
    %c0_42 = arith.constant 0 : index
    %c16 = arith.constant 16 : index
    %80 = vector.load %arg13[%c0_42, %c16] : memref<8x32xf32, #tpu.memory_space<vmem>>, vector<8x8xf32>
    tpu.vector_store %arg13[%c0_42, %c16], %79 {strides = array<i32>} : memref<8x32xf32, #tpu.memory_space<vmem>>, vector<8x8xf32>,
    %81 = vector.extract_strided_slice %16 {offsets = [0, 24], sizes = [8, 8], strides = [1, 1]} : vector<8x32xbf16> to vector<8x8xbf16>
    %82 = vector.extract_strided_slice %17 {offsets = [0, 24], sizes = [16, 8], strides = [1, 1]} : vector<16x64xbf16> to vector<16x8xbf16>
    %83 = vector.extract_strided_slice %17 {offsets = [0, 56], sizes = [16, 8], strides = [1, 1]} : vector<16x64xbf16> to vector<16x8xbf16>
    %cst_43 = arith.constant dense<0.000000e+00> : vector<8x16xf32>
    %84 = tpu.matmul %81, %82, %cst_43 {dimension_numbers = #tpu.dot_dimension_numbers<[1], [1], [0], [0], [0, 0, 1, 0], [], []>} : vector<8x8xbf16>, vector<16x8xbf16>, vector<8x16xf32> -> vector<8x16xf32>
    %cst_44 = arith.constant 0.353553385 : f32
    %85 = vector.broadcast %cst_44 : f32 to vector<8x16xf32>
    %86 = arith.mulf %84, %85 : vector<8x16xf32>
    %cst_45 = arith.constant dense<0xFF800000> : vector<8xf32>
    %87 = vector.multi_reduction <maximumf>, %86, %cst_45 [1] : vector<8x16xf32> to vector<8xf32>
    %88 = vector.shape_cast %87 : vector<8xf32> to vector<8x1xf32>
    %89 = vector.broadcast %88 : vector<8x1xf32> to vector<8x16xf32>
    %90 = arith.subf %86, %89 : vector<8x16xf32>
    %91 = math.exp %90 : vector<8x16xf32>
    %cst_46 = arith.constant dense<0.000000e+00> : vector<8xf32>
    %92 = vector.multi_reduction <add>, %91, %cst_46 [1] : vector<8x16xf32> to vector<8xf32>
    %93 = vector.shape_cast %92 : vector<8xf32> to vector<8x1xf32>
    %94 = vector.broadcast %93 : vector<8x1xf32> to vector<8x16xf32>
    %95 = arith.divf %91, %94 : vector<8x16xf32>
    %c0_47 = arith.constant 0 : index
    %c3 = arith.constant 3 : index
    %c0_48 = arith.constant 0 : index
    %c0_49 = arith.constant 0 : index
    %96 = vector.load %arg12[%c0_47, %c3, %c0_48, %c0_49] : memref<1x4x8x16xf32, #tpu.memory_space<vmem>>, vector<1x1x8x16xf32>
    %97 = vector.shape_cast %96 : vector<1x1x8x16xf32> to vector<8x16xf32>
    %98 = vector.shape_cast %95 : vector<8x16xf32> to vector<1x1x8x16xf32>
    tpu.vector_store %arg12[%c0_47, %c3, %c0_48, %c0_49], %98 {strides = array<i32>} : memref<1x4x8x16xf32, #tpu.memory_space<vmem>>, vector<1x1x8x16xf32>,
    %99 = arith.truncf %95 : vector<8x16xf32> to vector<8x16xbf16>
    %cst_50 = arith.constant dense<0.000000e+00> : vector<8x8xf32>
    %100 = tpu.matmul %99, %83, %cst_50 {dimension_numbers = #tpu.dot_dimension_numbers<[1], [0], [0], [1], [0, 0, 1, 1], [], []>} : vector<8x16xbf16>, vector<16x8xbf16>, vector<8x8xf32> -> vector<8x8xf32>
    %c0_51 = arith.constant 0 : index
    %c24 = arith.constant 24 : index
    %101 = vector.load %arg13[%c0_51, %c24] : memref<8x32xf32, #tpu.memory_space<vmem>>, vector<8x8xf32>
    tpu.vector_store %arg13[%c0_51, %c24], %100 {strides = array<i32>} : memref<8x32xf32, #tpu.memory_space<vmem>>, vector<8x8xf32>,
    %c0_52 = arith.constant 0 : index
    %c0_53 = arith.constant 0 : index
    %102 = vector.load %arg13[%c0_52, %c0_53] : memref<8x32xf32, #tpu.memory_space<vmem>>, vector<8x32xf32>
    %103 = arith.truncf %102 : vector<8x32xf32> to vector<8x32xbf16>
    %c0_54 = arith.constant 0 : index
    %c0_55 = arith.constant 0 : index
    %104 = vector.load %arg7[%c0_54, %c0_55] : memref<32x32xbf16, #tpu.memory_space<vmem>>, vector<32x32xbf16>
    %cst_56 = arith.constant dense<0.000000e+00> : vector<8x32xf32>
    %105 = tpu.matmul %103, %104, %cst_56 {dimension_numbers = #tpu.dot_dimension_numbers<[1], [0], [0], [1], [0, 0, 1, 1], [], []>} : vector<8x32xbf16>, vector<32x32xbf16>, vector<8x32xf32> -> vector<8x32xf32>
    %c0_57 = arith.constant 0 : index
    %c0_58 = arith.constant 0 : index
    %106 = vector.load %arg8[%c0_57, %c0_58] : memref<1x32xf32, #tpu.memory_space<vmem>>, vector<1x32xf32>
    %107 = vector.broadcast %106 : vector<1x32xf32> to vector<8x32xf32>
    %108 = arith.addf %105, %107 : vector<8x32xf32>
    %109 = arith.addf %1, %108 : vector<8x32xf32>
    %c0_59 = arith.constant 0 : index
    %c0_60 = arith.constant 0 : index
    %110 = vector.load %arg9[%c0_59, %c0_60] : memref<1x32xf32, #tpu.memory_space<vmem>>, vector<1x32xf32>
    %c0_61 = arith.constant 0 : index
    %c0_62 = arith.constant 0 : index
    %111 = vector.load %arg10[%c0_61, %c0_62] : memref<1x32xf32, #tpu.memory_space<vmem>>, vector<1x32xf32>
    %cst_63 = arith.constant dense<0.000000e+00> : vector<8xf32>
    %112 = vector.multi_reduction <add>, %109, %cst_63 [1] : vector<8x32xf32> to vector<8xf32>
    %113 = vector.shape_cast %112 : vector<8xf32> to vector<8x1xf32>
    %cst_64 = arith.constant 3.200000e+01 : f32
    %114 = vector.broadcast %cst_64 : f32 to vector<8x1xf32>
    %115 = arith.divf %113, %114 : vector<8x1xf32>
    %116 = vector.broadcast %115 : vector<8x1xf32> to vector<8x32xf32>
    %117 = arith.subf %109, %116 : vector<8x32xf32>
    %118 = arith.mulf %117, %117 : vector<8x32xf32>
    %cst_65 = arith.constant dense<0.000000e+00> : vector<8xf32>
    %119 = vector.multi_reduction <add>, %118, %cst_65 [1] : vector<8x32xf32> to vector<8xf32>
    %120 = vector.shape_cast %119 : vector<8xf32> to vector<8x1xf32>
    %cst_66 = arith.constant 3.200000e+01 : f32
    %121 = vector.broadcast %cst_66 : f32 to vector<8x1xf32>
    %122 = arith.divf %120, %121 : vector<8x1xf32>
    %123 = vector.broadcast %115 : vector<8x1xf32> to vector<8x32xf32>
    %124 = arith.subf %109, %123 : vector<8x32xf32>
    %cst_67 = arith.constant 9.99999974E-6 : f32
    %125 = vector.broadcast %cst_67 : f32 to vector<8x1xf32>
    %126 = arith.addf %122, %125 : vector<8x1xf32>
    %127 = math.rsqrt %126 : vector<8x1xf32>
    %128 = vector.broadcast %127 : vector<8x1xf32> to vector<8x32xf32>
    %129 = arith.mulf %124, %128 : vector<8x32xf32>
    %130 = vector.broadcast %110 : vector<1x32xf32> to vector<8x32xf32>
    %131 = arith.mulf %129, %130 : vector<8x32xf32>
    %132 = vector.broadcast %111 : vector<1x32xf32> to vector<8x32xf32>
    %133 = arith.addf %131, %132 : vector<8x32xf32>
    %c0_68 = arith.constant 0 : index
    %c0_69 = arith.constant 0 : index
    %c0_70 = arith.constant 0 : index
    %134 = vector.load %arg11[%c0_68, %c0_69, %c0_70] : memref<1x8x32xf32, #tpu.memory_space<vmem>>, vector<1x8x32xf32>
    %135 = vector.shape_cast %134 : vector<1x8x32xf32> to vector<8x32xf32>
    %136 = vector.shape_cast %133 : vector<8x32xf32> to vector<1x8x32xf32>
    tpu.vector_store %arg11[%c0_68, %c0_69, %c0_70], %136 {strides = array<i32>} : memref<1x8x32xf32, #tpu.memory_space<vmem>>, vector<1x8x32xf32>,
    return
  }
  func.func @transform_0(%arg0: i32) -> (i32, i32, i32) {
    %c0_i32 = arith.constant 0 : i32
    %c0_i32_0 = arith.constant 0 : i32
    %c0_i32_1 = arith.constant 0 : i32
    return %arg0, %c0_i32, %c0_i32_0 : i32, i32, i32
  }
  func.func @transform_1(%arg0: i32) -> (i32, i32, i32) {
    %c0_i32 = arith.constant 0 : i32
    %c0_i32_0 = arith.constant 0 : i32
    %c0_i32_1 = arith.constant 0 : i32
    return %arg0, %c0_i32, %c0_i32_0 : i32, i32, i32
  }
  func.func @transform_2(%arg0: i32) -> (i32, i32) {
    %c0_i32 = arith.constant 0 : i32
    %c0_i32_0 = arith.constant 0 : i32
    %c0_i32_1 = arith.constant 0 : i32
    return %c0_i32, %c0_i32_0 : i32, i32
  }
  func.func @transform_3(%arg0: i32) -> (i32, i32) {
    %c0_i32 = arith.constant 0 : i32
    %c0_i32_0 = arith.constant 0 : i32
    %c0_i32_1 = arith.constant 0 : i32
    return %c0_i32, %c0_i32_0 : i32, i32
  }
  func.func @transform_4(%arg0: i32) -> (i32, i32) {
    %c0_i32 = arith.constant 0 : i32
    %c0_i32_0 = arith.constant 0 : i32
    %c0_i32_1 = arith.constant 0 : i32
    return %c0_i32, %c0_i32_0 : i32, i32
  }
  func.func @transform_5(%arg0: i32) -> (i32, i32) {
    %c0_i32 = arith.constant 0 : i32
    %c0_i32_0 = arith.constant 0 : i32
    %c0_i32_1 = arith.constant 0 : i32
    return %c0_i32, %c0_i32_0 : i32, i32
  }
  func.func @transform_6(%arg0: i32) -> (i32, i32) {
    %c0_i32 = arith.constant 0 : i32
    %c0_i32_0 = arith.constant 0 : i32
    %c0_i32_1 = arith.constant 0 : i32
    return %c0_i32, %c0_i32_0 : i32, i32
  }
  func.func @transform_7(%arg0: i32) -> (i32, i32) {
    %c0_i32 = arith.constant 0 : i32
    %c0_i32_0 = arith.constant 0 : i32
    %c0_i32_1 = arith.constant 0 : i32
    return %c0_i32, %c0_i32_0 : i32, i32
  }
  func.func @transform_8(%arg0: i32) -> (i32, i32) {
    %c0_i32 = arith.constant 0 : i32
    %c0_i32_0 = arith.constant 0 : i32
    %c0_i32_1 = arith.constant 0 : i32
    return %c0_i32, %c0_i32_0 : i32, i32
  }
  func.func @transform_9(%arg0: i32) -> (i32, i32) {
    %c0_i32 = arith.constant 0 : i32
    %c0_i32_0 = arith.constant 0 : i32
    %c0_i32_1 = arith.constant 0 : i32
    return %c0_i32, %c0_i32_0 : i32, i32
  }
  func.func @transform_10(%arg0: i32) -> (i32, i32, i32) {
    %c0_i32 = arith.constant 0 : i32
    %c0_i32_0 = arith.constant 0 : i32
    %c0_i32_1 = arith.constant 0 : i32
    return %arg0, %c0_i32, %c0_i32_0 : i32, i32, i32
  }
  func.func @transform_11(%arg0: i32) -> (i32, i32, i32, i32) {
    %c0_i32 = arith.constant 0 : i32
    %c0_i32_0 = arith.constant 0 : i32
    %c0_i32_1 = arith.constant 0 : i32
    %c0_i32_2 = arith.constant 0 : i32
    return %arg0, %c0_i32, %c0_i32_0, %c0_i32_1 : i32, i32, i32, i32
  }
}

module attributes {stable_mosaic.version = 11 : i64} {
  func.func @_self_attn_block_kernel(%arg0: i32, %arg1: memref<1x8x32xf32, #tpu.memory_space<vmem>>, %arg2: memref<32x96xbf16, #tpu.memory_space<vmem>>, %arg3: memref<1x96xf32, #tpu.memory_space<vmem>>, %arg4: memref<32x32xbf16, #tpu.memory_space<vmem>>, %arg5: memref<1x32xf32, #tpu.memory_space<vmem>>, %arg6: memref<1x32xf32, #tpu.memory_space<vmem>>, %arg7: memref<1x32xf32, #tpu.memory_space<vmem>>, %arg8: memref<1x8x32xf32, #tpu.memory_space<vmem>>, %arg9: memref<8x32xf32, #tpu.memory_space<vmem>>) attributes {dimension_semantics = [#tpu.dimension_semantics<parallel>], iteration_bounds = array<i64: 2>, scalar_prefetch = 0 : i64, scratch_operands = 1 : i64, tpu.core_type = #tpu.core_type<tc>, window_params = [{transform_indices = @transform_0, window_bounds = array<i64: 1, 8, 32>}, {pipeline_mode = #tpu.pipeline_mode<synchronous>, transform_indices = @transform_1, window_bounds = array<i64: 32, 96>}, {pipeline_mode = #tpu.pipeline_mode<synchronous>, transform_indices = @transform_2, window_bounds = array<i64: 1, 96>}, {pipeline_mode = #tpu.pipeline_mode<synchronous>, transform_indices = @transform_3, window_bounds = array<i64: 32, 32>}, {pipeline_mode = #tpu.pipeline_mode<synchronous>, transform_indices = @transform_4, window_bounds = array<i64: 1, 32>}, {pipeline_mode = #tpu.pipeline_mode<synchronous>, transform_indices = @transform_5, window_bounds = array<i64: 1, 32>}, {pipeline_mode = #tpu.pipeline_mode<synchronous>, transform_indices = @transform_6, window_bounds = array<i64: 1, 32>}, {transform_indices = @transform_7, window_bounds = array<i64: 1, 8, 32>}]} {
    %c0 = arith.constant 0 : index
    %c0_0 = arith.constant 0 : index
    %c0_1 = arith.constant 0 : index
    %0 = vector.load %arg1[%c0, %c0_0, %c0_1] : memref<1x8x32xf32, #tpu.memory_space<vmem>>, vector<1x8x32xf32>
    %1 = vector.shape_cast %0 : vector<1x8x32xf32> to vector<8x32xf32>
    %2 = arith.truncf %1 : vector<8x32xf32> to vector<8x32xbf16>
    %c0_2 = arith.constant 0 : index
    %c0_3 = arith.constant 0 : index
    %3 = vector.load %arg2[%c0_2, %c0_3] : memref<32x96xbf16, #tpu.memory_space<vmem>>, vector<32x96xbf16>
    %cst = arith.constant dense<0.000000e+00> : vector<8x96xf32>
    %4 = tpu.matmul %2, %3, %cst {dimension_numbers = #tpu.dot_dimension_numbers<[1], [0], [0], [1], [0, 0, 1, 1], [], []>} : vector<8x32xbf16>, vector<32x96xbf16>, vector<8x96xf32> -> vector<8x96xf32>
    %c0_4 = arith.constant 0 : index
    %c0_5 = arith.constant 0 : index
    %5 = vector.load %arg3[%c0_4, %c0_5] : memref<1x96xf32, #tpu.memory_space<vmem>>, vector<1x96xf32>
    %6 = vector.broadcast %5 : vector<1x96xf32> to vector<8x96xf32>
    %7 = arith.addf %4, %6 : vector<8x96xf32>
    %8 = arith.truncf %7 : vector<8x96xf32> to vector<8x96xbf16>
    %9 = tpu.iota {dimensions = array<i32: 0>} : vector<8x8xi32>
    %10 = tpu.iota {dimensions = array<i32: 1>} : vector<8x8xi32>
    %11 = arith.cmpi sle, %10, %9 : vector<8x8xi32>
    %12 = vector.extract_strided_slice %8 {offsets = [0, 0], sizes = [8, 8], strides = [1, 1]} : vector<8x96xbf16> to vector<8x8xbf16>
    %13 = vector.extract_strided_slice %8 {offsets = [0, 32], sizes = [8, 8], strides = [1, 1]} : vector<8x96xbf16> to vector<8x8xbf16>
    %14 = vector.extract_strided_slice %8 {offsets = [0, 64], sizes = [8, 8], strides = [1, 1]} : vector<8x96xbf16> to vector<8x8xbf16>
    %cst_6 = arith.constant dense<0.000000e+00> : vector<8x8xf32>
    %15 = tpu.matmul %12, %13, %cst_6 {dimension_numbers = #tpu.dot_dimension_numbers<[1], [1], [0], [0], [0, 0, 1, 0], [], []>} : vector<8x8xbf16>, vector<8x8xbf16>, vector<8x8xf32> -> vector<8x8xf32>
    %cst_7 = arith.constant 0.353553385 : f32
    %16 = vector.broadcast %cst_7 : f32 to vector<8x8xf32>
    %17 = arith.mulf %15, %16 : vector<8x8xf32>
    %cst_8 = arith.constant -1.000000e+30 : f32
    %18 = vector.broadcast %cst_8 : f32 to vector<8x8xf32>
    %19 = arith.select %11, %17, %18 : vector<8x8xi1>, vector<8x8xf32>
    %cst_9 = arith.constant dense<0xFF800000> : vector<8xf32>
    %20 = vector.multi_reduction <maximumf>, %19, %cst_9 [1] : vector<8x8xf32> to vector<8xf32>
    %21 = vector.shape_cast %20 : vector<8xf32> to vector<8x1xf32>
    %22 = vector.broadcast %21 : vector<8x1xf32> to vector<8x8xf32>
    %23 = arith.subf %19, %22 : vector<8x8xf32>
    %24 = math.exp %23 : vector<8x8xf32>
    %cst_10 = arith.constant dense<0.000000e+00> : vector<8xf32>
    %25 = vector.multi_reduction <add>, %24, %cst_10 [1] : vector<8x8xf32> to vector<8xf32>
    %26 = vector.shape_cast %25 : vector<8xf32> to vector<8x1xf32>
    %27 = tpu.reciprocal %26 {approx = true} : vector<8x1xf32> -> vector<8x1xf32>
    %28 = vector.broadcast %27 : vector<8x1xf32> to vector<8x8xf32>
    %29 = arith.mulf %24, %28 : vector<8x8xf32>
    %30 = arith.truncf %29 : vector<8x8xf32> to vector<8x8xbf16>
    %cst_11 = arith.constant dense<0.000000e+00> : vector<8x8xf32>
    %31 = tpu.matmul %30, %14, %cst_11 {dimension_numbers = #tpu.dot_dimension_numbers<[1], [0], [0], [1], [0, 0, 1, 1], [], []>} : vector<8x8xbf16>, vector<8x8xbf16>, vector<8x8xf32> -> vector<8x8xf32>
    %c0_12 = arith.constant 0 : index
    %c0_13 = arith.constant 0 : index
    %32 = vector.load %arg9[%c0_12, %c0_13] : memref<8x32xf32, #tpu.memory_space<vmem>>, vector<8x8xf32>
    tpu.vector_store %arg9[%c0_12, %c0_13], %31 {strides = array<i32>} : memref<8x32xf32, #tpu.memory_space<vmem>>, vector<8x8xf32>,
    %33 = vector.extract_strided_slice %8 {offsets = [0, 8], sizes = [8, 8], strides = [1, 1]} : vector<8x96xbf16> to vector<8x8xbf16>
    %34 = vector.extract_strided_slice %8 {offsets = [0, 40], sizes = [8, 8], strides = [1, 1]} : vector<8x96xbf16> to vector<8x8xbf16>
    %35 = vector.extract_strided_slice %8 {offsets = [0, 72], sizes = [8, 8], strides = [1, 1]} : vector<8x96xbf16> to vector<8x8xbf16>
    %cst_14 = arith.constant dense<0.000000e+00> : vector<8x8xf32>
    %36 = tpu.matmul %33, %34, %cst_14 {dimension_numbers = #tpu.dot_dimension_numbers<[1], [1], [0], [0], [0, 0, 1, 0], [], []>} : vector<8x8xbf16>, vector<8x8xbf16>, vector<8x8xf32> -> vector<8x8xf32>
    %cst_15 = arith.constant 0.353553385 : f32
    %37 = vector.broadcast %cst_15 : f32 to vector<8x8xf32>
    %38 = arith.mulf %36, %37 : vector<8x8xf32>
    %cst_16 = arith.constant -1.000000e+30 : f32
    %39 = vector.broadcast %cst_16 : f32 to vector<8x8xf32>
    %40 = arith.select %11, %38, %39 : vector<8x8xi1>, vector<8x8xf32>
    %cst_17 = arith.constant dense<0xFF800000> : vector<8xf32>
    %41 = vector.multi_reduction <maximumf>, %40, %cst_17 [1] : vector<8x8xf32> to vector<8xf32>
    %42 = vector.shape_cast %41 : vector<8xf32> to vector<8x1xf32>
    %43 = vector.broadcast %42 : vector<8x1xf32> to vector<8x8xf32>
    %44 = arith.subf %40, %43 : vector<8x8xf32>
    %45 = math.exp %44 : vector<8x8xf32>
    %cst_18 = arith.constant dense<0.000000e+00> : vector<8xf32>
    %46 = vector.multi_reduction <add>, %45, %cst_18 [1] : vector<8x8xf32> to vector<8xf32>
    %47 = vector.shape_cast %46 : vector<8xf32> to vector<8x1xf32>
    %48 = tpu.reciprocal %47 {approx = true} : vector<8x1xf32> -> vector<8x1xf32>
    %49 = vector.broadcast %48 : vector<8x1xf32> to vector<8x8xf32>
    %50 = arith.mulf %45, %49 : vector<8x8xf32>
    %51 = arith.truncf %50 : vector<8x8xf32> to vector<8x8xbf16>
    %cst_19 = arith.constant dense<0.000000e+00> : vector<8x8xf32>
    %52 = tpu.matmul %51, %35, %cst_19 {dimension_numbers = #tpu.dot_dimension_numbers<[1], [0], [0], [1], [0, 0, 1, 1], [], []>} : vector<8x8xbf16>, vector<8x8xbf16>, vector<8x8xf32> -> vector<8x8xf32>
    %c0_20 = arith.constant 0 : index
    %c8 = arith.constant 8 : index
    %53 = vector.load %arg9[%c0_20, %c8] : memref<8x32xf32, #tpu.memory_space<vmem>>, vector<8x8xf32>
    tpu.vector_store %arg9[%c0_20, %c8], %52 {strides = array<i32>} : memref<8x32xf32, #tpu.memory_space<vmem>>, vector<8x8xf32>,
    %54 = vector.extract_strided_slice %8 {offsets = [0, 16], sizes = [8, 8], strides = [1, 1]} : vector<8x96xbf16> to vector<8x8xbf16>
    %55 = vector.extract_strided_slice %8 {offsets = [0, 48], sizes = [8, 8], strides = [1, 1]} : vector<8x96xbf16> to vector<8x8xbf16>
    %56 = vector.extract_strided_slice %8 {offsets = [0, 80], sizes = [8, 8], strides = [1, 1]} : vector<8x96xbf16> to vector<8x8xbf16>
    %cst_21 = arith.constant dense<0.000000e+00> : vector<8x8xf32>
    %57 = tpu.matmul %54, %55, %cst_21 {dimension_numbers = #tpu.dot_dimension_numbers<[1], [1], [0], [0], [0, 0, 1, 0], [], []>} : vector<8x8xbf16>, vector<8x8xbf16>, vector<8x8xf32> -> vector<8x8xf32>
    %cst_22 = arith.constant 0.353553385 : f32
    %58 = vector.broadcast %cst_22 : f32 to vector<8x8xf32>
    %59 = arith.mulf %57, %58 : vector<8x8xf32>
    %cst_23 = arith.constant -1.000000e+30 : f32
    %60 = vector.broadcast %cst_23 : f32 to vector<8x8xf32>
    %61 = arith.select %11, %59, %60 : vector<8x8xi1>, vector<8x8xf32>
    %cst_24 = arith.constant dense<0xFF800000> : vector<8xf32>
    %62 = vector.multi_reduction <maximumf>, %61, %cst_24 [1] : vector<8x8xf32> to vector<8xf32>
    %63 = vector.shape_cast %62 : vector<8xf32> to vector<8x1xf32>
    %64 = vector.broadcast %63 : vector<8x1xf32> to vector<8x8xf32>
    %65 = arith.subf %61, %64 : vector<8x8xf32>
    %66 = math.exp %65 : vector<8x8xf32>
    %cst_25 = arith.constant dense<0.000000e+00> : vector<8xf32>
    %67 = vector.multi_reduction <add>, %66, %cst_25 [1] : vector<8x8xf32> to vector<8xf32>
    %68 = vector.shape_cast %67 : vector<8xf32> to vector<8x1xf32>
    %69 = tpu.reciprocal %68 {approx = true} : vector<8x1xf32> -> vector<8x1xf32>
    %70 = vector.broadcast %69 : vector<8x1xf32> to vector<8x8xf32>
    %71 = arith.mulf %66, %70 : vector<8x8xf32>
    %72 = arith.truncf %71 : vector<8x8xf32> to vector<8x8xbf16>
    %cst_26 = arith.constant dense<0.000000e+00> : vector<8x8xf32>
    %73 = tpu.matmul %72, %56, %cst_26 {dimension_numbers = #tpu.dot_dimension_numbers<[1], [0], [0], [1], [0, 0, 1, 1], [], []>} : vector<8x8xbf16>, vector<8x8xbf16>, vector<8x8xf32> -> vector<8x8xf32>
    %c0_27 = arith.constant 0 : index
    %c16 = arith.constant 16 : index
    %74 = vector.load %arg9[%c0_27, %c16] : memref<8x32xf32, #tpu.memory_space<vmem>>, vector<8x8xf32>
    tpu.vector_store %arg9[%c0_27, %c16], %73 {strides = array<i32>} : memref<8x32xf32, #tpu.memory_space<vmem>>, vector<8x8xf32>,
    %75 = vector.extract_strided_slice %8 {offsets = [0, 24], sizes = [8, 8], strides = [1, 1]} : vector<8x96xbf16> to vector<8x8xbf16>
    %76 = vector.extract_strided_slice %8 {offsets = [0, 56], sizes = [8, 8], strides = [1, 1]} : vector<8x96xbf16> to vector<8x8xbf16>
    %77 = vector.extract_strided_slice %8 {offsets = [0, 88], sizes = [8, 8], strides = [1, 1]} : vector<8x96xbf16> to vector<8x8xbf16>
    %cst_28 = arith.constant dense<0.000000e+00> : vector<8x8xf32>
    %78 = tpu.matmul %75, %76, %cst_28 {dimension_numbers = #tpu.dot_dimension_numbers<[1], [1], [0], [0], [0, 0, 1, 0], [], []>} : vector<8x8xbf16>, vector<8x8xbf16>, vector<8x8xf32> -> vector<8x8xf32>
    %cst_29 = arith.constant 0.353553385 : f32
    %79 = vector.broadcast %cst_29 : f32 to vector<8x8xf32>
    %80 = arith.mulf %78, %79 : vector<8x8xf32>
    %cst_30 = arith.constant -1.000000e+30 : f32
    %81 = vector.broadcast %cst_30 : f32 to vector<8x8xf32>
    %82 = arith.select %11, %80, %81 : vector<8x8xi1>, vector<8x8xf32>
    %cst_31 = arith.constant dense<0xFF800000> : vector<8xf32>
    %83 = vector.multi_reduction <maximumf>, %82, %cst_31 [1] : vector<8x8xf32> to vector<8xf32>
    %84 = vector.shape_cast %83 : vector<8xf32> to vector<8x1xf32>
    %85 = vector.broadcast %84 : vector<8x1xf32> to vector<8x8xf32>
    %86 = arith.subf %82, %85 : vector<8x8xf32>
    %87 = math.exp %86 : vector<8x8xf32>
    %cst_32 = arith.constant dense<0.000000e+00> : vector<8xf32>
    %88 = vector.multi_reduction <add>, %87, %cst_32 [1] : vector<8x8xf32> to vector<8xf32>
    %89 = vector.shape_cast %88 : vector<8xf32> to vector<8x1xf32>
    %90 = tpu.reciprocal %89 {approx = true} : vector<8x1xf32> -> vector<8x1xf32>
    %91 = vector.broadcast %90 : vector<8x1xf32> to vector<8x8xf32>
    %92 = arith.mulf %87, %91 : vector<8x8xf32>
    %93 = arith.truncf %92 : vector<8x8xf32> to vector<8x8xbf16>
    %cst_33 = arith.constant dense<0.000000e+00> : vector<8x8xf32>
    %94 = tpu.matmul %93, %77, %cst_33 {dimension_numbers = #tpu.dot_dimension_numbers<[1], [0], [0], [1], [0, 0, 1, 1], [], []>} : vector<8x8xbf16>, vector<8x8xbf16>, vector<8x8xf32> -> vector<8x8xf32>
    %c0_34 = arith.constant 0 : index
    %c24 = arith.constant 24 : index
    %95 = vector.load %arg9[%c0_34, %c24] : memref<8x32xf32, #tpu.memory_space<vmem>>, vector<8x8xf32>
    tpu.vector_store %arg9[%c0_34, %c24], %94 {strides = array<i32>} : memref<8x32xf32, #tpu.memory_space<vmem>>, vector<8x8xf32>,
    %c0_35 = arith.constant 0 : index
    %c0_36 = arith.constant 0 : index
    %96 = vector.load %arg9[%c0_35, %c0_36] : memref<8x32xf32, #tpu.memory_space<vmem>>, vector<8x32xf32>
    %97 = arith.truncf %96 : vector<8x32xf32> to vector<8x32xbf16>
    %c0_37 = arith.constant 0 : index
    %c0_38 = arith.constant 0 : index
    %98 = vector.load %arg4[%c0_37, %c0_38] : memref<32x32xbf16, #tpu.memory_space<vmem>>, vector<32x32xbf16>
    %cst_39 = arith.constant dense<0.000000e+00> : vector<8x32xf32>
    %99 = tpu.matmul %97, %98, %cst_39 {dimension_numbers = #tpu.dot_dimension_numbers<[1], [0], [0], [1], [0, 0, 1, 1], [], []>} : vector<8x32xbf16>, vector<32x32xbf16>, vector<8x32xf32> -> vector<8x32xf32>
    %c0_40 = arith.constant 0 : index
    %c0_41 = arith.constant 0 : index
    %100 = vector.load %arg5[%c0_40, %c0_41] : memref<1x32xf32, #tpu.memory_space<vmem>>, vector<1x32xf32>
    %101 = vector.broadcast %100 : vector<1x32xf32> to vector<8x32xf32>
    %102 = arith.addf %99, %101 : vector<8x32xf32>
    %103 = arith.addf %1, %102 : vector<8x32xf32>
    %c0_42 = arith.constant 0 : index
    %c0_43 = arith.constant 0 : index
    %104 = vector.load %arg6[%c0_42, %c0_43] : memref<1x32xf32, #tpu.memory_space<vmem>>, vector<1x32xf32>
    %c0_44 = arith.constant 0 : index
    %c0_45 = arith.constant 0 : index
    %105 = vector.load %arg7[%c0_44, %c0_45] : memref<1x32xf32, #tpu.memory_space<vmem>>, vector<1x32xf32>
    %cst_46 = arith.constant dense<0.000000e+00> : vector<8xf32>
    %106 = vector.multi_reduction <add>, %103, %cst_46 [1] : vector<8x32xf32> to vector<8xf32>
    %107 = vector.shape_cast %106 : vector<8xf32> to vector<8x1xf32>
    %cst_47 = arith.constant 3.200000e+01 : f32
    %108 = vector.broadcast %cst_47 : f32 to vector<8x1xf32>
    %109 = arith.divf %107, %108 : vector<8x1xf32>
    %110 = vector.broadcast %109 : vector<8x1xf32> to vector<8x32xf32>
    %111 = arith.subf %103, %110 : vector<8x32xf32>
    %112 = arith.mulf %111, %111 : vector<8x32xf32>
    %cst_48 = arith.constant dense<0.000000e+00> : vector<8xf32>
    %113 = vector.multi_reduction <add>, %112, %cst_48 [1] : vector<8x32xf32> to vector<8xf32>
    %114 = vector.shape_cast %113 : vector<8xf32> to vector<8x1xf32>
    %cst_49 = arith.constant 3.200000e+01 : f32
    %115 = vector.broadcast %cst_49 : f32 to vector<8x1xf32>
    %116 = arith.divf %114, %115 : vector<8x1xf32>
    %117 = vector.broadcast %109 : vector<8x1xf32> to vector<8x32xf32>
    %118 = arith.subf %103, %117 : vector<8x32xf32>
    %cst_50 = arith.constant 9.99999974E-6 : f32
    %119 = vector.broadcast %cst_50 : f32 to vector<8x1xf32>
    %120 = arith.addf %116, %119 : vector<8x1xf32>
    %121 = math.rsqrt %120 : vector<8x1xf32>
    %122 = vector.broadcast %121 : vector<8x1xf32> to vector<8x32xf32>
    %123 = arith.mulf %118, %122 : vector<8x32xf32>
    %124 = vector.broadcast %104 : vector<1x32xf32> to vector<8x32xf32>
    %125 = arith.mulf %123, %124 : vector<8x32xf32>
    %126 = vector.broadcast %105 : vector<1x32xf32> to vector<8x32xf32>
    %127 = arith.addf %125, %126 : vector<8x32xf32>
    %c0_51 = arith.constant 0 : index
    %c0_52 = arith.constant 0 : index
    %c0_53 = arith.constant 0 : index
    %128 = vector.load %arg8[%c0_51, %c0_52, %c0_53] : memref<1x8x32xf32, #tpu.memory_space<vmem>>, vector<1x8x32xf32>
    %129 = vector.shape_cast %128 : vector<1x8x32xf32> to vector<8x32xf32>
    %130 = vector.shape_cast %127 : vector<8x32xf32> to vector<1x8x32xf32>
    tpu.vector_store %arg8[%c0_51, %c0_52, %c0_53], %130 {strides = array<i32>} : memref<1x8x32xf32, #tpu.memory_space<vmem>>, vector<1x8x32xf32>,
    return
  }
  func.func @transform_0(%arg0: i32) -> (i32, i32, i32) {
    %c0_i32 = arith.constant 0 : i32
    %c0_i32_0 = arith.constant 0 : i32
    %c0_i32_1 = arith.constant 0 : i32
    return %arg0, %c0_i32, %c0_i32_0 : i32, i32, i32
  }
  func.func @transform_1(%arg0: i32) -> (i32, i32) {
    %c0_i32 = arith.constant 0 : i32
    %c0_i32_0 = arith.constant 0 : i32
    %c0_i32_1 = arith.constant 0 : i32
    return %c0_i32, %c0_i32_0 : i32, i32
  }
  func.func @transform_2(%arg0: i32) -> (i32, i32) {
    %c0_i32 = arith.constant 0 : i32
    %c0_i32_0 = arith.constant 0 : i32
    %c0_i32_1 = arith.constant 0 : i32
    return %c0_i32, %c0_i32_0 : i32, i32
  }
  func.func @transform_3(%arg0: i32) -> (i32, i32) {
    %c0_i32 = arith.constant 0 : i32
    %c0_i32_0 = arith.constant 0 : i32
    %c0_i32_1 = arith.constant 0 : i32
    return %c0_i32, %c0_i32_0 : i32, i32
  }
  func.func @transform_4(%arg0: i32) -> (i32, i32) {
    %c0_i32 = arith.constant 0 : i32
    %c0_i32_0 = arith.constant 0 : i32
    %c0_i32_1 = arith.constant 0 : i32
    return %c0_i32, %c0_i32_0 : i32, i32
  }
  func.func @transform_5(%arg0: i32) -> (i32, i32) {
    %c0_i32 = arith.constant 0 : i32
    %c0_i32_0 = arith.constant 0 : i32
    %c0_i32_1 = arith.constant 0 : i32
    return %c0_i32, %c0_i32_0 : i32, i32
  }
  func.func @transform_6(%arg0: i32) -> (i32, i32) {
    %c0_i32 = arith.constant 0 : i32
    %c0_i32_0 = arith.constant 0 : i32
    %c0_i32_1 = arith.constant 0 : i32
    return %c0_i32, %c0_i32_0 : i32, i32
  }
  func.func @transform_7(%arg0: i32) -> (i32, i32, i32) {
    %c0_i32 = arith.constant 0 : i32
    %c0_i32_0 = arith.constant 0 : i32
    %c0_i32_1 = arith.constant 0 : i32
    return %arg0, %c0_i32, %c0_i32_0 : i32, i32, i32
  }
}

module attributes {stable_mosaic.version = 11 : i64} {
  func.func @_ln_linear_kernel(%arg0: i32, %arg1: memref<16x32xf32, #tpu.memory_space<vmem>>, %arg2: memref<1x32xf32, #tpu.memory_space<vmem>>, %arg3: memref<1x32xf32, #tpu.memory_space<vmem>>, %arg4: memref<32x128xbf16, #tpu.memory_space<vmem>>, %arg5: memref<1x128xf32, #tpu.memory_space<vmem>>, %arg6: memref<16x128xf32, #tpu.memory_space<vmem>>) attributes {dimension_semantics = [#tpu.dimension_semantics<parallel>], iteration_bounds = array<i64: 1>, scalar_prefetch = 0 : i64, scratch_operands = 0 : i64, tpu.core_type = #tpu.core_type<tc>, window_params = [{transform_indices = @transform_0, window_bounds = array<i64: 16, 32>}, {pipeline_mode = #tpu.pipeline_mode<synchronous>, transform_indices = @transform_1, window_bounds = array<i64: 1, 32>}, {pipeline_mode = #tpu.pipeline_mode<synchronous>, transform_indices = @transform_2, window_bounds = array<i64: 1, 32>}, {pipeline_mode = #tpu.pipeline_mode<synchronous>, transform_indices = @transform_3, window_bounds = array<i64: 32, 128>}, {pipeline_mode = #tpu.pipeline_mode<synchronous>, transform_indices = @transform_4, window_bounds = array<i64: 1, 128>}, {transform_indices = @transform_5, window_bounds = array<i64: 16, 128>}]} {
    %c0 = arith.constant 0 : index
    %c0_0 = arith.constant 0 : index
    %0 = vector.load %arg1[%c0, %c0_0] : memref<16x32xf32, #tpu.memory_space<vmem>>, vector<16x32xf32>
    %c0_1 = arith.constant 0 : index
    %c0_2 = arith.constant 0 : index
    %1 = vector.load %arg2[%c0_1, %c0_2] : memref<1x32xf32, #tpu.memory_space<vmem>>, vector<1x32xf32>
    %c0_3 = arith.constant 0 : index
    %c0_4 = arith.constant 0 : index
    %2 = vector.load %arg3[%c0_3, %c0_4] : memref<1x32xf32, #tpu.memory_space<vmem>>, vector<1x32xf32>
    %cst = arith.constant dense<0.000000e+00> : vector<16xf32>
    %3 = vector.multi_reduction <add>, %0, %cst [1] : vector<16x32xf32> to vector<16xf32>
    %4 = vector.shape_cast %3 : vector<16xf32> to vector<16x1xf32>
    %cst_5 = arith.constant 3.200000e+01 : f32
    %5 = vector.broadcast %cst_5 : f32 to vector<16x1xf32>
    %6 = arith.divf %4, %5 : vector<16x1xf32>
    %7 = vector.broadcast %6 : vector<16x1xf32> to vector<16x32xf32>
    %8 = arith.subf %0, %7 : vector<16x32xf32>
    %9 = arith.mulf %8, %8 : vector<16x32xf32>
    %cst_6 = arith.constant dense<0.000000e+00> : vector<16xf32>
    %10 = vector.multi_reduction <add>, %9, %cst_6 [1] : vector<16x32xf32> to vector<16xf32>
    %11 = vector.shape_cast %10 : vector<16xf32> to vector<16x1xf32>
    %cst_7 = arith.constant 3.200000e+01 : f32
    %12 = vector.broadcast %cst_7 : f32 to vector<16x1xf32>
    %13 = arith.divf %11, %12 : vector<16x1xf32>
    %14 = vector.broadcast %6 : vector<16x1xf32> to vector<16x32xf32>
    %15 = arith.subf %0, %14 : vector<16x32xf32>
    %cst_8 = arith.constant 9.99999974E-6 : f32
    %16 = vector.broadcast %cst_8 : f32 to vector<16x1xf32>
    %17 = arith.addf %13, %16 : vector<16x1xf32>
    %18 = math.rsqrt %17 : vector<16x1xf32>
    %19 = vector.broadcast %18 : vector<16x1xf32> to vector<16x32xf32>
    %20 = arith.mulf %15, %19 : vector<16x32xf32>
    %21 = vector.broadcast %1 : vector<1x32xf32> to vector<16x32xf32>
    %22 = arith.mulf %20, %21 : vector<16x32xf32>
    %23 = vector.broadcast %2 : vector<1x32xf32> to vector<16x32xf32>
    %24 = arith.addf %22, %23 : vector<16x32xf32>
    %25 = arith.truncf %24 : vector<16x32xf32> to vector<16x32xbf16>
    %c0_9 = arith.constant 0 : index
    %c0_10 = arith.constant 0 : index
    %26 = vector.load %arg4[%c0_9, %c0_10] : memref<32x128xbf16, #tpu.memory_space<vmem>>, vector<32x128xbf16>
    %cst_11 = arith.constant dense<0.000000e+00> : vector<16x128xf32>
    %27 = tpu.matmul %25, %26, %cst_11 {dimension_numbers = #tpu.dot_dimension_numbers<[1], [0], [0], [1], [0, 0, 1, 1], [], []>} : vector<16x32xbf16>, vector<32x128xbf16>, vector<16x128xf32> -> vector<16x128xf32>
    %c0_12 = arith.constant 0 : index
    %c0_13 = arith.constant 0 : index
    %28 = vector.load %arg5[%c0_12, %c0_13] : memref<1x128xf32, #tpu.memory_space<vmem>>, vector<1x128xf32>
    %29 = vector.broadcast %28 : vector<1x128xf32> to vector<16x128xf32>
    %30 = arith.addf %27, %29 : vector<16x128xf32>
    %c0_14 = arith.constant 0 : index
    %c0_15 = arith.constant 0 : index
    %31 = vector.load %arg6[%c0_14, %c0_15] : memref<16x128xf32, #tpu.memory_space<vmem>>, vector<16x128xf32>
    tpu.vector_store %arg6[%c0_14, %c0_15], %30 {strides = array<i32>} : memref<16x128xf32, #tpu.memory_space<vmem>>, vector<16x128xf32>,
    return
  }
  func.func @transform_0(%arg0: i32) -> (i32, i32) {
    %c0_i32 = arith.constant 0 : i32
    %c0_i32_0 = arith.constant 0 : i32
    return %arg0, %c0_i32 : i32, i32
  }
  func.func @transform_1(%arg0: i32) -> (i32, i32) {
    %c0_i32 = arith.constant 0 : i32
    %c0_i32_0 = arith.constant 0 : i32
    %c0_i32_1 = arith.constant 0 : i32
    return %c0_i32, %c0_i32_0 : i32, i32
  }
  func.func @transform_2(%arg0: i32) -> (i32, i32) {
    %c0_i32 = arith.constant 0 : i32
    %c0_i32_0 = arith.constant 0 : i32
    %c0_i32_1 = arith.constant 0 : i32
    return %c0_i32, %c0_i32_0 : i32, i32
  }
  func.func @transform_3(%arg0: i32) -> (i32, i32) {
    %c0_i32 = arith.constant 0 : i32
    %c0_i32_0 = arith.constant 0 : i32
    %c0_i32_1 = arith.constant 0 : i32
    return %c0_i32, %c0_i32_0 : i32, i32
  }
  func.func @transform_4(%arg0: i32) -> (i32, i32) {
    %c0_i32 = arith.constant 0 : i32
    %c0_i32_0 = arith.constant 0 : i32
    %c0_i32_1 = arith.constant 0 : i32
    return %c0_i32, %c0_i32_0 : i32, i32
  }
  func.func @transform_5(%arg0: i32) -> (i32, i32) {
    %c0_i32 = arith.constant 0 : i32
    %c0_i32_0 = arith.constant 0 : i32
    return %arg0, %c0_i32 : i32, i32
  }
}

</mosaic_0001>

<llo_original>
// kernel: decoder_forward.9
$region0: #{decoder_forward.9}
  #allocation0 [shape = 'u32[]', space=smem, size = 0x4, offset = 0x4, fixed_abs, tag = 'smem constant byte address 0x4 - core index']
  #allocation1 [shape = 'u32[144,128]{1,0:T(1,128)}', space=vmem, size = 0x12000, scoped, tag = 'internal scratch']
  %s0 = inlined_call_operand.vmem [shape: f32[2,8,32], index: 0, kind: input, shape index: {}]
  %s1 = inlined_call_operand.vmem [shape: bf16[32,32], index: 1, kind: input, shape index: {}]
  %s2 = inlined_call_operand.vmem [shape: bf16[32,32], index: 2, kind: input, shape index: {}]
  %s3 = inlined_call_operand.vmem [shape: bf16[32,32], index: 3, kind: input, shape index: {}]
  %s4 = inlined_call_operand.vmem [shape: f32[1,32], index: 4, kind: input, shape index: {}]
  %s5 = inlined_call_operand.vmem [shape: f32[2,8,32], index: 5, kind: output, shape index: {}]
  %s6 = sld [smem:[#allocation0]]
  $region53: #{decoder_forward.9} parent=0
    _
  %s8 = ssub.s32 1, %s6
  %s9 = scalar_select 0, %s8, %s6
  loop: start=0, step=1, limit=4
  $region2: #{decoder_forward.9} parent=0 // loop_pre_header
    _
  $region3: #{decoder_forward.9} parent=0 // loop_header
    %s11 = sphi 0, %s15
    %p12 = scmp.ge.s32.totalorder %s11, 4
    %s21 = sphi 0, %s23
    %s24 = sphi 0, %s21
    %s25 = sphi 0, %s24
    %s41 = sphi 0, %s25
    %s45 = sphi 0, %s45
    %s47 = sphi 0, %s45
    %s48 = sphi 0, %s47
    %s62 = sphi 0, %s48
    %s66 = sphi 0, %s66
    %s68 = sphi 0, %s66
    %s69 = sphi 0, %s68
    %s83 = sphi 0, %s69
    %s87 = sphi 0, %s87
    %s89 = sphi 0, %s87
    %s90 = sphi 0, %s89
    %s104 = sphi 0, %s90
    %s108 = sphi 0, %s108
    %s110 = sphi 0, %s108
    %s111 = sphi 0, %s110
    %s125 = sphi 0, %s111
    %s131 = sphi 0, %s133
    %s134 = sphi 0, %s131
    %s135 = sphi 0, %s134
    %s151 = sphi 0, %s135
  $region4: #{decoder_forward.9} parent=0 // loop_header_branch
    %14 = sbr.rel (%p12) target = $region8
  $region5: #{decoder_forward.9} parent=0 // loop_body
    %s16 = ssub.s32 %s11, 1
    %s17 = ssub.s32 %s11, 2
    %s18 = sadd.s32 %s11, 1
    %s19 = ssub.s32 %s11, %s18
    %p20 = scmp.eq.s32.totalorder %s19, 0
    %s22 = sadd.s32 %s21, 1
    %s23 = scalar_select %p20, %s21, %s22
    %p26 = pneg %p20
    %p27 = scmp.eq.s32.totalorder %s11, 1
    %p28 = por %p26, %p27
    %p29 = scmp.ne.s32.totalorder %s21, %s24
    %p30 = scmp.eq.s32.totalorder %s11, 0
    %p31 = por %p29, %p30
    %p32 = scmp.ne.s32.totalorder %s21, %s24
    %p33 = scmp.eq.s32.totalorder %s16, 1
    %p34 = por %p32, %p33
    %p35 = scmp.ne.s32.totalorder %s24, %s25
    %p36 = scmp.eq.s32.totalorder %s16, 0
    %p37 = por %p35, %p36
    %p38 = scmp.ne.s32.totalorder %s24, %s25
    %p39 = scmp.eq.s32.totalorder %s17, 1
    %p40 = por %p38, %p39
    %p42 = scmp.ne.s32.totalorder %s25, %s41
    %p43 = scmp.eq.s32.totalorder %s17, 0
    %p44 = por %p42, %p43
    %s46 = sadd.s32 %s45, 1
    %p49 = scmp.eq.s32.totalorder %s11, 1
    %p50 = scmp.ne.s32.totalorder %s45, %s47
    %p51 = scmp.eq.s32.totalorder %s11, 0
    %p52 = por %p50, %p51
    %p53 = scmp.ne.s32.totalorder %s45, %s47
    %p54 = scmp.eq.s32.totalorder %s16, 1
    %p55 = por %p53, %p54
    %p56 = scmp.ne.s32.totalorder %s47, %s48
    %p57 = scmp.eq.s32.totalorder %s16, 0
    %p58 = por %p56, %p57
    %p59 = scmp.ne.s32.totalorder %s47, %s48
    %p60 = scmp.eq.s32.totalorder %s17, 1
    %p61 = por %p59, %p60
    %p63 = scmp.ne.s32.totalorder %s48, %s62
    %p64 = scmp.eq.s32.totalorder %s17, 0
    %p65 = por %p63, %p64
    %s67 = sadd.s32 %s66, 1
    %p70 = scmp.eq.s32.totalorder %s11, 1
    %p71 = scmp.ne.s32.totalorder %s66, %s68
    %p72 = scmp.eq.s32.totalorder %s11, 0
    %p73 = por %p71, %p72
    %p74 = scmp.ne.s32.totalorder %s66, %s68
    %p75 = scmp.eq.s32.totalorder %s16, 1
    %p76 = por %p74, %p75
    %p77 = scmp.ne.s32.totalorder %s68, %s69
    %p78 = scmp.eq.s32.totalorder %s16, 0
    %p79 = por %p77, %p78
    %p80 = scmp.ne.s32.totalorder %s68, %s69
    %p81 = scmp.eq.s32.totalorder %s17, 1
    %p82 = por %p80, %p81
    %p84 = scmp.ne.s32.totalorder %s69, %s83
    %p85 = scmp.eq.s32.totalorder %s17, 0
    %p86 = por %p84, %p85
    %s88 = sadd.s32 %s87, 1
    %p91 = scmp.eq.s32.totalorder %s11, 1
    %p92 = scmp.ne.s32.totalorder %s87, %s89
    %p93 = scmp.eq.s32.totalorder %s11, 0
    %p94 = por %p92, %p93
    %p95 = scmp.ne.s32.totalorder %s87, %s89
    %p96 = scmp.eq.s32.totalorder %s16, 1
    %p97 = por %p95, %p96
    %p98 = scmp.ne.s32.totalorder %s89, %s90
    %p99 = scmp.eq.s32.totalorder %s16, 0
    %p100 = por %p98, %p99
    %p101 = scmp.ne.s32.totalorder %s89, %s90
    %p102 = scmp.eq.s32.totalorder %s17, 1
    %p103 = por %p101, %p102
    %p105 = scmp.ne.s32.totalorder %s90, %s104
    %p106 = scmp.eq.s32.totalorder %s17, 0
    %p107 = por %p105, %p106
    %s109 = sadd.s32 %s108, 1
    %p112 = scmp.eq.s32.totalorder %s11, 1
    %p113 = scmp.ne.s32.totalorder %s108, %s110
    %p114 = scmp.eq.s32.totalorder %s11, 0
    %p115 = por %p113, %p114
    %p116 = scmp.ne.s32.totalorder %s108, %s110
    %p117 = scmp.eq.s32.totalorder %s16, 1
    %p118 = por %p116, %p117
    %p119 = scmp.ne.s32.totalorder %s110, %s111
    %p120 = scmp.eq.s32.totalorder %s16, 0
    %p121 = por %p119, %p120
    %p122 = scmp.ne.s32.totalorder %s110, %s111
    %p123 = scmp.eq.s32.totalorder %s17, 1
    %p124 = por %p122, %p123
    %p126 = scmp.ne.s32.totalorder %s111, %s125
    %p127 = scmp.eq.s32.totalorder %s17, 0
    %p128 = por %p126, %p127
    %s129 = ssub.s32 %s11, %s18
    %p130 = scmp.eq.s32.totalorder %s129, 0
    %s132 = sadd.s32 %s131, 1
    %s133 = scalar_select %p130, %s131, %s132
    %p136 = pneg %p130
    %p137 = scmp.eq.s32.totalorder %s11, 1
    %p138 = por %p136, %p137
    %p139 = scmp.ne.s32.totalorder %s131, %s134
    %p140 = scmp.eq.s32.totalorder %s11, 0
    %p141 = por %p139, %p140
    %p142 = scmp.ne.s32.totalorder %s131, %s134
    %p143 = scmp.eq.s32.totalorder %s16, 1
    %p144 = por %p142, %p143
    %p145 = scmp.ne.s32.totalorder %s134, %s135
    %p146 = scmp.eq.s32.totalorder %s16, 0
    %p147 = por %p145, %p146
    %p148 = scmp.ne.s32.totalorder %s134, %s135
    %p149 = scmp.eq.s32.totalorder %s17, 1
    %p150 = por %p148, %p149
    %p152 = scmp.ne.s32.totalorder %s135, %s151
    %p153 = scmp.eq.s32.totalorder %s17, 0
    %p154 = por %p152, %p153
    %p155 = scmp.le.s32.totalorder 1, %s11
    %p156 = scmp.lt.s32.totalorder %s11, 3
    %p157 = pnand %p155, %p156
    %p158 = pneg %p157
    // Predicated region
    $region9: #{decoder_forward.9} parent=5 // pred_check
      _
    $region10: #{decoder_forward.9} parent=5 // pred_check_branch
      %160 = sbr.rel (%p157) target = $region12
    $region11: #{decoder_forward.9} parent=5 // pred_region
      %s161 = ssub.s32 %s11, 1
      // Predicated region
      $region13: #{decoder_forward.9} parent=11 // pred_check
        %p162 = pneg %p58
      $region14: #{decoder_forward.9} parent=11 // pred_check_branch
        %164 = sbr.rel (%p162) target = $region16
      $region15: #{decoder_forward.9} parent=11 // pred_region
        _
      $region16: #{decoder_forward.9} parent=11 // pred_fallthru
        _
      // Predicated region
      $region17: #{decoder_forward.9} parent=11 // pred_check
        %p165 = pneg %p79
      $region18: #{decoder_forward.9} parent=11 // pred_check_branch
        %167 = sbr.rel (%p165) target = $region20
      $region19: #{decoder_forward.9} parent=11 // pred_region
        _
      $region20: #{decoder_forward.9} parent=11 // pred_fallthru
        _
      // Predicated region
      $region21: #{decoder_forward.9} parent=11 // pred_check
        %p168 = pneg %p100
      $region22: #{decoder_forward.9} parent=11 // pred_check_branch
        %170 = sbr.rel (%p168) target = $region24
      $region23: #{decoder_forward.9} parent=11 // pred_region
        _
      $region24: #{decoder_forward.9} parent=11 // pred_fallthru
        _
      // Predicated region
      $region25: #{decoder_forward.9} parent=11 // pred_check
        %p171 = pneg %p121
      $region26: #{decoder_forward.9} parent=11 // pred_check_branch
        %173 = sbr.rel (%p171) target = $region28
      $region27: #{decoder_forward.9} parent=11 // pred_region
        _
      $region28: #{decoder_forward.9} parent=11 // pred_fallthru
        _
    $region12: #{decoder_forward.9} parent=5 // pred_fallthru
      _
    %p174 = scmp.lt.s32.totalorder %s11, 2
    // Predicated region
    $region29: #{decoder_forward.9} parent=5 // pred_check
      %p175 = pneg %p174
    $region30: #{decoder_forward.9} parent=5 // pred_check_branch
      %177 = sbr.rel (%p175) target = $region32
    $region31: #{decoder_forward.9} parent=5 // pred_region
      // Predicated region
      $region33: #{decoder_forward.9} parent=31 // pred_check
        %p178 = pneg %p31
      $region34: #{decoder_forward.9} parent=31 // pred_check_branch
        %180 = sbr.rel (%p178) target = $region36
      $region35: #{decoder_forward.9} parent=31 // pred_region
        %p181 = scmp.lt.s32.totalorder %s11, 1
        %s182 = scalar_select %p181, %s11, 1
        %s183 = smul.addr %s182, 8
        %s184 = scalar_lea.vmem %s0, %s183
      $region36: #{decoder_forward.9} parent=31 // pred_fallthru
        _
    $region32: #{decoder_forward.9} parent=5 // pred_fallthru
      _
    %p185 = scmp.le.s32.totalorder 1, %s11
    %p186 = scmp.lt.s32.totalorder %s11, 3
    %p187 = pnand %p185, %p186
    %p188 = pneg %p187
    // Predicated region
    $region37: #{decoder_forward.9} parent=5 // pred_check
      _
    $region38: #{decoder_forward.9} parent=5 // pred_check_branch
      %190 = sbr.rel (%p187) target = $region40
    $region39: #{decoder_forward.9} parent=5 // pred_region
      %s191 = ssub.s32 %s11, 1
      %p192 = scmp.lt.s32.totalorder %s16, 1
      %s193 = scalar_select %p192, %s16, 1
      %s194 = smul.addr %s193, 8
      %s195 = scalar_lea.vmem %s0, %s194
      %p196 = pneg %p37
      %p197 = pneg %p34
      %p198 = pneg %p58
      %p199 = pneg %p55
      %p200 = pneg %p79
      %p201 = pneg %p76
      %p202 = pneg %p100
      %p203 = pneg %p97
      %p204 = pneg %p121
      %p205 = pneg %p118
      %p206 = pneg %p147
      %p207 = pneg %p144
      %p208 = scmp.lt.s32.totalorder %s16, 1
      %s209 = scalar_select %p208, %s16, 1
      %s210 = smul.addr %s209, 8
      %s211 = scalar_lea.vmem %s5, %s210
      %p212 = scmp.lt.s32.totalorder %s16, 1
      %s213 = scalar_select %p212, %s16, 1
      %s214 = smul.addr %s213, 8
      %s215 = scalar_lea.vmem %s0, %s214
      %p216 = scmp.lt.s32.totalorder %s16, 1
      %s217 = scalar_select %p216, %s16, 1
      %s218 = smul.addr %s217, 8
      %s219 = scalar_lea.vmem %s5, %s218
      %v221 = vld [vmem:[%s215] sm:$0xff]
      %v223 = vrot.slane %v221, 7
      %vm225 = vcmask 1040384
      %v226 = vsel %vm225, 0.0, %v223
      %v227 = vrot.slane %v221, 1
      %vm229 = vcmask 1046528
      %v230 = vsel %vm229, %v227, 0.0
      %v231 = vpack.c.bf16 %v226, %v226
      %v232 = vld [vmem:[%s1] sm:$0xf]
      %v233 = vld [vmem:[%s1 + $0x4] sm:$0xf]
      %v234 = vld [vmem:[%s1 + $0x8] sm:$0xf]
      %v235 = vld [vmem:[%s1 + $0xc] sm:$0xf]
      %v236 = vpack.c.bf16 %v221, %v221
      %v237 = vld [vmem:[%s2] sm:$0xf]
      %v238 = vld [vmem:[%s2 + $0x4] sm:$0xf]
      %v239 = vld [vmem:[%s2 + $0x8] sm:$0xf]
      %v240 = vld [vmem:[%s2 + $0xc] sm:$0xf]
      %v245 = vunpack.c.l.b16 %v237
      %v246 = vunpack.c.l.b16 %v238
      %v247 = vunpack.c.l.b16 %v239
      %v248 = vunpack.c.l.b16 %v240
      %v249 = vpack.c.b16 %v246, %v245
      %v250 = vpack.c.b16 %v248, %v247
      %vm253 = vcmask 261120
      %v255 = vsel %vm253, %v236, 0
      %257 = vmatprep.subr.bf16.mxu0 0
      %258 = vmatpush1.bf16.msra.mxu0 %v249
      %259 = vmatprep.subr.bf16.mxu0 0
      %260 = vmatpush1.bf16.msra.mxu0 %v250
      %261 = vmatprep.subr.bf16.mxu0 0
      %262 = vmatpush1.bf16.msra.mxu0 0
      %263 = vmatprep.subr.bf16.mxu0 0
      %264 = vmatpush1.bf16.msra.mxu0 0
      %265 = vmatprep.subr.bf16.mxu0 0
      %266 = vmatpush1.bf16.msra.mxu0 0
      %267 = vmatprep.subr.bf16.mxu0 0
      %268 = vmatpush1.bf16.msra.mxu0 0
      %269 = vmatprep.subr.bf16.mxu0 0
      %270 = vmatpush1.bf16.msra.mxu0 0
      %271 = vmatprep.subr.bf16.mxu0 0
      %272 = vmatpush1.bf16.msra.mxu0 0
      %273 = vmatprep.subr.bf16.mxu0 0
      %274 = vmatpush1.bf16.msra.mxu0 0
      %275 = vmatprep.subr.bf16.mxu0 0
      %276 = vmatpush1.bf16.msra.mxu0 0
      %277 = vmatprep.subr.bf16.mxu0 0
      %278 = vmatpush1.bf16.msra.mxu0 0
      %279 = vmatprep.subr.bf16.mxu0 0
      %280 = vmatpush1.bf16.msra.mxu0 0
      %281 = vmatprep.subr.bf16.mxu0 0
      %282 = vmatpush1.bf16.msra.mxu0 0
      %283 = vmatprep.subr.bf16.mxu0 0
      %284 = vmatpush1.bf16.msra.mxu0 0
      %285 = vmatprep.subr.bf16.mxu0 0
      %286 = vmatpush1.bf16.msra.mxu0 0
      %287 = vmatprep.subr.bf16.mxu0 0
      %288 = vmatpush1.bf16.msra.mxu0 0
      %289 = vmatprep.mubr.bf16.mxu0 0
      %290 = vmatmul.mubr.bf16.gmra.mrb[0].mxu0 %v255
      %v291 = vpop.f32.mrb[0].mxu0
      %v292 = vadd.f32 0.0, %v291
      %v293 = vpop.f32.mrb[0].mxu0
      %v294 = vpop.f32.mrb[0].mxu0
      %v295 = vpop.f32.mrb[0].mxu0
      %296 = vdwg.mxu0
      %v301 = vunpack.c.l.b16 %v232
      %v302 = vunpack.c.l.b16 %v233
      %v303 = vunpack.c.l.b16 %v234
      %v304 = vunpack.c.l.b16 %v235
      %v305 = vpack.c.b16 %v302, %v301
      %v306 = vpack.c.b16 %v304, %v303
      %v310 = vsel %vm253, %v231, 0
      %312 = vmatprep.subr.bf16.mxu0 0
      %313 = vmatpush1.bf16.msra.mxu0 %v305
      %314 = vmatprep.subr.bf16.mxu0 0
      %315 = vmatpush1.bf16.msra.mxu0 %v306
      %316 = vmatprep.subr.bf16.mxu0 0
      %317 = vmatpush1.bf16.msra.mxu0 0
      %318 = vmatprep.subr.bf16.mxu0 0
      %319 = vmatpush1.bf16.msra.mxu0 0
      %320 = vmatprep.subr.bf16.mxu0 0
      %321 = vmatpush1.bf16.msra.mxu0 0
      %322 = vmatprep.subr.bf16.mxu0 0
      %323 = vmatpush1.bf16.msra.mxu0 0
      %324 = vmatprep.subr.bf16.mxu0 0
      %325 = vmatpush1.bf16.msra.mxu0 0
      %326 = vmatprep.subr.bf16.mxu0 0
      %327 = vmatpush1.bf16.msra.mxu0 0
      %328 = vmatprep.subr.bf16.mxu0 0
      %329 = vmatpush1.bf16.msra.mxu0 0
      %330 = vmatprep.subr.bf16.mxu0 0
      %331 = vmatpush1.bf16.msra.mxu0 0
      %332 = vmatprep.subr.bf16.mxu0 0
      %333 = vmatpush1.bf16.msra.mxu0 0
      %334 = vmatprep.subr.bf16.mxu0 0
      %335 = vmatpush1.bf16.msra.mxu0 0
      %336 = vmatprep.subr.bf16.mxu0 0
      %337 = vmatpush1.bf16.msra.mxu0 0
      %338 = vmatprep.subr.bf16.mxu0 0
      %339 = vmatpush1.bf16.msra.mxu0 0
      %340 = vmatprep.subr.bf16.mxu0 0
      %341 = vmatpush1.bf16.msra.mxu0 0
      %342 = vmatprep.subr.bf16.mxu0 0
      %343 = vmatpush1.bf16.msra.mxu0 0
      %344 = vmatprep.mubr.bf16.mxu0 0
      %345 = vmatmul.mubr.bf16.gmra.mrb[0].mxu0 %v310
      %v346 = vpop.f32.mrb[0].mxu0
      %v347 = vadd.f32 %v292, %v346
      %v348 = vpop.f32.mrb[0].mxu0
      %v349 = vpop.f32.mrb[0].mxu0
      %v350 = vpop.f32.mrb[0].mxu0
      %351 = vdwg.mxu0
      %v352 = vpack.c.bf16 %v230, %v230
      %v353 = vld [vmem:[%s3] sm:$0xf]
      %v354 = vld [vmem:[%s3 + $0x4] sm:$0xf]
      %v355 = vld [vmem:[%s3 + $0x8] sm:$0xf]
      %v356 = vld [vmem:[%s3 + $0xc] sm:$0xf]
      %v361 = vunpack.c.l.b16 %v353
      %v362 = vunpack.c.l.b16 %v354
      %v363 = vunpack.c.l.b16 %v355
      %v364 = vunpack.c.l.b16 %v356
      %v365 = vpack.c.b16 %v362, %v361
      %v366 = vpack.c.b16 %v364, %v363
      %v370 = vsel %vm253, %v352, 0
      %372 = vmatprep.subr.bf16.mxu0 0
      %373 = vmatpush1.bf16.msra.mxu0 %v365
      %374 = vmatprep.subr.bf16.mxu0 0
      %375 = vmatpush1.bf16.msra.mxu0 %v366
      %376 = vmatprep.subr.bf16.mxu0 0
      %377 = vmatpush1.bf16.msra.mxu0 0
      %378 = vmatprep.subr.bf16.mxu0 0
      %379 = vmatpush1.bf16.msra.mxu0 0
      %380 = vmatprep.subr.bf16.mxu0 0
      %381 = vmatpush1.bf16.msra.mxu0 0
      %382 = vmatprep.subr.bf16.mxu0 0
      %383 = vmatpush1.bf16.msra.mxu0 0
      %384 = vmatprep.subr.bf16.mxu0 0
      %385 = vmatpush1.bf16.msra.mxu0 0
      %386 = vmatprep.subr.bf16.mxu0 0
      %387 = vmatpush1.bf16.msra.mxu0 0
      %388 = vmatprep.subr.bf16.mxu0 0
      %389 = vmatpush1.bf16.msra.mxu0 0
      %390 = vmatprep.subr.bf16.mxu0 0
      %391 = vmatpush1.bf16.msra.mxu0 0
      %392 = vmatprep.subr.bf16.mxu0 0
      %393 = vmatpush1.bf16.msra.mxu0 0
      %394 = vmatprep.subr.bf16.mxu0 0
      %395 = vmatpush1.bf16.msra.mxu0 0
      %396 = vmatprep.subr.bf16.mxu0 0
      %397 = vmatpush1.bf16.msra.mxu0 0
      %398 = vmatprep.subr.bf16.mxu0 0
      %399 = vmatpush1.bf16.msra.mxu0 0
      %400 = vmatprep.subr.bf16.mxu0 0
      %401 = vmatpush1.bf16.msra.mxu0 0
      %402 = vmatprep.subr.bf16.mxu0 0
      %403 = vmatpush1.bf16.msra.mxu0 0
      %404 = vmatprep.mubr.bf16.mxu0 0
      %405 = vmatmul.mubr.bf16.gmra.mrb[0].mxu0 %v370
      %v406 = vpop.f32.mrb[0].mxu0
      %v407 = vadd.f32 0.0, %v406
      %v408 = vpop.f32.mrb[0].mxu0
      %v409 = vpop.f32.mrb[0].mxu0
      %v410 = vpop.f32.mrb[0].mxu0
      %411 = vdwg.mxu0
      %v412 = vadd.f32 %v347, %v407
      %v413 = vld [vmem:[%s4] sm:$0x1]
      %v415 = vlaneseq
      %v416 = vshrl.u32 %v415, 7
      %v417 = vsub.s32 0, %v416
      %v418 = vrot.slane %v413, %v417
      %v420 = vadd.f32 %v412, %v418
      %421 = vst.msk [vmem:[%s219] sm:$0xff] %vm253, %v420
      %p422 = scmp.lt.s32.totalorder %s16, 1
      %s423 = scalar_select %p422, %s16, 1
      %s424 = smul.addr %s423, 8
      %s425 = scalar_lea.vmem %s5, %s424
      // Predicated region
      $region41: #{decoder_forward.9} parent=39 // pred_check
        %p426 = pneg %p144
      $region42: #{decoder_forward.9} parent=39 // pred_check_branch
        %428 = sbr.rel (%p426) target = $region44
      $region43: #{decoder_forward.9} parent=39 // pred_region
        _
      $region44: #{decoder_forward.9} parent=39 // pred_fallthru
        _
    $region40: #{decoder_forward.9} parent=5 // pred_fallthru
      _
    %p429 = scmp.le.s32.totalorder 2, %s11
    // Predicated region
    $region45: #{decoder_forward.9} parent=5 // pred_check
      %p430 = pneg %p429
    $region46: #{decoder_forward.9} parent=5 // pred_check_branch
      %432 = sbr.rel (%p430) target = $region48
    $region47: #{decoder_forward.9} parent=5 // pred_region
      %s433 = ssub.s32 %s11, 2
      // Predicated region
      $region49: #{decoder_forward.9} parent=47 // pred_check
        %p434 = pneg %p150
      $region50: #{decoder_forward.9} parent=47 // pred_check_branch
        %436 = sbr.rel (%p434) target = $region52
      $region51: #{decoder_forward.9} parent=47 // pred_region
        %p437 = scmp.lt.s32.totalorder %s17, 1
        %s438 = scalar_select %p437, %s17, 1
        %s439 = smul.addr %s438, 8
        %s440 = scalar_lea.vmem %s5, %s439
      $region52: #{decoder_forward.9} parent=47 // pred_fallthru
        _
    $region48: #{decoder_forward.9} parent=5 // pred_fallthru
      _
  $region6: #{decoder_forward.9} parent=0 // loop_footer
    %s15 = sadd.s32 1, %s11
  $region7: #{decoder_forward.9} parent=0 // loop_footer_branch
    %10 = sbr.rel target = $region3
  $region8: #{decoder_forward.9} parent=0 // loop_exit
    _

// kernel: decoder_forward.12
$region0: #{decoder_forward.12}
  #allocation0 [shape = 'u32[]', space=smem, size = 0x4, offset = 0x4, fixed_abs, tag = 'smem constant byte address 0x4 - core index']
  #allocation1 [shape = 'u32[144,128]{1,0:T(1,128)}', space=vmem, size = 0x12000, scoped, tag = 'internal scratch']
  %s0 = inlined_call_operand.vmem [shape: f32[16,32], index: 0, kind: input, shape index: {}]
  %s1 = inlined_call_operand.vmem [shape: bf16[32,64], index: 1, kind: input, shape index: {}]
  %s2 = inlined_call_operand.vmem [shape: f32[1,64], index: 2, kind: input, shape index: {}]
  %s3 = inlined_call_operand.vmem [shape: bf16[64,32], index: 3, kind: input, shape index: {}]
  %s4 = inlined_call_operand.vmem [shape: f32[1,32], index: 4, kind: input, shape index: {}]
  %s5 = inlined_call_operand.vmem [shape: f32[1,32], index: 5, kind: input, shape index: {}]
  %s6 = inlined_call_operand.vmem [shape: f32[1,32], index: 6, kind: input, shape index: {}]
  %s7 = inlined_call_operand.vmem [shape: f32[16,32], index: 7, kind: output, shape index: {}]
  %s8 = sld [smem:[#allocation0]]
  $region38: #{decoder_forward.12} parent=0
    _
  %s10 = ssub.s32 1, %s8
  %s11 = scalar_select 0, %s10, %s8
  // Predicated region
  $region2: #{decoder_forward.12} parent=0 // pred_check
    _
  $region3: #{decoder_forward.12} parent=0 // pred_check_branch
    %13 = sbr.rel (0) target = $region5
  $region4: #{decoder_forward.12} parent=0 // pred_region
    _
  $region5: #{decoder_forward.12} parent=0 // pred_fallthru
    _
  // Predicated region
  $region6: #{decoder_forward.12} parent=0 // pred_check
    _
  $region7: #{decoder_forward.12} parent=0 // pred_check_branch
    %15 = sbr.rel (0) target = $region9
  $region8: #{decoder_forward.12} parent=0 // pred_region
    _
  $region9: #{decoder_forward.12} parent=0 // pred_fallthru
    _
  // Predicated region
  $region10: #{decoder_forward.12} parent=0 // pred_check
    _
  $region11: #{decoder_forward.12} parent=0 // pred_check_branch
    %17 = sbr.rel (0) target = $region13
  $region12: #{decoder_forward.12} parent=0 // pred_region
    _
  $region13: #{decoder_forward.12} parent=0 // pred_fallthru
    _
  // Predicated region
  $region14: #{decoder_forward.12} parent=0 // pred_check
    _
  $region15: #{decoder_forward.12} parent=0 // pred_check_branch
    %19 = sbr.rel (0) target = $region17
  $region16: #{decoder_forward.12} parent=0 // pred_region
    _
  $region17: #{decoder_forward.12} parent=0 // pred_fallthru
    _
  // Predicated region
  $region18: #{decoder_forward.12} parent=0 // pred_check
    _
  $region19: #{decoder_forward.12} parent=0 // pred_check_branch
    %21 = sbr.rel (0) target = $region21
  $region20: #{decoder_forward.12} parent=0 // pred_region
    _
  $region21: #{decoder_forward.12} parent=0 // pred_fallthru
    _
  // Predicated region
  $region22: #{decoder_forward.12} parent=0 // pred_check
    _
  $region23: #{decoder_forward.12} parent=0 // pred_check_branch
    %23 = sbr.rel (0) target = $region25
  $region24: #{decoder_forward.12} parent=0 // pred_region
    _
  $region25: #{decoder_forward.12} parent=0 // pred_fallthru
    _
  // Predicated region
  $region26: #{decoder_forward.12} parent=0 // pred_check
    _
  $region27: #{decoder_forward.12} parent=0 // pred_check_branch
    %25 = sbr.rel (0) target = $region29
  $region28: #{decoder_forward.12} parent=0 // pred_region
    _
  $region29: #{decoder_forward.12} parent=0 // pred_fallthru
    _
  %v27 = vld [vmem:[%s0] sm:$0xff]
  %v28 = vld [vmem:[%s0 + $0x8] sm:$0xff]
  %v29 = vpack.c.bf16 %v28, %v27
  %v30 = vld [vmem:[%s1] sm:$0xf]
  %v31 = vld [vmem:[%s1 + $0x4] sm:$0xf]
  %v32 = vld [vmem:[%s1 + $0x8] sm:$0xf]
  %v33 = vld [vmem:[%s1 + $0xc] sm:$0xf]
  %v34 = vld [vmem:[%s2] sm:$0x1]
  %v36 = vlaneseq
  %v37 = vshrl.u32 %v36, 7
  %v38 = vsub.s32 0, %v37
  %v39 = vrot.slane %v34, %v38
  %v45 = vunpack.c.l.b16 %v30
  %v46 = vunpack.c.l.b16 %v31
  %v47 = vunpack.c.l.b16 %v32
  %v48 = vunpack.c.l.b16 %v33
  %v49 = vpack.c.b16 %v46, %v45
  %v50 = vpack.c.b16 %v48, %v47
  %vm53 = vcmask 261120
  %v55 = vsel %vm53, %v29, 0
  %57 = vmatprep.subr.bf16.mxu0 0
  %58 = vmatpush1.bf16.msra.mxu0 %v49
  %59 = vmatprep.subr.bf16.mxu0 0
  %60 = vmatpush1.bf16.msra.mxu0 %v50
  %61 = vmatprep.subr.bf16.mxu0 0
  %62 = vmatpush1.bf16.msra.mxu0 0
  %63 = vmatprep.subr.bf16.mxu0 0
  %64 = vmatpush1.bf16.msra.mxu0 0
  %65 = vmatprep.subr.bf16.mxu0 0
  %66 = vmatpush1.bf16.msra.mxu0 0
  %67 = vmatprep.subr.bf16.mxu0 0
  %68 = vmatpush1.bf16.msra.mxu0 0
  %69 = vmatprep.subr.bf16.mxu0 0
  %70 = vmatpush1.bf16.msra.mxu0 0
  %71 = vmatprep.subr.bf16.mxu0 0
  %72 = vmatpush1.bf16.msra.mxu0 0
  %73 = vmatprep.subr.bf16.mxu0 0
  %74 = vmatpush1.bf16.msra.mxu0 0
  %75 = vmatprep.subr.bf16.mxu0 0
  %76 = vmatpush1.bf16.msra.mxu0 0
  %77 = vmatprep.subr.bf16.mxu0 0
  %78 = vmatpush1.bf16.msra.mxu0 0
  %79 = vmatprep.subr.bf16.mxu0 0
  %80 = vmatpush1.bf16.msra.mxu0 0
  %81 = vmatprep.subr.bf16.mxu0 0
  %82 = vmatpush1.bf16.msra.mxu0 0
  %83 = vmatprep.subr.bf16.mxu0 0
  %84 = vmatpush1.bf16.msra.mxu0 0
  %85 = vmatprep.subr.bf16.mxu0 0
  %86 = vmatpush1.bf16.msra.mxu0 0
  %87 = vmatprep.subr.bf16.mxu0 0
  %88 = vmatpush1.bf16.msra.mxu0 0
  %89 = vmatprep.mubr.bf16.mxu0 0
  %90 = vmatmul.mubr.bf16.gmra.mrb[0].mxu0 %v55
  %v91 = vpop.f32.mrb[0].mxu0
  %v92 = vadd.f32 %v39, %v91
  %v93 = vpop.f32.mrb[0].mxu0
  %v94 = vpop.f32.mrb[0].mxu0
  %v95 = vadd.f32 %v39, %v94
  %v96 = vpop.f32.mrb[0].mxu0
  %97 = vdwg.mxu0
  %v98 = vmax.f32 %v92, 0.0
  %v99 = vmax.f32 %v95, 0.0
  %v100 = vpack.c.bf16 %v99, %v98
  %v101 = vld [vmem:[%s3] sm:$0xf]
  %v102 = vld [vmem:[%s3 + $0x4] sm:$0xf]
  %v103 = vld [vmem:[%s3 + $0x8] sm:$0xf]
  %v104 = vld [vmem:[%s3 + $0xc] sm:$0xf]
  %v105 = vld [vmem:[%s3 + $0x10] sm:$0xf]
  %v106 = vld [vmem:[%s3 + $0x14] sm:$0xf]
  %v107 = vld [vmem:[%s3 + $0x18] sm:$0xf]
  %v108 = vld [vmem:[%s3 + $0x1c] sm:$0xf]
  %v109 = vld [vmem:[%s4] sm:$0x1]
  %v111 = vlaneseq
  %v112 = vshrl.u32 %v111, 7
  %v113 = vsub.s32 0, %v112
  %v114 = vrot.slane %v109, %v113
  %v124 = vunpack.c.l.b16 %v101
  %v125 = vunpack.c.l.b16 %v102
  %v126 = vunpack.c.l.b16 %v103
  %v127 = vunpack.c.l.b16 %v104
  %v128 = vunpack.c.l.b16 %v105
  %v129 = vunpack.c.l.b16 %v106
  %v130 = vunpack.c.l.b16 %v107
  %v131 = vunpack.c.l.b16 %v108
  %v132 = vpack.c.b16 %v125, %v124
  %v133 = vpack.c.b16 %v127, %v126
  %v134 = vpack.c.b16 %v129, %v128
  %v135 = vpack.c.b16 %v131, %v130
  %vm140 = vcmask 523264
  %v142 = vsel %vm140, %v100, 0
  %144 = vmatprep.subr.bf16.mxu0 0
  %145 = vmatpush1.bf16.msra.mxu0 %v132
  %146 = vmatprep.subr.bf16.mxu0 0
  %147 = vmatpush1.bf16.msra.mxu0 %v133
  %148 = vmatprep.subr.bf16.mxu0 0
  %149 = vmatpush1.bf16.msra.mxu0 %v134
  %150 = vmatprep.subr.bf16.mxu0 0
  %151 = vmatpush1.bf16.msra.mxu0 %v135
  %152 = vmatprep.subr.bf16.mxu0 0
  %153 = vmatpush1.bf16.msra.mxu0 0
  %154 = vmatprep.subr.bf16.mxu0 0
  %155 = vmatpush1.bf16.msra.mxu0 0
  %156 = vmatprep.subr.bf16.mxu0 0
  %157 = vmatpush1.bf16.msra.mxu0 0
  %158 = vmatprep.subr.bf16.mxu0 0
  %159 = vmatpush1.bf16.msra.mxu0 0
  %160 = vmatprep.subr.bf16.mxu0 0
  %161 = vmatpush1.bf16.msra.mxu0 0
  %162 = vmatprep.subr.bf16.mxu0 0
  %163 = vmatpush1.bf16.msra.mxu0 0
  %164 = vmatprep.subr.bf16.mxu0 0
  %165 = vmatpush1.bf16.msra.mxu0 0
  %166 = vmatprep.subr.bf16.mxu0 0
  %167 = vmatpush1.bf16.msra.mxu0 0
  %168 = vmatprep.subr.bf16.mxu0 0
  %169 = vmatpush1.bf16.msra.mxu0 0
  %170 = vmatprep.subr.bf16.mxu0 0
  %171 = vmatpush1.bf16.msra.mxu0 0
  %172 = vmatprep.subr.bf16.mxu0 0
  %173 = vmatpush1.bf16.msra.mxu0 0
  %174 = vmatprep.subr.bf16.mxu0 0
  %175 = vmatpush1.bf16.msra.mxu0 0
  %176 = vmatprep.mubr.bf16.mxu0 0
  %177 = vmatmul.mubr.bf16.gmra.mrb[0].mxu0 %v142
  %v178 = vpop.f32.mrb[0].mxu0
  %v179 = vadd.f32 %v114, %v178
  %v180 = vpop.f32.mrb[0].mxu0
  %v181 = vpop.f32.mrb[0].mxu0
  %v182 = vadd.f32 %v114, %v181
  %v183 = vpop.f32.mrb[0].mxu0
  %184 = vdwg.mxu0
  %v185 = vadd.f32 %v27, %v179
  %v186 = vadd.f32 %v28, %v182
  %v187 = vld [vmem:[%s5] sm:$0x1]
  %v188 = vld [vmem:[%s6] sm:$0x1]
  %v189 = vsel %vm53, %v185, 0.0
  %190 = vadd.xlane.f32.xlu0 %v189
  %v191 = vpop.xlane.xlu0 %190
  %v192 = vsel %vm53, %v186, 0.0
  %193 = vadd.xlane.f32.xlu0 %v192
  %v194 = vpop.xlane.xlu0 %193
  %v195 = vrcp.pop 32.0
  %v196 = vmul.f32 %v191, %v195
  %v197 = vmul.f32 %v194, %v195
  %v198 = vsub.f32 %v185, %v196
  %v199 = vsub.f32 %v186, %v197
  %v200 = vmul.f32 %v198, %v198
  %v201 = vmul.f32 %v199, %v199
  %v202 = vsel %vm53, %v200, 0.0
  %203 = vadd.xlane.f32.xlu0 %v202
  %v204 = vpop.xlane.xlu0 %203
  %v205 = vsel %vm53, %v201, 0.0
  %206 = vadd.xlane.f32.xlu0 %v205
  %v207 = vpop.xlane.xlu0 %206
  %v208 = vmul.f32 %v204, %v195
  %v209 = vmul.f32 %v207, %v195
  %v210 = vadd.f32 %v208, 1e-05
  %v211 = vadd.f32 %v209, 1e-05
  %v212 = vrsqrt.pop %v210
  %v213 = vrsqrt.pop %v211
  %v214 = vmul.f32 %v198, %v212
  %v215 = vmul.f32 %v199, %v213
  %v217 = vlaneseq
  %v218 = vshrl.u32 %v217, 7
  %v219 = vsub.s32 0, %v218
  %v220 = vrot.slane %v187, %v219
  %v222 = vmul.f32 %v214, %v220
  %v223 = vmul.f32 %v215, %v220
  %v225 = vlaneseq
  %v226 = vshrl.u32 %v225, 7
  %v227 = vsub.s32 0, %v226
  %v228 = vrot.slane %v188, %v227
  %v230 = vadd.f32 %v222, %v228
  %v231 = vadd.f32 %v223, %v228
  %232 = vst.msk [vmem:[%s7] sm:$0xff] %vm53, %v230
  %233 = vst.msk [vmem:[%s7 + $0x8] sm:$0xff] %vm53, %v231
  // Predicated region
  $region30: #{decoder_forward.12} parent=0 // pred_check
    _
  $region31: #{decoder_forward.12} parent=0 // pred_check_branch
    %235 = sbr.rel (0) target = $region33
  $region32: #{decoder_forward.12} parent=0 // pred_region
    _
  $region33: #{decoder_forward.12} parent=0 // pred_fallthru
    _
  // Predicated region
  $region34: #{decoder_forward.12} parent=0 // pred_check
    _
  $region35: #{decoder_forward.12} parent=0 // pred_check_branch
    %237 = sbr.rel (0) target = $region37
  $region36: #{decoder_forward.12} parent=0 // pred_region
    _
  $region37: #{decoder_forward.12} parent=0 // pred_fallthru
    _

// kernel: decoder_forward.11
$region0: #{decoder_forward.11}
  #allocation0 [shape = 'u32[]', space=smem, size = 0x4, offset = 0x4, fixed_abs, tag = 'smem constant byte address 0x4 - core index']
  #allocation1 [shape = 'u32[144,128]{1,0:T(1,128)}', space=vmem, size = 0x12000, scoped, tag = 'internal scratch']
  #allocation2 [shape = 'f32[8,32]{1,0:T(8,128)}', space=vmem, size = 0x1000, scoped, tag = 'scratch operand']
  %s0 = inlined_call_operand.vmem [shape: f32[2,8,32], index: 0, kind: input, shape index: {}]
  %s1 = inlined_call_operand.vmem [shape: f32[2,16,32], index: 1, kind: input, shape index: {}]
  %s2 = inlined_call_operand.vmem [shape: bf16[32,32], index: 2, kind: input, shape index: {}]
  %s3 = inlined_call_operand.vmem [shape: f32[1,32], index: 3, kind: input, shape index: {}]
  %s4 = inlined_call_operand.vmem [shape: bf16[32,64], index: 4, kind: input, shape index: {}]
  %s5 = inlined_call_operand.vmem [shape: f32[1,64], index: 5, kind: input, shape index: {}]
  %s6 = inlined_call_operand.vmem [shape: bf16[32,32], index: 6, kind: input, shape index: {}]
  %s7 = inlined_call_operand.vmem [shape: f32[1,32], index: 7, kind: input, shape index: {}]
  %s8 = inlined_call_operand.vmem [shape: f32[1,32], index: 8, kind: input, shape index: {}]
  %s9 = inlined_call_operand.vmem [shape: f32[1,32], index: 9, kind: input, shape index: {}]
  %s10 = inlined_call_operand.vmem [shape: f32[2,8,32], index: 10, kind: output, shape index: {0}]
  %s11 = inlined_call_operand.hbm [shape: f32[2,4,8,16], index: 11, kind: output, shape index: {1}]
  %12 = xla_tuple %s10, %s11
  %s13 = sld [smem:[#allocation0]]
  $region81: #{decoder_forward.11} parent=0
    _
  %s15 = ssub.s32 1, %s13
  %s16 = scalar_select 0, %s15, %s13
  $region1: #{decoder_forward.11} parent=0
    #allocation3 [shape = 'u8[32768]{0}', space=vmem, size = 0x8000, scoped, tag = 'output window, operand 1']
    #allocation4 [shape = 's32[2]{0}', space=sflag, size = 0x8, scoped, tag = 'scoped memory for decoder_forward.11']
    %17 = vsyncpa [#allocation4], 0
    %s18 = scalar_lea.sflag [#allocation4], 1
    %19 = vsyncpa %s18, 0
    loop: start=0, step=1, limit=4
    $region2: #{decoder_forward.11} parent=1 // loop_pre_header
      _
    $region3: #{decoder_forward.11} parent=1 // loop_header
      %s21 = sphi 0, %s25
      %p22 = scmp.ge.s32.totalorder %s21, 4
      %s31 = sphi 0, %s33
      %s34 = sphi 0, %s31
      %s35 = sphi 0, %s34
      %s51 = sphi 0, %s35
      %s57 = sphi 0, %s59
      %s60 = sphi 0, %s57
      %s61 = sphi 0, %s60
      %s77 = sphi 0, %s61
      %s81 = sphi 0, %s81
      %s83 = sphi 0, %s81
      %s84 = sphi 0, %s83
      %s98 = sphi 0, %s84
      %s102 = sphi 0, %s102
      %s104 = sphi 0, %s102
      %s105 = sphi 0, %s104
      %s119 = sphi 0, %s105
      %s123 = sphi 0, %s123
      %s125 = sphi 0, %s123
      %s126 = sphi 0, %s125
      %s140 = sphi 0, %s126
      %s144 = sphi 0, %s144
      %s146 = sphi 0, %s144
      %s147 = sphi 0, %s146
      %s161 = sphi 0, %s147
      %s165 = sphi 0, %s165
      %s167 = sphi 0, %s165
      %s168 = sphi 0, %s167
      %s182 = sphi 0, %s168
      %s186 = sphi 0, %s186
      %s188 = sphi 0, %s186
      %s189 = sphi 0, %s188
      %s203 = sphi 0, %s189
      %s207 = sphi 0, %s207
      %s209 = sphi 0, %s207
      %s210 = sphi 0, %s209
      %s224 = sphi 0, %s210
      %s228 = sphi 0, %s228
      %s230 = sphi 0, %s228
      %s231 = sphi 0, %s230
      %s245 = sphi 0, %s231
      %s251 = sphi 0, %s253
      %s254 = sphi 0, %s251
      %s255 = sphi 0, %s254
      %s271 = sphi 0, %s255
      %s277 = sphi 0, %s279
      %s280 = sphi 0, %s277
      %s281 = sphi 0, %s280
      %s297 = sphi 0, %s281
    $region4: #{decoder_forward.11} parent=1 // loop_header_branch
      %24 = sbr.rel (%p22) target = $region8
    $region5: #{decoder_forward.11} parent=1 // loop_body
      %s26 = ssub.s32 %s21, 1
      %s27 = ssub.s32 %s21, 2
      %s28 = sadd.s32 %s21, 1
      %s29 = ssub.s32 %s21, %s28
      %p30 = scmp.eq.s32.totalorder %s29, 0
      %s32 = sadd.s32 %s31, 1
      %s33 = scalar_select %p30, %s31, %s32
      %p36 = pneg %p30
      %p37 = scmp.eq.s32.totalorder %s21, 1
      %p38 = por %p36, %p37
      %p39 = scmp.ne.s32.totalorder %s31, %s34
      %p40 = scmp.eq.s32.totalorder %s21, 0
      %p41 = por %p39, %p40
      %p42 = scmp.ne.s32.totalorder %s31, %s34
      %p43 = scmp.eq.s32.totalorder %s26, 1
      %p44 = por %p42, %p43
      %p45 = scmp.ne.s32.totalorder %s34, %s35
      %p46 = scmp.eq.s32.totalorder %s26, 0
      %p47 = por %p45, %p46
      %p48 = scmp.ne.s32.totalorder %s34, %s35
      %p49 = scmp.eq.s32.totalorder %s27, 1
      %p50 = por %p48, %p49
      %p52 = scmp.ne.s32.totalorder %s35, %s51
      %p53 = scmp.eq.s32.totalorder %s27, 0
      %p54 = por %p52, %p53
      %s55 = ssub.s32 %s21, %s28
      %p56 = scmp.eq.s32.totalorder %s55, 0
      %s58 = sadd.s32 %s57, 1
      %s59 = scalar_select %p56, %s57, %s58
      %p62 = pneg %p56
      %p63 = scmp.eq.s32.totalorder %s21, 1
      %p64 = por %p62, %p63
      %p65 = scmp.ne.s32.totalorder %s57, %s60
      %p66 = scmp.eq.s32.totalorder %s21, 0
      %p67 = por %p65, %p66
      %p68 = scmp.ne.s32.totalorder %s57, %s60
      %p69 = scmp.eq.s32.totalorder %s26, 1
      %p70 = por %p68, %p69
      %p71 = scmp.ne.s32.totalorder %s60, %s61
      %p72 = scmp.eq.s32.totalorder %s26, 0
      %p73 = por %p71, %p72
      %p74 = scmp.ne.s32.totalorder %s60, %s61
      %p75 = scmp.eq.s32.totalorder %s27, 1
      %p76 = por %p74, %p75
      %p78 = scmp.ne.s32.totalorder %s61, %s77
      %p79 = scmp.eq.s32.totalorder %s27, 0
      %p80 = por %p78, %p79
      %s82 = sadd.s32 %s81, 1
      %p85 = scmp.eq.s32.totalorder %s21, 1
      %p86 = scmp.ne.s32.totalorder %s81, %s83
      %p87 = scmp.eq.s32.totalorder %s21, 0
      %p88 = por %p86, %p87
      %p89 = scmp.ne.s32.totalorder %s81, %s83
      %p90 = scmp.eq.s32.totalorder %s26, 1
      %p91 = por %p89, %p90
      %p92 = scmp.ne.s32.totalorder %s83, %s84
      %p93 = scmp.eq.s32.totalorder %s26, 0
      %p94 = por %p92, %p93
      %p95 = scmp.ne.s32.totalorder %s83, %s84
      %p96 = scmp.eq.s32.totalorder %s27, 1
      %p97 = por %p95, %p96
      %p99 = scmp.ne.s32.totalorder %s84, %s98
      %p100 = scmp.eq.s32.totalorder %s27, 0
      %p101 = por %p99, %p100
      %s103 = sadd.s32 %s102, 1
      %p106 = scmp.eq.s32.totalorder %s21, 1
      %p107 = scmp.ne.s32.totalorder %s102, %s104
      %p108 = scmp.eq.s32.totalorder %s21, 0
      %p109 = por %p107, %p108
      %p110 = scmp.ne.s32.totalorder %s102, %s104
      %p111 = scmp.eq.s32.totalorder %s26, 1
      %p112 = por %p110, %p111
      %p113 = scmp.ne.s32.totalorder %s104, %s105
      %p114 = scmp.eq.s32.totalorder %s26, 0
      %p115 = por %p113, %p114
      %p116 = scmp.ne.s32.totalorder %s104, %s105
      %p117 = scmp.eq.s32.totalorder %s27, 1
      %p118 = por %p116, %p117
      %p120 = scmp.ne.s32.totalorder %s105, %s119
      %p121 = scmp.eq.s32.totalorder %s27, 0
      %p122 = por %p120, %p121
      %s124 = sadd.s32 %s123, 1
      %p127 = scmp.eq.s32.totalorder %s21, 1
      %p128 = scmp.ne.s32.totalorder %s123, %s125
      %p129 = scmp.eq.s32.totalorder %s21, 0
      %p130 = por %p128, %p129
      %p131 = scmp.ne.s32.totalorder %s123, %s125
      %p132 = scmp.eq.s32.totalorder %s26, 1
      %p133 = por %p131, %p132
      %p134 = scmp.ne.s32.totalorder %s125, %s126
      %p135 = scmp.eq.s32.totalorder %s26, 0
      %p136 = por %p134, %p135
      %p137 = scmp.ne.s32.totalorder %s125, %s126
      %p138 = scmp.eq.s32.totalorder %s27, 1
      %p139 = por %p137, %p138
      %p141 = scmp.ne.s32.totalorder %s126, %s140
      %p142 = scmp.eq.s32.totalorder %s27, 0
      %p143 = por %p141, %p142
      %s145 = sadd.s32 %s144, 1
      %p148 = scmp.eq.s32.totalorder %s21, 1
      %p149 = scmp.ne.s32.totalorder %s144, %s146
      %p150 = scmp.eq.s32.totalorder %s21, 0
      %p151 = por %p149, %p150
      %p152 = scmp.ne.s32.totalorder %s144, %s146
      %p153 = scmp.eq.s32.totalorder %s26, 1
      %p154 = por %p152, %p153
      %p155 = scmp.ne.s32.totalorder %s146, %s147
      %p156 = scmp.eq.s32.totalorder %s26, 0
      %p157 = por %p155, %p156
      %p158 = scmp.ne.s32.totalorder %s146, %s147
      %p159 = scmp.eq.s32.totalorder %s27, 1
      %p160 = por %p158, %p159
      %p162 = scmp.ne.s32.totalorder %s147, %s161
      %p163 = scmp.eq.s32.totalorder %s27, 0
      %p164 = por %p162, %p163
      %s166 = sadd.s32 %s165, 1
      %p169 = scmp.eq.s32.totalorder %s21, 1
      %p170 = scmp.ne.s32.totalorder %s165, %s167
      %p171 = scmp.eq.s32.totalorder %s21, 0
      %p172 = por %p170, %p171
      %p173 = scmp.ne.s32.totalorder %s165, %s167
      %p174 = scmp.eq.s32.totalorder %s26, 1
      %p175 = por %p173, %p174
      %p176 = scmp.ne.s32.totalorder %s167, %s168
      %p177 = scmp.eq.s32.totalorder %s26, 0
      %p178 = por %p176, %p177
      %p179 = scmp.ne.s32.totalorder %s167, %s168
      %p180 = scmp.eq.s32.totalorder %s27, 1
      %p181 = por %p179, %p180
      %p183 = scmp.ne.s32.totalorder %s168, %s182
      %p184 = scmp.eq.s32.totalorder %s27, 0
      %p185 = por %p183, %p184
      %s187 = sadd.s32 %s186, 1
      %p190 = scmp.eq.s32.totalorder %s21, 1
      %p191 = scmp.ne.s32.totalorder %s186, %s188
      %p192 = scmp.eq.s32.totalorder %s21, 0
      %p193 = por %p191, %p192
      %p194 = scmp.ne.s32.totalorder %s186, %s188
      %p195 = scmp.eq.s32.totalorder %s26, 1
      %p196 = por %p194, %p195
      %p197 = scmp.ne.s32.totalorder %s188, %s189
      %p198 = scmp.eq.s32.totalorder %s26, 0
      %p199 = por %p197, %p198
      %p200 = scmp.ne.s32.totalorder %s188, %s189
      %p201 = scmp.eq.s32.totalorder %s27, 1
      %p202 = por %p200, %p201
      %p204 = scmp.ne.s32.totalorder %s189, %s203
      %p205 = scmp.eq.s32.totalorder %s27, 0
      %p206 = por %p204, %p205
      %s208 = sadd.s32 %s207, 1
      %p211 = scmp.eq.s32.totalorder %s21, 1
      %p212 = scmp.ne.s32.totalorder %s207, %s209
      %p213 = scmp.eq.s32.totalorder %s21, 0
      %p214 = por %p212, %p213
      %p215 = scmp.ne.s32.totalorder %s207, %s209
      %p216 = scmp.eq.s32.totalorder %s26, 1
      %p217 = por %p215, %p216
      %p218 = scmp.ne.s32.totalorder %s209, %s210
      %p219 = scmp.eq.s32.totalorder %s26, 0
      %p220 = por %p218, %p219
      %p221 = scmp.ne.s32.totalorder %s209, %s210
      %p222 = scmp.eq.s32.totalorder %s27, 1
      %p223 = por %p221, %p222
      %p225 = scmp.ne.s32.totalorder %s210, %s224
      %p226 = scmp.eq.s32.totalorder %s27, 0
      %p227 = por %p225, %p226
      %s229 = sadd.s32 %s228, 1
      %p232 = scmp.eq.s32.totalorder %s21, 1
      %p233 = scmp.ne.s32.totalorder %s228, %s230
      %p234 = scmp.eq.s32.totalorder %s21, 0
      %p235 = por %p233, %p234
      %p236 = scmp.ne.s32.totalorder %s228, %s230
      %p237 = scmp.eq.s32.totalorder %s26, 1
      %p238 = por %p236, %p237
      %p239 = scmp.ne.s32.totalorder %s230, %s231
      %p240 = scmp.eq.s32.totalorder %s26, 0
      %p241 = por %p239, %p240
      %p242 = scmp.ne.s32.totalorder %s230, %s231
      %p243 = scmp.eq.s32.totalorder %s27, 1
      %p244 = por %p242, %p243
      %p246 = scmp.ne.s32.totalorder %s231, %s245
      %p247 = scmp.eq.s32.totalorder %s27, 0
      %p248 = por %p246, %p247
      %s249 = ssub.s32 %s21, %s28
      %p250 = scmp.eq.s32.totalorder %s249, 0
      %s252 = sadd.s32 %s251, 1
      %s253 = scalar_select %p250, %s251, %s252
      %p256 = pneg %p250
      %p257 = scmp.eq.s32.totalorder %s21, 1
      %p258 = por %p256, %p257
      %p259 = scmp.ne.s32.totalorder %s251, %s254
      %p260 = scmp.eq.s32.totalorder %s21, 0
      %p261 = por %p259, %p260
      %p262 = scmp.ne.s32.totalorder %s251, %s254
      %p263 = scmp.eq.s32.totalorder %s26, 1
      %p264 = por %p262, %p263
      %p265 = scmp.ne.s32.totalorder %s254, %s255
      %p266 = scmp.eq.s32.totalorder %s26, 0
      %p267 = por %p265, %p266
      %p268 = scmp.ne.s32.totalorder %s254, %s255
      %p269 = scmp.eq.s32.totalorder %s27, 1
      %p270 = por %p268, %p269
      %p272 = scmp.ne.s32.totalorder %s255, %s271
      %p273 = scmp.eq.s32.totalorder %s27, 0
      %p274 = por %p272, %p273
      %s275 = ssub.s32 %s21, %s28
      %p276 = scmp.eq.s32.totalorder %s275, 0
      %s278 = sadd.s32 %s277, 1
      %s279 = scalar_select %p276, %s277, %s278
      %p282 = pneg %p276
      %p283 = scmp.eq.s32.totalorder %s21, 1
      %p284 = por %p282, %p283
      %p285 = scmp.ne.s32.totalorder %s277, %s280
      %p286 = scmp.eq.s32.totalorder %s21, 0
      %p287 = por %p285, %p286
      %p288 = scmp.ne.s32.totalorder %s277, %s280
      %p289 = scmp.eq.s32.totalorder %s26, 1
      %p290 = por %p288, %p289
      %p291 = scmp.ne.s32.totalorder %s280, %s281
      %p292 = scmp.eq.s32.totalorder %s26, 0
      %p293 = por %p291, %p292
      %p294 = scmp.ne.s32.totalorder %s280, %s281
      %p295 = scmp.eq.s32.totalorder %s27, 1
      %p296 = por %p294, %p295
      %p298 = scmp.ne.s32.totalorder %s281, %s297
      %p299 = scmp.eq.s32.totalorder %s27, 0
      %p300 = por %p298, %p299
      %p301 = scmp.le.s32.totalorder 1, %s21
      %p302 = scmp.lt.s32.totalorder %s21, 3
      %p303 = pnand %p301, %p302
      %p304 = pneg %p303
      // Predicated region
      $region9: #{decoder_forward.11} parent=5 // pred_check
        _
      $region10: #{decoder_forward.11} parent=5 // pred_check_branch
        %306 = sbr.rel (%p303) target = $region12
      $region11: #{decoder_forward.11} parent=5 // pred_region
        %s307 = ssub.s32 %s21, 1
        // Predicated region
        $region13: #{decoder_forward.11} parent=11 // pred_check
          %p308 = pneg %p94
        $region14: #{decoder_forward.11} parent=11 // pred_check_branch
          %310 = sbr.rel (%p308) target = $region16
        $region15: #{decoder_forward.11} parent=11 // pred_region
          _
        $region16: #{decoder_forward.11} parent=11 // pred_fallthru
          _
        // Predicated region
        $region17: #{decoder_forward.11} parent=11 // pred_check
          %p311 = pneg %p115
        $region18: #{decoder_forward.11} parent=11 // pred_check_branch
          %313 = sbr.rel (%p311) target = $region20
        $region19: #{decoder_forward.11} parent=11 // pred_region
          _
        $region20: #{decoder_forward.11} parent=11 // pred_fallthru
          _
        // Predicated region
        $region21: #{decoder_forward.11} parent=11 // pred_check
          %p314 = pneg %p136
        $region22: #{decoder_forward.11} parent=11 // pred_check_branch
          %316 = sbr.rel (%p314) target = $region24
        $region23: #{decoder_forward.11} parent=11 // pred_region
          _
        $region24: #{decoder_forward.11} parent=11 // pred_fallthru
          _
        // Predicated region
        $region25: #{decoder_forward.11} parent=11 // pred_check
          %p317 = pneg %p157
        $region26: #{decoder_forward.11} parent=11 // pred_check_branch
          %319 = sbr.rel (%p317) target = $region28
        $region27: #{decoder_forward.11} parent=11 // pred_region
          _
        $region28: #{decoder_forward.11} parent=11 // pred_fallthru
          _
        // Predicated region
        $region29: #{decoder_forward.11} parent=11 // pred_check
          %p320 = pneg %p178
        $region30: #{decoder_forward.11} parent=11 // pred_check_branch
          %322 = sbr.rel (%p320) target = $region32
        $region31: #{decoder_forward.11} parent=11 // pred_region
          _
        $region32: #{decoder_forward.11} parent=11 // pred_fallthru
          _
        // Predicated region
        $region33: #{decoder_forward.11} parent=11 // pred_check
          %p323 = pneg %p199
        $region34: #{decoder_forward.11} parent=11 // pred_check_branch
          %325 = sbr.rel (%p323) target = $region36
        $region35: #{decoder_forward.11} parent=11 // pred_region
          _
        $region36: #{decoder_forward.11} parent=11 // pred_fallthru
          _
        // Predicated region
        $region37: #{decoder_forward.11} parent=11 // pred_check
          %p326 = pneg %p220
        $region38: #{decoder_forward.11} parent=11 // pred_check_branch
          %328 = sbr.rel (%p326) target = $region40
        $region39: #{decoder_forward.11} parent=11 // pred_region
          _
        $region40: #{decoder_forward.11} parent=11 // pred_fallthru
          _
        // Predicated region
        $region41: #{decoder_forward.11} parent=11 // pred_check
          %p329 = pneg %p241
        $region42: #{decoder_forward.11} parent=11 // pred_check_branch
          %331 = sbr.rel (%p329) target = $region44
        $region43: #{decoder_forward.11} parent=11 // pred_region
          _
        $region44: #{decoder_forward.11} parent=11 // pred_fallthru
          _
      $region12: #{decoder_forward.11} parent=5 // pred_fallthru
        _
      %p332 = scmp.lt.s32.totalorder %s21, 2
      // Predicated region
      $region45: #{decoder_forward.11} parent=5 // pred_check
        %p333 = pneg %p332
      $region46: #{decoder_forward.11} parent=5 // pred_check_branch
        %335 = sbr.rel (%p333) target = $region48
      $region47: #{decoder_forward.11} parent=5 // pred_region
        // Predicated region
        $region49: #{decoder_forward.11} parent=47 // pred_check
          %p336 = pneg %p41
        $region50: #{decoder_forward.11} parent=47 // pred_check_branch
          %338 = sbr.rel (%p336) target = $region52
        $region51: #{decoder_forward.11} parent=47 // pred_region
          %p339 = scmp.lt.s32.totalorder %s21, 1
          %s340 = scalar_select %p339, %s21, 1
          %s341 = smul.addr %s340, 8
          %s342 = scalar_lea.vmem %s0, %s341
        $region52: #{decoder_forward.11} parent=47 // pred_fallthru
          _
        // Predicated region
        $region53: #{decoder_forward.11} parent=47 // pred_check
          %p343 = pneg %p67
        $region54: #{decoder_forward.11} parent=47 // pred_check_branch
          %345 = sbr.rel (%p343) target = $region56
        $region55: #{decoder_forward.11} parent=47 // pred_region
          %p346 = scmp.lt.s32.totalorder %s21, 1
          %s347 = scalar_select %p346, %s21, 1
          %s348 = smul.addr %s347, 2
          %s349 = smul.addr %s348, 8
          %s350 = scalar_lea.vmem %s1, %s349
        $region56: #{decoder_forward.11} parent=47 // pred_fallthru
          _
      $region48: #{decoder_forward.11} parent=5 // pred_fallthru
        _
      %p351 = scmp.le.s32.totalorder 1, %s21
      %p352 = scmp.lt.s32.totalorder %s21, 3
      %p353 = pnand %p351, %p352
      %p354 = pneg %p353
      // Predicated region
      $region57: #{decoder_forward.11} parent=5 // pred_check
        _
      $region58: #{decoder_forward.11} parent=5 // pred_check_branch
        %356 = sbr.rel (%p353) target = $region60
      $region59: #{decoder_forward.11} parent=5 // pred_region
        %s357 = ssub.s32 %s21, 1
        %p358 = scmp.lt.s32.totalorder %s26, 1
        %s359 = scalar_select %p358, %s26, 1
        %s360 = smul.addr %s359, 8
        %s361 = scalar_lea.vmem %s0, %s360
        %p362 = pneg %p47
        %p363 = pneg %p44
        %p364 = scmp.lt.s32.totalorder %s26, 1
        %s365 = scalar_select %p364, %s26, 1
        %s366 = smul.addr %s365, 2
        %s367 = smul.addr %s366, 8
        %s368 = scalar_lea.vmem %s1, %s367
        %p369 = pneg %p73
        %p370 = pneg %p70
        %p371 = pneg %p94
        %p372 = pneg %p91
        %p373 = pneg %p115
        %p374 = pneg %p112
        %p375 = pneg %p136
        %p376 = pneg %p133
        %p377 = pneg %p157
        %p378 = pneg %p154
        %p379 = pneg %p178
        %p380 = pneg %p175
        %p381 = pneg %p199
        %p382 = pneg %p196
        %p383 = pneg %p220
        %p384 = pneg %p217
        %p385 = pneg %p241
        %p386 = pneg %p238
        %p387 = pneg %p267
        %p388 = pneg %p264
        %p389 = scmp.lt.s32.totalorder %s26, 1
        %s390 = scalar_select %p389, %s26, 1
        %s391 = smul.addr %s390, 8
        %s392 = scalar_lea.vmem %s10, %s391
        %p393 = pneg %p293
        %p394 = pneg %p290
        %s395 = sand.u32 %s280, 1
        %s396 = scalar_lea.sflag [#allocation4], %s395
        %s397 = sand.u32 %s280, 1
        %s398 = smul.addr %s397, 32
        %s399 = scalar_lea.vmem [#allocation3], %s398
        %p400 = scmp.lt.s32.totalorder %s26, 1
        %s401 = scalar_select %p400, %s26, 1
        %s402 = smul.addr %s401, 8
        %s403 = scalar_lea.vmem %s0, %s402
        %p404 = scmp.lt.s32.totalorder %s26, 1
        %s405 = scalar_select %p404, %s26, 1
        %s406 = smul.addr %s405, 2
        %s407 = smul.addr %s406, 8
        %s408 = scalar_lea.vmem %s1, %s407
        %p409 = scmp.lt.s32.totalorder %s26, 1
        %s410 = scalar_select %p409, %s26, 1
        %s411 = smul.addr %s410, 8
        %s412 = scalar_lea.vmem %s10, %s411
        %v414 = vld [vmem:[%s403] sm:$0xff]
        %v415 = vpack.c.bf16 %v414, %v414
        %v416 = vld [vmem:[%s2] sm:$0xf]
        %v417 = vld [vmem:[%s2 + $0x4] sm:$0xf]
        %v418 = vld [vmem:[%s2 + $0x8] sm:$0xf]
        %v419 = vld [vmem:[%s2 + $0xc] sm:$0xf]
        %v420 = vld [vmem:[%s3] sm:$0x1]
        %v422 = vlaneseq
        %v423 = vshrl.u32 %v422, 7
        %v424 = vsub.s32 0, %v423
        %v425 = vrot.slane %v420, %v424
        %v431 = vunpack.c.l.b16 %v416
        %v432 = vunpack.c.l.b16 %v417
        %v433 = vunpack.c.l.b16 %v418
        %v434 = vunpack.c.l.b16 %v419
        %v435 = vpack.c.b16 %v432, %v431
        %v436 = vpack.c.b16 %v434, %v433
        %vm439 = vcmask 261120
        %v441 = vsel %vm439, %v415, 0
        %443 = vmatprep.subr.bf16.mxu0 0
        %444 = vmatpush1.bf16.msra.mxu0 %v435
        %445 = vmatprep.subr.bf16.mxu0 0
        %446 = vmatpush1.bf16.msra.mxu0 %v436
        %447 = vmatprep.subr.bf16.mxu0 0
        %448 = vmatpush1.bf16.msra.mxu0 0
        %449 = vmatprep.subr.bf16.mxu0 0
        %450 = vmatpush1.bf16.msra.mxu0 0
        %451 = vmatprep.subr.bf16.mxu0 0
        %452 = vmatpush1.bf16.msra.mxu0 0
        %453 = vmatprep.subr.bf16.mxu0 0
        %454 = vmatpush1.bf16.msra.mxu0 0
        %455 = vmatprep.subr.bf16.mxu0 0
        %456 = vmatpush1.bf16.msra.mxu0 0
        %457 = vmatprep.subr.bf16.mxu0 0
        %458 = vmatpush1.bf16.msra.mxu0 0
        %459 = vmatprep.subr.bf16.mxu0 0
        %460 = vmatpush1.bf16.msra.mxu0 0
        %461 = vmatprep.subr.bf16.mxu0 0
        %462 = vmatpush1.bf16.msra.mxu0 0
        %463 = vmatprep.subr.bf16.mxu0 0
        %464 = vmatpush1.bf16.msra.mxu0 0
        %465 = vmatprep.subr.bf16.mxu0 0
        %466 = vmatpush1.bf16.msra.mxu0 0
        %467 = vmatprep.subr.bf16.mxu0 0
        %468 = vmatpush1.bf16.msra.mxu0 0
        %469 = vmatprep.subr.bf16.mxu0 0
        %470 = vmatpush1.bf16.msra.mxu0 0
        %471 = vmatprep.subr.bf16.mxu0 0
        %472 = vmatpush1.bf16.msra.mxu0 0
        %473 = vmatprep.subr.bf16.mxu0 0
        %474 = vmatpush1.bf16.msra.mxu0 0
        %475 = vmatprep.mubr.bf16.mxu0 0
        %476 = vmatmul.mubr.bf16.gmra.mrb[0].mxu0 %v441
        %v477 = vpop.f32.mrb[0].mxu0
        %v478 = vadd.f32 %v425, %v477
        %v479 = vpop.f32.mrb[0].mxu0
        %v480 = vpop.f32.mrb[0].mxu0
        %v481 = vpop.f32.mrb[0].mxu0
        %482 = vdwg.mxu0
        %v483 = vld [vmem:[%s408] sm:$0xff]
        %v484 = vld [vmem:[%s408 + $0x8] sm:$0xff]
        %v485 = vpack.c.bf16 %v484, %v483
        %v486 = vld [vmem:[%s4] sm:$0xf]
        %v487 = vld [vmem:[%s4 + $0x4] sm:$0xf]
        %v488 = vld [vmem:[%s4 + $0x8] sm:$0xf]
        %v489 = vld [vmem:[%s4 + $0xc] sm:$0xf]
        %v490 = vld [vmem:[%s5] sm:$0x1]
        %v492 = vlaneseq
        %v493 = vshrl.u32 %v492, 7
        %v494 = vsub.s32 0, %v493
        %v495 = vrot.slane %v490, %v494
        %v501 = vunpack.c.l.b16 %v486
        %v502 = vunpack.c.l.b16 %v487
        %v503 = vunpack.c.l.b16 %v488
        %v504 = vunpack.c.l.b16 %v489
        %v505 = vpack.c.b16 %v502, %v501
        %v506 = vpack.c.b16 %v504, %v503
        %v510 = vsel %vm439, %v485, 0
        %512 = vmatprep.subr.bf16.mxu0 0
        %513 = vmatpush1.bf16.msra.mxu0 %v505
        %514 = vmatprep.subr.bf16.mxu0 0
        %515 = vmatpush1.bf16.msra.mxu0 %v506
        %516 = vmatprep.subr.bf16.mxu0 0
        %517 = vmatpush1.bf16.msra.mxu0 0
        %518 = vmatprep.subr.bf16.mxu0 0
        %519 = vmatpush1.bf16.msra.mxu0 0
        %520 = vmatprep.subr.bf16.mxu0 0
        %521 = vmatpush1.bf16.msra.mxu0 0
        %522 = vmatprep.subr.bf16.mxu0 0
        %523 = vmatpush1.bf16.msra.mxu0 0
        %524 = vmatprep.subr.bf16.mxu0 0
        %525 = vmatpush1.bf16.msra.mxu0 0
        %526 = vmatprep.subr.bf16.mxu0 0
        %527 = vmatpush1.bf16.msra.mxu0 0
        %528 = vmatprep.subr.bf16.mxu0 0
        %529 = vmatpush1.bf16.msra.mxu0 0
        %530 = vmatprep.subr.bf16.mxu0 0
        %531 = vmatpush1.bf16.msra.mxu0 0
        %532 = vmatprep.subr.bf16.mxu0 0
        %533 = vmatpush1.bf16.msra.mxu0 0
        %534 = vmatprep.subr.bf16.mxu0 0
        %535 = vmatpush1.bf16.msra.mxu0 0
        %536 = vmatprep.subr.bf16.mxu0 0
        %537 = vmatpush1.bf16.msra.mxu0 0
        %538 = vmatprep.subr.bf16.mxu0 0
        %539 = vmatpush1.bf16.msra.mxu0 0
        %540 = vmatprep.subr.bf16.mxu0 0
        %541 = vmatpush1.bf16.msra.mxu0 0
        %542 = vmatprep.subr.bf16.mxu0 0
        %543 = vmatpush1.bf16.msra.mxu0 0
        %544 = vmatprep.mubr.bf16.mxu0 0
        %545 = vmatmul.mubr.bf16.gmra.mrb[0].mxu0 %v510
        %v546 = vpop.f32.mrb[0].mxu0
        %v547 = vadd.f32 %v495, %v546
        %v548 = vpop.f32.mrb[0].mxu0
        %v549 = vpop.f32.mrb[0].mxu0
        %v550 = vadd.f32 %v495, %v549
        %v551 = vpop.f32.mrb[0].mxu0
        %552 = vdwg.mxu0
        %v553 = vpack.c.bf16 %v478, %v478
        %v554 = vpack.c.bf16 %v550, %v547
        %vm555 = vcmask 64512
        %v557 = vsel %vm555, %v553, 0
        %v560 = vsel %vm555, %v554, 0
        %562 = vmatprep.subr.bf16.mxu0 0
        %563 = vmatpush1.bf16.xpose.msra.mxu0 %v560
        %564 = vmatprep.subr.bf16.mxu0 0
        %565 = vmatpush1.bf16.xpose.msra.mxu0 0
        %566 = vmatprep.subr.bf16.mxu0 0
        %567 = vmatpush1.bf16.xpose.msra.mxu0 0
        %568 = vmatprep.subr.bf16.mxu0 0
        %569 = vmatpush1.bf16.xpose.msra.mxu0 0
        %570 = vmatprep.subr.bf16.mxu0 0
        %571 = vmatpush1.bf16.xpose.msra.mxu0 0
        %572 = vmatprep.subr.bf16.mxu0 0
        %573 = vmatpush1.bf16.xpose.msra.mxu0 0
        %574 = vmatprep.subr.bf16.mxu0 0
        %575 = vmatpush1.bf16.xpose.msra.mxu0 0
        %576 = vmatprep.subr.bf16.mxu0 0
        %577 = vmatpush1.bf16.xpose.msra.mxu0 0
        %578 = vmatprep.subr.bf16.mxu0 0
        %579 = vmatpush1.bf16.xpose.msra.mxu0 0
        %580 = vmatprep.subr.bf16.mxu0 0
        %581 = vmatpush1.bf16.xpose.msra.mxu0 0
        %582 = vmatprep.subr.bf16.mxu0 0
        %583 = vmatpush1.bf16.xpose.msra.mxu0 0
        %584 = vmatprep.subr.bf16.mxu0 0
        %585 = vmatpush1.bf16.xpose.msra.mxu0 0
        %586 = vmatprep.subr.bf16.mxu0 0
        %587 = vmatpush1.bf16.xpose.msra.mxu0 0
        %588 = vmatprep.subr.bf16.mxu0 0
        %589 = vmatpush1.bf16.xpose.msra.mxu0 0
        %590 = vmatprep.subr.bf16.mxu0 0
        %591 = vmatpush1.bf16.xpose.msra.mxu0 0
        %592 = vmatprep.subr.bf16.mxu0 0
        %593 = vmatpush1.bf16.xpose.msra.mxu0 0
        %594 = vmatprep.mubr.bf16.mxu0 0
        %595 = vmatmul.mubr.bf16.gmra.mrb[0].mxu0 %v557
        %v596 = vpop.f32.mrb[0].mxu0
        %v597 = vadd.f32 0.0, %v596
        %v598 = vpop.f32.mrb[0].mxu0
        %v599 = vpop.f32.mrb[0].mxu0
        %v600 = vpop.f32.mrb[0].mxu0
        %601 = vdwg.mxu0
        %v602 = vmul.f32 %v597, 0.35355338
        %vm603 = vcmask 130048
        %v604 = vsel %vm603, %v602, -inf
        %605 = vmax.xlane.f32.xlu0 %v604
        %v606 = vpop.xlane.xlu0 %605
        %v607 = vsub.f32 %v602, %v606
        %v608 = vmul.f32 %v607, 1.442695
        %v609 = vpow.pop %v608
        %v610 = vsel %vm603, %v609, 0.0
        %611 = vadd.xlane.f32.xlu0 %v610
        %v612 = vpop.xlane.xlu0 %611
        %v613 = vrcp.pop %v612
        %v614 = vmul.f32 %v609, %v613
        %615 = vst.msk [vmem:[%s399] sm:$0xff] %vm603, %v614
        %v616 = vpack.c.bf16 %v614, %v614
        %618 = vrot.lane.b32.xlu0 %v554, 96
        %v619 = vpop.permute.xlu0 %618
        %v622 = vsel %vm603, %v616, 0
        %624 = vmatprep.subr.bf16.mxu0 0
        %625 = vmatpush1.bf16.msra.mxu0 %v619
        %626 = vmatprep.subr.bf16.mxu0 0
        %627 = vmatpush1.bf16.msra.mxu0 0
        %628 = vmatprep.subr.bf16.mxu0 0
        %629 = vmatpush1.bf16.msra.mxu0 0
        %630 = vmatprep.subr.bf16.mxu0 0
        %631 = vmatpush1.bf16.msra.mxu0 0
        %632 = vmatprep.subr.bf16.mxu0 0
        %633 = vmatpush1.bf16.msra.mxu0 0
        %634 = vmatprep.subr.bf16.mxu0 0
        %635 = vmatpush1.bf16.msra.mxu0 0
        %636 = vmatprep.subr.bf16.mxu0 0
        %637 = vmatpush1.bf16.msra.mxu0 0
        %638 = vmatprep.subr.bf16.mxu0 0
        %639 = vmatpush1.bf16.msra.mxu0 0
        %640 = vmatprep.subr.bf16.mxu0 0
        %641 = vmatpush1.bf16.msra.mxu0 0
        %642 = vmatprep.subr.bf16.mxu0 0
        %643 = vmatpush1.bf16.msra.mxu0 0
        %644 = vmatprep.subr.bf16.mxu0 0
        %645 = vmatpush1.bf16.msra.mxu0 0
        %646 = vmatprep.subr.bf16.mxu0 0
        %647 = vmatpush1.bf16.msra.mxu0 0
        %648 = vmatprep.subr.bf16.mxu0 0
        %649 = vmatpush1.bf16.msra.mxu0 0
        %650 = vmatprep.subr.bf16.mxu0 0
        %651 = vmatpush1.bf16.msra.mxu0 0
        %652 = vmatprep.subr.bf16.mxu0 0
        %653 = vmatpush1.bf16.msra.mxu0 0
        %654 = vmatprep.subr.bf16.mxu0 0
        %655 = vmatpush1.bf16.msra.mxu0 0
        %656 = vmatprep.mubr.bf16.mxu0 0
        %657 = vmatmul.mubr.bf16.gmra.mrb[0].mxu0 %v622
        %v658 = vpop.f32.mrb[0].mxu0
        %v659 = vadd.f32 0.0, %v658
        %v660 = vpop.f32.mrb[0].mxu0
        %v661 = vpop.f32.mrb[0].mxu0
        %v662 = vpop.f32.mrb[0].mxu0
        %663 = vdwg.mxu0
        %664 = vst.msk [vmem:[#allocation2] sm:$0xff] %vm555, %v659
        %666 = vrot.lane.b32.xlu0 %v553, 120
        %v667 = vpop.permute.xlu0 %666
        %668 = vrot.lane.b32.xlu0 %v554, 120
        %v669 = vpop.permute.xlu0 %668
        %v671 = vsel %vm555, %v667, 0
        %v674 = vsel %vm555, %v669, 0
        %676 = vmatprep.subr.bf16.mxu0 0
        %677 = vmatpush1.bf16.xpose.msra.mxu0 %v674
        %678 = vmatprep.subr.bf16.mxu0 0
        %679 = vmatpush1.bf16.xpose.msra.mxu0 0
        %680 = vmatprep.subr.bf16.mxu0 0
        %681 = vmatpush1.bf16.xpose.msra.mxu0 0
        %682 = vmatprep.subr.bf16.mxu0 0
        %683 = vmatpush1.bf16.xpose.msra.mxu0 0
        %684 = vmatprep.subr.bf16.mxu0 0
        %685 = vmatpush1.bf16.xpose.msra.mxu0 0
        %686 = vmatprep.subr.bf16.mxu0 0
        %687 = vmatpush1.bf16.xpose.msra.mxu0 0
        %688 = vmatprep.subr.bf16.mxu0 0
        %689 = vmatpush1.bf16.xpose.msra.mxu0 0
        %690 = vmatprep.subr.bf16.mxu0 0
        %691 = vmatpush1.bf16.xpose.msra.mxu0 0
        %692 = vmatprep.subr.bf16.mxu0 0
        %693 = vmatpush1.bf16.xpose.msra.mxu0 0
        %694 = vmatprep.subr.bf16.mxu0 0
        %695 = vmatpush1.bf16.xpose.msra.mxu0 0
        %696 = vmatprep.subr.bf16.mxu0 0
        %697 = vmatpush1.bf16.xpose.msra.mxu0 0
        %698 = vmatprep.subr.bf16.mxu0 0
        %699 = vmatpush1.bf16.xpose.msra.mxu0 0
        %700 = vmatprep.subr.bf16.mxu0 0
        %701 = vmatpush1.bf16.xpose.msra.mxu0 0
        %702 = vmatprep.subr.bf16.mxu0 0
        %703 = vmatpush1.bf16.xpose.msra.mxu0 0
        %704 = vmatprep.subr.bf16.mxu0 0
        %705 = vmatpush1.bf16.xpose.msra.mxu0 0
        %706 = vmatprep.subr.bf16.mxu0 0
        %707 = vmatpush1.bf16.xpose.msra.mxu0 0
        %708 = vmatprep.mubr.bf16.mxu0 0
        %709 = vmatmul.mubr.bf16.gmra.mrb[0].mxu0 %v671
        %v710 = vpop.f32.mrb[0].mxu0
        %v711 = vadd.f32 0.0, %v710
        %v712 = vpop.f32.mrb[0].mxu0
        %v713 = vpop.f32.mrb[0].mxu0
        %v714 = vpop.f32.mrb[0].mxu0
        %715 = vdwg.mxu0
        %v716 = vmul.f32 %v711, 0.35355338
        %v717 = vsel %vm603, %v716, -inf
        %718 = vmax.xlane.f32.xlu0 %v717
        %v719 = vpop.xlane.xlu0 %718
        %v720 = vsub.f32 %v716, %v719
        %v721 = vmul.f32 %v720, 1.442695
        %v722 = vpow.pop %v721
        %v723 = vsel %vm603, %v722, 0.0
        %724 = vadd.xlane.f32.xlu0 %v723
        %v725 = vpop.xlane.xlu0 %724
        %v726 = vrcp.pop %v725
        %v727 = vmul.f32 %v722, %v726
        %s728 = scalar_lea.vmem %s399, 8 [#allocation3]
        %729 = vst.msk [vmem:[%s728] sm:$0xff] %vm603, %v727
        %v730 = vpack.c.bf16 %v727, %v727
        %731 = vrot.lane.b32.xlu0 %v554, 88
        %v732 = vpop.permute.xlu0 %731
        %v735 = vsel %vm603, %v730, 0
        %737 = vmatprep.subr.bf16.mxu0 0
        %738 = vmatpush1.bf16.msra.mxu0 %v732
        %739 = vmatprep.subr.bf16.mxu0 0
        %740 = vmatpush1.bf16.msra.mxu0 0
        %741 = vmatprep.subr.bf16.mxu0 0
        %742 = vmatpush1.bf16.msra.mxu0 0
        %743 = vmatprep.subr.bf16.mxu0 0
        %744 = vmatpush1.bf16.msra.mxu0 0
        %745 = vmatprep.subr.bf16.mxu0 0
        %746 = vmatpush1.bf16.msra.mxu0 0
        %747 = vmatprep.subr.bf16.mxu0 0
        %748 = vmatpush1.bf16.msra.mxu0 0
        %749 = vmatprep.subr.bf16.mxu0 0
        %750 = vmatpush1.bf16.msra.mxu0 0
        %751 = vmatprep.subr.bf16.mxu0 0
        %752 = vmatpush1.bf16.msra.mxu0 0
        %753 = vmatprep.subr.bf16.mxu0 0
        %754 = vmatpush1.bf16.msra.mxu0 0
        %755 = vmatprep.subr.bf16.mxu0 0
        %756 = vmatpush1.bf16.msra.mxu0 0
        %757 = vmatprep.subr.bf16.mxu0 0
        %758 = vmatpush1.bf16.msra.mxu0 0
        %759 = vmatprep.subr.bf16.mxu0 0
        %760 = vmatpush1.bf16.msra.mxu0 0
        %761 = vmatprep.subr.bf16.mxu0 0
        %762 = vmatpush1.bf16.msra.mxu0 0
        %763 = vmatprep.subr.bf16.mxu0 0
        %764 = vmatpush1.bf16.msra.mxu0 0
        %765 = vmatprep.subr.bf16.mxu0 0
        %766 = vmatpush1.bf16.msra.mxu0 0
        %767 = vmatprep.subr.bf16.mxu0 0
        %768 = vmatpush1.bf16.msra.mxu0 0
        %769 = vmatprep.mubr.bf16.mxu0 0
        %770 = vmatmul.mubr.bf16.gmra.mrb[0].mxu0 %v735
        %v771 = vpop.f32.mrb[0].mxu0
        %v772 = vadd.f32 0.0, %v771
        %v773 = vpop.f32.mrb[0].mxu0
        %v774 = vpop.f32.mrb[0].mxu0
        %v775 = vpop.f32.mrb[0].mxu0
        %776 = vdwg.mxu0
        %778 = vrot.lane.b32.xlu0 %v772, 8
        %v779 = vpop.permute.xlu0 %778
        %vm781 = vcmask 130112
        %782 = vst.msk [vmem:[#allocation2] sm:$0xff] %vm781, %v779
        %783 = vrot.lane.b32.xlu0 %v553, 112
        %v784 = vpop.permute.xlu0 %783
        %785 = vrot.lane.b32.xlu0 %v554, 112
        %v786 = vpop.permute.xlu0 %785
        %v788 = vsel %vm555, %v784, 0
        %v791 = vsel %vm555, %v786, 0
        %793 = vmatprep.subr.bf16.mxu0 0
        %794 = vmatpush1.bf16.xpose.msra.mxu0 %v791
        %795 = vmatprep.subr.bf16.mxu0 0
        %796 = vmatpush1.bf16.xpose.msra.mxu0 0
        %797 = vmatprep.subr.bf16.mxu0 0
        %798 = vmatpush1.bf16.xpose.msra.mxu0 0
        %799 = vmatprep.subr.bf16.mxu0 0
        %800 = vmatpush1.bf16.xpose.msra.mxu0 0
        %801 = vmatprep.subr.bf16.mxu0 0
        %802 = vmatpush1.bf16.xpose.msra.mxu0 0
        %803 = vmatprep.subr.bf16.mxu0 0
        %804 = vmatpush1.bf16.xpose.msra.mxu0 0
        %805 = vmatprep.subr.bf16.mxu0 0
        %806 = vmatpush1.bf16.xpose.msra.mxu0 0
        %807 = vmatprep.subr.bf16.mxu0 0
        %808 = vmatpush1.bf16.xpose.msra.mxu0 0
        %809 = vmatprep.subr.bf16.mxu0 0
        %810 = vmatpush1.bf16.xpose.msra.mxu0 0
        %811 = vmatprep.subr.bf16.mxu0 0
        %812 = vmatpush1.bf16.xpose.msra.mxu0 0
        %813 = vmatprep.subr.bf16.mxu0 0
        %814 = vmatpush1.bf16.xpose.msra.mxu0 0
        %815 = vmatprep.subr.bf16.mxu0 0
        %816 = vmatpush1.bf16.xpose.msra.mxu0 0
        %817 = vmatprep.subr.bf16.mxu0 0
        %818 = vmatpush1.bf16.xpose.msra.mxu0 0
        %819 = vmatprep.subr.bf16.mxu0 0
        %820 = vmatpush1.bf16.xpose.msra.mxu0 0
        %821 = vmatprep.subr.bf16.mxu0 0
        %822 = vmatpush1.bf16.xpose.msra.mxu0 0
        %823 = vmatprep.subr.bf16.mxu0 0
        %824 = vmatpush1.bf16.xpose.msra.mxu0 0
        %825 = vmatprep.mubr.bf16.mxu0 0
        %826 = vmatmul.mubr.bf16.gmra.mrb[0].mxu0 %v788
        %v827 = vpop.f32.mrb[0].mxu0
        %v828 = vadd.f32 0.0, %v827
        %v829 = vpop.f32.mrb[0].mxu0
        %v830 = vpop.f32.mrb[0].mxu0
        %v831 = vpop.f32.mrb[0].mxu0
        %832 = vdwg.mxu0
        %v833 = vmul.f32 %v828, 0.35355338
        %v834 = vsel %vm603, %v833, -inf
        %835 = vmax.xlane.f32.xlu0 %v834
        %v836 = vpop.xlane.xlu0 %835
        %v837 = vsub.f32 %v833, %v836
        %v838 = vmul.f32 %v837, 1.442695
        %v839 = vpow.pop %v838
        %v840 = vsel %vm603, %v839, 0.0
        %841 = vadd.xlane.f32.xlu0 %v840
        %v842 = vpop.xlane.xlu0 %841
        %v843 = vrcp.pop %v842
        %v844 = vmul.f32 %v839, %v843
        %s845 = scalar_lea.vmem %s399, 16 [#allocation3]
        %846 = vst.msk [vmem:[%s845] sm:$0xff] %vm603, %v844
        %v847 = vpack.c.bf16 %v844, %v844
        %848 = vrot.lane.b32.xlu0 %v554, 80
        %v849 = vpop.permute.xlu0 %848
        %v852 = vsel %vm603, %v847, 0
        %854 = vmatprep.subr.bf16.mxu0 0
        %855 = vmatpush1.bf16.msra.mxu0 %v849
        %856 = vmatprep.subr.bf16.mxu0 0
        %857 = vmatpush1.bf16.msra.mxu0 0
        %858 = vmatprep.subr.bf16.mxu0 0
        %859 = vmatpush1.bf16.msra.mxu0 0
        %860 = vmatprep.subr.bf16.mxu0 0
        %861 = vmatpush1.bf16.msra.mxu0 0
        %862 = vmatprep.subr.bf16.mxu0 0
        %863 = vmatpush1.bf16.msra.mxu0 0
        %864 = vmatprep.subr.bf16.mxu0 0
        %865 = vmatpush1.bf16.msra.mxu0 0
        %866 = vmatprep.subr.bf16.mxu0 0
        %867 = vmatpush1.bf16.msra.mxu0 0
        %868 = vmatprep.subr.bf16.mxu0 0
        %869 = vmatpush1.bf16.msra.mxu0 0
        %870 = vmatprep.subr.bf16.mxu0 0
        %871 = vmatpush1.bf16.msra.mxu0 0
        %872 = vmatprep.subr.bf16.mxu0 0
        %873 = vmatpush1.bf16.msra.mxu0 0
        %874 = vmatprep.subr.bf16.mxu0 0
        %875 = vmatpush1.bf16.msra.mxu0 0
        %876 = vmatprep.subr.bf16.mxu0 0
        %877 = vmatpush1.bf16.msra.mxu0 0
        %878 = vmatprep.subr.bf16.mxu0 0
        %879 = vmatpush1.bf16.msra.mxu0 0
        %880 = vmatprep.subr.bf16.mxu0 0
        %881 = vmatpush1.bf16.msra.mxu0 0
        %882 = vmatprep.subr.bf16.mxu0 0
        %883 = vmatpush1.bf16.msra.mxu0 0
        %884 = vmatprep.subr.bf16.mxu0 0
        %885 = vmatpush1.bf16.msra.mxu0 0
        %886 = vmatprep.mubr.bf16.mxu0 0
        %887 = vmatmul.mubr.bf16.gmra.mrb[0].mxu0 %v852
        %v888 = vpop.f32.mrb[0].mxu0
        %v889 = vadd.f32 0.0, %v888
        %v890 = vpop.f32.mrb[0].mxu0
        %v891 = vpop.f32.mrb[0].mxu0
        %v892 = vpop.f32.mrb[0].mxu0
        %893 = vdwg.mxu0
        %895 = vrot.lane.b32.xlu0 %v889, 16
        %v896 = vpop.permute.xlu0 %895
        %vm898 = vcmask 195712
        %899 = vst.msk [vmem:[#allocation2] sm:$0xff] %vm898, %v896
        %900 = vrot.lane.b32.xlu0 %v553, 104
        %v901 = vpop.permute.xlu0 %900
        %902 = vrot.lane.b32.xlu0 %v554, 104
        %v903 = vpop.permute.xlu0 %902
        %v905 = vsel %vm555, %v901, 0
        %v908 = vsel %vm555, %v903, 0
        %910 = vmatprep.subr.bf16.mxu0 0
        %911 = vmatpush1.bf16.xpose.msra.mxu0 %v908
        %912 = vmatprep.subr.bf16.mxu0 0
        %913 = vmatpush1.bf16.xpose.msra.mxu0 0
        %914 = vmatprep.subr.bf16.mxu0 0
        %915 = vmatpush1.bf16.xpose.msra.mxu0 0
        %916 = vmatprep.subr.bf16.mxu0 0
        %917 = vmatpush1.bf16.xpose.msra.mxu0 0
        %918 = vmatprep.subr.bf16.mxu0 0
        %919 = vmatpush1.bf16.xpose.msra.mxu0 0
        %920 = vmatprep.subr.bf16.mxu0 0
        %921 = vmatpush1.bf16.xpose.msra.mxu0 0
        %922 = vmatprep.subr.bf16.mxu0 0
        %923 = vmatpush1.bf16.xpose.msra.mxu0 0
        %924 = vmatprep.subr.bf16.mxu0 0
        %925 = vmatpush1.bf16.xpose.msra.mxu0 0
        %926 = vmatprep.subr.bf16.mxu0 0
        %927 = vmatpush1.bf16.xpose.msra.mxu0 0
        %928 = vmatprep.subr.bf16.mxu0 0
        %929 = vmatpush1.bf16.xpose.msra.mxu0 0
        %930 = vmatprep.subr.bf16.mxu0 0
        %931 = vmatpush1.bf16.xpose.msra.mxu0 0
        %932 = vmatprep.subr.bf16.mxu0 0
        %933 = vmatpush1.bf16.xpose.msra.mxu0 0
        %934 = vmatprep.subr.bf16.mxu0 0
        %935 = vmatpush1.bf16.xpose.msra.mxu0 0
        %936 = vmatprep.subr.bf16.mxu0 0
        %937 = vmatpush1.bf16.xpose.msra.mxu0 0
        %938 = vmatprep.subr.bf16.mxu0 0
        %939 = vmatpush1.bf16.xpose.msra.mxu0 0
        %940 = vmatprep.subr.bf16.mxu0 0
        %941 = vmatpush1.bf16.xpose.msra.mxu0 0
        %942 = vmatprep.mubr.bf16.mxu0 0
        %943 = vmatmul.mubr.bf16.gmra.mrb[0].mxu0 %v905
        %v944 = vpop.f32.mrb[0].mxu0
        %v945 = vadd.f32 0.0, %v944
        %v946 = vpop.f32.mrb[0].mxu0
        %v947 = vpop.f32.mrb[0].mxu0
        %v948 = vpop.f32.mrb[0].mxu0
        %949 = vdwg.mxu0
        %v950 = vmul.f32 %v945, 0.35355338
        %v951 = vsel %vm603, %v950, -inf
        %952 = vmax.xlane.f32.xlu0 %v951
        %v953 = vpop.xlane.xlu0 %952
        %v954 = vsub.f32 %v950, %v953
        %v955 = vmul.f32 %v954, 1.442695
        %v956 = vpow.pop %v955
        %v957 = vsel %vm603, %v956, 0.0
        %958 = vadd.xlane.f32.xlu0 %v957
        %v959 = vpop.xlane.xlu0 %958
        %v960 = vrcp.pop %v959
        %v961 = vmul.f32 %v956, %v960
        %s962 = scalar_lea.vmem %s399, 24 [#allocation3]
        %963 = vst.msk [vmem:[%s962] sm:$0xff] %vm603, %v961
        %v964 = vpack.c.bf16 %v961, %v961
        %965 = vrot.lane.b32.xlu0 %v554, 72
        %v966 = vpop.permute.xlu0 %965
        %v969 = vsel %vm603, %v964, 0
        %971 = vmatprep.subr.bf16.mxu0 0
        %972 = vmatpush1.bf16.msra.mxu0 %v966
        %973 = vmatprep.subr.bf16.mxu0 0
        %974 = vmatpush1.bf16.msra.mxu0 0
        %975 = vmatprep.subr.bf16.mxu0 0
        %976 = vmatpush1.bf16.msra.mxu0 0
        %977 = vmatprep.subr.bf16.mxu0 0
        %978 = vmatpush1.bf16.msra.mxu0 0
        %979 = vmatprep.subr.bf16.mxu0 0
        %980 = vmatpush1.bf16.msra.mxu0 0
        %981 = vmatprep.subr.bf16.mxu0 0
        %982 = vmatpush1.bf16.msra.mxu0 0
        %983 = vmatprep.subr.bf16.mxu0 0
        %984 = vmatpush1.bf16.msra.mxu0 0
        %985 = vmatprep.subr.bf16.mxu0 0
        %986 = vmatpush1.bf16.msra.mxu0 0
        %987 = vmatprep.subr.bf16.mxu0 0
        %988 = vmatpush1.bf16.msra.mxu0 0
        %989 = vmatprep.subr.bf16.mxu0 0
        %990 = vmatpush1.bf16.msra.mxu0 0
        %991 = vmatprep.subr.bf16.mxu0 0
        %992 = vmatpush1.bf16.msra.mxu0 0
        %993 = vmatprep.subr.bf16.mxu0 0
        %994 = vmatpush1.bf16.msra.mxu0 0
        %995 = vmatprep.subr.bf16.mxu0 0
        %996 = vmatpush1.bf16.msra.mxu0 0
        %997 = vmatprep.subr.bf16.mxu0 0
        %998 = vmatpush1.bf16.msra.mxu0 0
        %999 = vmatprep.subr.bf16.mxu0 0
        %1000 = vmatpush1.bf16.msra.mxu0 0
        %1001 = vmatprep.subr.bf16.mxu0 0
        %1002 = vmatpush1.bf16.msra.mxu0 0
        %1003 = vmatprep.mubr.bf16.mxu0 0
        %1004 = vmatmul.mubr.bf16.gmra.mrb[0].mxu0 %v969
        %v1005 = vpop.f32.mrb[0].mxu0
        %v1006 = vadd.f32 0.0, %v1005
        %v1007 = vpop.f32.mrb[0].mxu0
        %v1008 = vpop.f32.mrb[0].mxu0
        %v1009 = vpop.f32.mrb[0].mxu0
        %1010 = vdwg.mxu0
        %1012 = vrot.lane.b32.xlu0 %v1006, 24
        %v1013 = vpop.permute.xlu0 %1012
        %vm1015 = vcmask 261312
        %1016 = vst.msk [vmem:[#allocation2] sm:$0xff] %vm1015, %v1013
        %v1017 = vld [vmem:[#allocation2] sm:$0xff]
        %v1018 = vpack.c.bf16 %v1017, %v1017
        %v1019 = vld [vmem:[%s6] sm:$0xf]
        %v1020 = vld [vmem:[%s6 + $0x4] sm:$0xf]
        %v1021 = vld [vmem:[%s6 + $0x8] sm:$0xf]
        %v1022 = vld [vmem:[%s6 + $0xc] sm:$0xf]
        %v1023 = vld [vmem:[%s7] sm:$0x1]
        %v1025 = vlaneseq
        %v1026 = vshrl.u32 %v1025, 7
        %v1027 = vsub.s32 0, %v1026
        %v1028 = vrot.slane %v1023, %v1027
        %v1034 = vunpack.c.l.b16 %v1019
        %v1035 = vunpack.c.l.b16 %v1020
        %v1036 = vunpack.c.l.b16 %v1021
        %v1037 = vunpack.c.l.b16 %v1022
        %v1038 = vpack.c.b16 %v1035, %v1034
        %v1039 = vpack.c.b16 %v1037, %v1036
        %v1043 = vsel %vm439, %v1018, 0
        %1045 = vmatprep.subr.bf16.mxu0 0
        %1046 = vmatpush1.bf16.msra.mxu0 %v1038
        %1047 = vmatprep.subr.bf16.mxu0 0
        %1048 = vmatpush1.bf16.msra.mxu0 %v1039
        %1049 = vmatprep.subr.bf16.mxu0 0
        %1050 = vmatpush1.bf16.msra.mxu0 0
        %1051 = vmatprep.subr.bf16.mxu0 0
        %1052 = vmatpush1.bf16.msra.mxu0 0
        %1053 = vmatprep.subr.bf16.mxu0 0
        %1054 = vmatpush1.bf16.msra.mxu0 0
        %1055 = vmatprep.subr.bf16.mxu0 0
        %1056 = vmatpush1.bf16.msra.mxu0 0
        %1057 = vmatprep.subr.bf16.mxu0 0
        %1058 = vmatpush1.bf16.msra.mxu0 0
        %1059 = vmatprep.subr.bf16.mxu0 0
        %1060 = vmatpush1.bf16.msra.mxu0 0
        %1061 = vmatprep.subr.bf16.mxu0 0
        %1062 = vmatpush1.bf16.msra.mxu0 0
        %1063 = vmatprep.subr.bf16.mxu0 0
        %1064 = vmatpush1.bf16.msra.mxu0 0
        %1065 = vmatprep.subr.bf16.mxu0 0
        %1066 = vmatpush1.bf16.msra.mxu0 0
        %1067 = vmatprep.subr.bf16.mxu0 0
        %1068 = vmatpush1.bf16.msra.mxu0 0
        %1069 = vmatprep.subr.bf16.mxu0 0
        %1070 = vmatpush1.bf16.msra.mxu0 0
        %1071 = vmatprep.subr.bf16.mxu0 0
        %1072 = vmatpush1.bf16.msra.mxu0 0
        %1073 = vmatprep.subr.bf16.mxu0 0
        %1074 = vmatpush1.bf16.msra.mxu0 0
        %1075 = vmatprep.subr.bf16.mxu0 0
        %1076 = vmatpush1.bf16.msra.mxu0 0
        %1077 = vmatprep.mubr.bf16.mxu0 0
        %1078 = vmatmul.mubr.bf16.gmra.mrb[0].mxu0 %v1043
        %v1079 = vpop.f32.mrb[0].mxu0
        %v1080 = vadd.f32 %v1028, %v1079
        %v1081 = vpop.f32.mrb[0].mxu0
        %v1082 = vpop.f32.mrb[0].mxu0
        %v1083 = vpop.f32.mrb[0].mxu0
        %1084 = vdwg.mxu0
        %v1085 = vadd.f32 %v414, %v1080
        %v1086 = vld [vmem:[%s8] sm:$0x1]
        %v1087 = vld [vmem:[%s9] sm:$0x1]
        %v1088 = vsel %vm439, %v1085, 0.0
        %1089 = vadd.xlane.f32.xlu0 %v1088
        %v1090 = vpop.xlane.xlu0 %1089
        %v1091 = vrcp.pop 32.0
        %v1092 = vmul.f32 %v1090, %v1091
        %v1093 = vsub.f32 %v1085, %v1092
        %v1094 = vmul.f32 %v1093, %v1093
        %v1095 = vsel %vm439, %v1094, 0.0
        %1096 = vadd.xlane.f32.xlu0 %v1095
        %v1097 = vpop.xlane.xlu0 %1096
        %v1098 = vmul.f32 %v1097, %v1091
        %v1099 = vadd.f32 %v1098, 1e-05
        %v1100 = vrsqrt.pop %v1099
        %v1101 = vmul.f32 %v1093, %v1100
        %v1103 = vlaneseq
        %v1104 = vshrl.u32 %v1103, 7
        %v1105 = vsub.s32 0, %v1104
        %v1106 = vrot.slane %v1086, %v1105
        %v1108 = vmul.f32 %v1101, %v1106
        %v1110 = vlaneseq
        %v1111 = vshrl.u32 %v1110, 7
        %v1112 = vsub.s32 0, %v1111
        %v1113 = vrot.slane %v1087, %v1112
        %v1115 = vadd.f32 %v1108, %v1113
        %1116 = vst.msk [vmem:[%s412] sm:$0xff] %vm439, %v1115
        %p1117 = scmp.lt.s32.totalorder %s26, 1
        %s1118 = scalar_select %p1117, %s26, 1
        %s1119 = smul.addr %s1118, 8
        %s1120 = scalar_lea.vmem %s10, %s1119
        %s1121 = sand.u32 %s280, 1
        %s1122 = scalar_lea.sflag [#allocation4], %s1121
        %s1123 = sand.u32 %s280, 1
        %s1124 = smul.addr %s1123, 32
        %s1125 = scalar_lea.vmem [#allocation3], %s1124
        // Predicated region
        $region61: #{decoder_forward.11} parent=59 // pred_check
          %p1126 = pneg %p264
        $region62: #{decoder_forward.11} parent=59 // pred_check_branch
          %1128 = sbr.rel (%p1126) target = $region64
        $region63: #{decoder_forward.11} parent=59 // pred_region
          _
        $region64: #{decoder_forward.11} parent=59 // pred_fallthru
          _
        // Predicated region
        $region65: #{decoder_forward.11} parent=59 // pred_check
          %p1129 = pneg %p290
        $region66: #{decoder_forward.11} parent=59 // pred_check_branch
          %1131 = sbr.rel (%p1129) target = $region68
        $region67: #{decoder_forward.11} parent=59 // pred_region
          %s1133 = ssub.s32 512, 512
          %1134 = vsyncadd %s1122, %s1133
          %s1135 = smul.addr %s26, 4
          %s1136 = smul.addr %s1135, 128
          %s1137 = scalar_lea.hbm %s11, %s1136
          %s1138 = sshll.u32 %s1125, 4
          %s1139 = int_to_ptr.vmem [resolvable:$true] %s1138
          %1144 = dma.vmem_to_hbm [thread:$0]  %s1139, 512, %s1137, %s1122, 128, 128, 8
        $region68: #{decoder_forward.11} parent=59 // pred_fallthru
          _
      $region60: #{decoder_forward.11} parent=5 // pred_fallthru
        _
      %p1145 = scmp.le.s32.totalorder 2, %s21
      // Predicated region
      $region69: #{decoder_forward.11} parent=5 // pred_check
        %p1146 = pneg %p1145
      $region70: #{decoder_forward.11} parent=5 // pred_check_branch
        %1148 = sbr.rel (%p1146) target = $region72
      $region71: #{decoder_forward.11} parent=5 // pred_region
        %s1149 = ssub.s32 %s21, 2
        // Predicated region
        $region73: #{decoder_forward.11} parent=71 // pred_check
          %p1150 = pneg %p270
        $region74: #{decoder_forward.11} parent=71 // pred_check_branch
          %1152 = sbr.rel (%p1150) target = $region76
        $region75: #{decoder_forward.11} parent=71 // pred_region
          %p1153 = scmp.lt.s32.totalorder %s27, 1
          %s1154 = scalar_select %p1153, %s27, 1
          %s1155 = smul.addr %s1154, 8
          %s1156 = scalar_lea.vmem %s10, %s1155
        $region76: #{decoder_forward.11} parent=71 // pred_fallthru
          _
        // Predicated region
        $region77: #{decoder_forward.11} parent=71 // pred_check
          %p1157 = pneg %p296
        $region78: #{decoder_forward.11} parent=71 // pred_check_branch
          %1159 = sbr.rel (%p1157) target = $region80
        $region79: #{decoder_forward.11} parent=71 // pred_region
          %s1160 = sand.u32 %s281, 1
          %s1161 = scalar_lea.sflag [#allocation4], %s1160
          %s1162 = sand.u32 %s281, 1
          %s1163 = smul.addr %s1162, 32
          %s1164 = scalar_lea.vmem [#allocation3], %s1163
          %1165 = dma.done %s1161, 512
        $region80: #{decoder_forward.11} parent=71 // pred_fallthru
          _
      $region72: #{decoder_forward.11} parent=5 // pred_fallthru
        _
    $region6: #{decoder_forward.11} parent=1 // loop_footer
      %s25 = sadd.s32 1, %s21
    $region7: #{decoder_forward.11} parent=1 // loop_footer_branch
      %20 = sbr.rel target = $region3
    $region8: #{decoder_forward.11} parent=1 // loop_exit
      _
    %1166 = vsyncpa [#allocation4], 1
    %s1167 = scalar_lea.sflag [#allocation4], 1
    %1168 = vsyncpa %s1167, 1

// kernel: decoder_forward.10
$region0: #{decoder_forward.10}
  #allocation0 [shape = 'u32[]', space=smem, size = 0x4, offset = 0x4, fixed_abs, tag = 'smem constant byte address 0x4 - core index']
  #allocation1 [shape = 'u32[144,128]{1,0:T(1,128)}', space=vmem, size = 0x12000, scoped, tag = 'internal scratch']
  #allocation2 [shape = 'f32[8,32]{1,0:T(8,128)}', space=vmem, size = 0x1000, scoped, tag = 'scratch operand']
  %s0 = inlined_call_operand.vmem [shape: f32[2,8,32], index: 0, kind: input, shape index: {}]
  %s1 = inlined_call_operand.vmem [shape: bf16[32,96], index: 1, kind: input, shape index: {}]
  %s2 = inlined_call_operand.vmem [shape: f32[1,96], index: 2, kind: input, shape index: {}]
  %s3 = inlined_call_operand.vmem [shape: bf16[32,32], index: 3, kind: input, shape index: {}]
  %s4 = inlined_call_operand.vmem [shape: f32[1,32], index: 4, kind: input, shape index: {}]
  %s5 = inlined_call_operand.vmem [shape: f32[1,32], index: 5, kind: input, shape index: {}]
  %s6 = inlined_call_operand.vmem [shape: f32[1,32], index: 6, kind: input, shape index: {}]
  %s7 = inlined_call_operand.vmem [shape: f32[2,8,32], index: 7, kind: output, shape index: {}]
  %s8 = sld [smem:[#allocation0]]
  $region61: #{decoder_forward.10} parent=0
    _
  %s10 = ssub.s32 1, %s8
  %s11 = scalar_select 0, %s10, %s8
  loop: start=0, step=1, limit=4
  $region2: #{decoder_forward.10} parent=0 // loop_pre_header
    _
  $region3: #{decoder_forward.10} parent=0 // loop_header
    %s13 = sphi 0, %s17
    %p14 = scmp.ge.s32.totalorder %s13, 4
    %s23 = sphi 0, %s25
    %s26 = sphi 0, %s23
    %s27 = sphi 0, %s26
    %s43 = sphi 0, %s27
    %s47 = sphi 0, %s47
    %s49 = sphi 0, %s47
    %s50 = sphi 0, %s49
    %s64 = sphi 0, %s50
    %s68 = sphi 0, %s68
    %s70 = sphi 0, %s68
    %s71 = sphi 0, %s70
    %s85 = sphi 0, %s71
    %s89 = sphi 0, %s89
    %s91 = sphi 0, %s89
    %s92 = sphi 0, %s91
    %s106 = sphi 0, %s92
    %s110 = sphi 0, %s110
    %s112 = sphi 0, %s110
    %s113 = sphi 0, %s112
    %s127 = sphi 0, %s113
    %s131 = sphi 0, %s131
    %s133 = sphi 0, %s131
    %s134 = sphi 0, %s133
    %s148 = sphi 0, %s134
    %s152 = sphi 0, %s152
    %s154 = sphi 0, %s152
    %s155 = sphi 0, %s154
    %s169 = sphi 0, %s155
    %s175 = sphi 0, %s177
    %s178 = sphi 0, %s175
    %s179 = sphi 0, %s178
    %s195 = sphi 0, %s179
  $region4: #{decoder_forward.10} parent=0 // loop_header_branch
    %16 = sbr.rel (%p14) target = $region8
  $region5: #{decoder_forward.10} parent=0 // loop_body
    %s18 = ssub.s32 %s13, 1
    %s19 = ssub.s32 %s13, 2
    %s20 = sadd.s32 %s13, 1
    %s21 = ssub.s32 %s13, %s20
    %p22 = scmp.eq.s32.totalorder %s21, 0
    %s24 = sadd.s32 %s23, 1
    %s25 = scalar_select %p22, %s23, %s24
    %p28 = pneg %p22
    %p29 = scmp.eq.s32.totalorder %s13, 1
    %p30 = por %p28, %p29
    %p31 = scmp.ne.s32.totalorder %s23, %s26
    %p32 = scmp.eq.s32.totalorder %s13, 0
    %p33 = por %p31, %p32
    %p34 = scmp.ne.s32.totalorder %s23, %s26
    %p35 = scmp.eq.s32.totalorder %s18, 1
    %p36 = por %p34, %p35
    %p37 = scmp.ne.s32.totalorder %s26, %s27
    %p38 = scmp.eq.s32.totalorder %s18, 0
    %p39 = por %p37, %p38
    %p40 = scmp.ne.s32.totalorder %s26, %s27
    %p41 = scmp.eq.s32.totalorder %s19, 1
    %p42 = por %p40, %p41
    %p44 = scmp.ne.s32.totalorder %s27, %s43
    %p45 = scmp.eq.s32.totalorder %s19, 0
    %p46 = por %p44, %p45
    %s48 = sadd.s32 %s47, 1
    %p51 = scmp.eq.s32.totalorder %s13, 1
    %p52 = scmp.ne.s32.totalorder %s47, %s49
    %p53 = scmp.eq.s32.totalorder %s13, 0
    %p54 = por %p52, %p53
    %p55 = scmp.ne.s32.totalorder %s47, %s49
    %p56 = scmp.eq.s32.totalorder %s18, 1
    %p57 = por %p55, %p56
    %p58 = scmp.ne.s32.totalorder %s49, %s50
    %p59 = scmp.eq.s32.totalorder %s18, 0
    %p60 = por %p58, %p59
    %p61 = scmp.ne.s32.totalorder %s49, %s50
    %p62 = scmp.eq.s32.totalorder %s19, 1
    %p63 = por %p61, %p62
    %p65 = scmp.ne.s32.totalorder %s50, %s64
    %p66 = scmp.eq.s32.totalorder %s19, 0
    %p67 = por %p65, %p66
    %s69 = sadd.s32 %s68, 1
    %p72 = scmp.eq.s32.totalorder %s13, 1
    %p73 = scmp.ne.s32.totalorder %s68, %s70
    %p74 = scmp.eq.s32.totalorder %s13, 0
    %p75 = por %p73, %p74
    %p76 = scmp.ne.s32.totalorder %s68, %s70
    %p77 = scmp.eq.s32.totalorder %s18, 1
    %p78 = por %p76, %p77
    %p79 = scmp.ne.s32.totalorder %s70, %s71
    %p80 = scmp.eq.s32.totalorder %s18, 0
    %p81 = por %p79, %p80
    %p82 = scmp.ne.s32.totalorder %s70, %s71
    %p83 = scmp.eq.s32.totalorder %s19, 1
    %p84 = por %p82, %p83
    %p86 = scmp.ne.s32.totalorder %s71, %s85
    %p87 = scmp.eq.s32.totalorder %s19, 0
    %p88 = por %p86, %p87
    %s90 = sadd.s32 %s89, 1
    %p93 = scmp.eq.s32.totalorder %s13, 1
    %p94 = scmp.ne.s32.totalorder %s89, %s91
    %p95 = scmp.eq.s32.totalorder %s13, 0
    %p96 = por %p94, %p95
    %p97 = scmp.ne.s32.totalorder %s89, %s91
    %p98 = scmp.eq.s32.totalorder %s18, 1
    %p99 = por %p97, %p98
    %p100 = scmp.ne.s32.totalorder %s91, %s92
    %p101 = scmp.eq.s32.totalorder %s18, 0
    %p102 = por %p100, %p101
    %p103 = scmp.ne.s32.totalorder %s91, %s92
    %p104 = scmp.eq.s32.totalorder %s19, 1
    %p105 = por %p103, %p104
    %p107 = scmp.ne.s32.totalorder %s92, %s106
    %p108 = scmp.eq.s32.totalorder %s19, 0
    %p109 = por %p107, %p108
    %s111 = sadd.s32 %s110, 1
    %p114 = scmp.eq.s32.totalorder %s13, 1
    %p115 = scmp.ne.s32.totalorder %s110, %s112
    %p116 = scmp.eq.s32.totalorder %s13, 0
    %p117 = por %p115, %p116
    %p118 = scmp.ne.s32.totalorder %s110, %s112
    %p119 = scmp.eq.s32.totalorder %s18, 1
    %p120 = por %p118, %p119
    %p121 = scmp.ne.s32.totalorder %s112, %s113
    %p122 = scmp.eq.s32.totalorder %s18, 0
    %p123 = por %p121, %p122
    %p124 = scmp.ne.s32.totalorder %s112, %s113
    %p125 = scmp.eq.s32.totalorder %s19, 1
    %p126 = por %p124, %p125
    %p128 = scmp.ne.s32.totalorder %s113, %s127
    %p129 = scmp.eq.s32.totalorder %s19, 0
    %p130 = por %p128, %p129
    %s132 = sadd.s32 %s131, 1
    %p135 = scmp.eq.s32.totalorder %s13, 1
    %p136 = scmp.ne.s32.totalorder %s131, %s133
    %p137 = scmp.eq.s32.totalorder %s13, 0
    %p138 = por %p136, %p137
    %p139 = scmp.ne.s32.totalorder %s131, %s133
    %p140 = scmp.eq.s32.totalorder %s18, 1
    %p141 = por %p139, %p140
    %p142 = scmp.ne.s32.totalorder %s133, %s134
    %p143 = scmp.eq.s32.totalorder %s18, 0
    %p144 = por %p142, %p143
    %p145 = scmp.ne.s32.totalorder %s133, %s134
    %p146 = scmp.eq.s32.totalorder %s19, 1
    %p147 = por %p145, %p146
    %p149 = scmp.ne.s32.totalorder %s134, %s148
    %p150 = scmp.eq.s32.totalorder %s19, 0
    %p151 = por %p149, %p150
    %s153 = sadd.s32 %s152, 1
    %p156 = scmp.eq.s32.totalorder %s13, 1
    %p157 = scmp.ne.s32.totalorder %s152, %s154
    %p158 = scmp.eq.s32.totalorder %s13, 0
    %p159 = por %p157, %p158
    %p160 = scmp.ne.s32.totalorder %s152, %s154
    %p161 = scmp.eq.s32.totalorder %s18, 1
    %p162 = por %p160, %p161
    %p163 = scmp.ne.s32.totalorder %s154, %s155
    %p164 = scmp.eq.s32.totalorder %s18, 0
    %p165 = por %p163, %p164
    %p166 = scmp.ne.s32.totalorder %s154, %s155
    %p167 = scmp.eq.s32.totalorder %s19, 1
    %p168 = por %p166, %p167
    %p170 = scmp.ne.s32.totalorder %s155, %s169
    %p171 = scmp.eq.s32.totalorder %s19, 0
    %p172 = por %p170, %p171
    %s173 = ssub.s32 %s13, %s20
    %p174 = scmp.eq.s32.totalorder %s173, 0
    %s176 = sadd.s32 %s175, 1
    %s177 = scalar_select %p174, %s175, %s176
    %p180 = pneg %p174
    %p181 = scmp.eq.s32.totalorder %s13, 1
    %p182 = por %p180, %p181
    %p183 = scmp.ne.s32.totalorder %s175, %s178
    %p184 = scmp.eq.s32.totalorder %s13, 0
    %p185 = por %p183, %p184
    %p186 = scmp.ne.s32.totalorder %s175, %s178
    %p187 = scmp.eq.s32.totalorder %s18, 1
    %p188 = por %p186, %p187
    %p189 = scmp.ne.s32.totalorder %s178, %s179
    %p190 = scmp.eq.s32.totalorder %s18, 0
    %p191 = por %p189, %p190
    %p192 = scmp.ne.s32.totalorder %s178, %s179
    %p193 = scmp.eq.s32.totalorder %s19, 1
    %p194 = por %p192, %p193
    %p196 = scmp.ne.s32.totalorder %s179, %s195
    %p197 = scmp.eq.s32.totalorder %s19, 0
    %p198 = por %p196, %p197
    %p199 = scmp.le.s32.totalorder 1, %s13
    %p200 = scmp.lt.s32.totalorder %s13, 3
    %p201 = pnand %p199, %p200
    %p202 = pneg %p201
    // Predicated region
    $region9: #{decoder_forward.10} parent=5 // pred_check
      _
    $region10: #{decoder_forward.10} parent=5 // pred_check_branch
      %204 = sbr.rel (%p201) target = $region12
    $region11: #{decoder_forward.10} parent=5 // pred_region
      %s205 = ssub.s32 %s13, 1
      // Predicated region
      $region13: #{decoder_forward.10} parent=11 // pred_check
        %p206 = pneg %p60
      $region14: #{decoder_forward.10} parent=11 // pred_check_branch
        %208 = sbr.rel (%p206) target = $region16
      $region15: #{decoder_forward.10} parent=11 // pred_region
        _
      $region16: #{decoder_forward.10} parent=11 // pred_fallthru
        _
      // Predicated region
      $region17: #{decoder_forward.10} parent=11 // pred_check
        %p209 = pneg %p81
      $region18: #{decoder_forward.10} parent=11 // pred_check_branch
        %211 = sbr.rel (%p209) target = $region20
      $region19: #{decoder_forward.10} parent=11 // pred_region
        _
      $region20: #{decoder_forward.10} parent=11 // pred_fallthru
        _
      // Predicated region
      $region21: #{decoder_forward.10} parent=11 // pred_check
        %p212 = pneg %p102
      $region22: #{decoder_forward.10} parent=11 // pred_check_branch
        %214 = sbr.rel (%p212) target = $region24
      $region23: #{decoder_forward.10} parent=11 // pred_region
        _
      $region24: #{decoder_forward.10} parent=11 // pred_fallthru
        _
      // Predicated region
      $region25: #{decoder_forward.10} parent=11 // pred_check
        %p215 = pneg %p123
      $region26: #{decoder_forward.10} parent=11 // pred_check_branch
        %217 = sbr.rel (%p215) target = $region28
      $region27: #{decoder_forward.10} parent=11 // pred_region
        _
      $region28: #{decoder_forward.10} parent=11 // pred_fallthru
        _
      // Predicated region
      $region29: #{decoder_forward.10} parent=11 // pred_check
        %p218 = pneg %p144
      $region30: #{decoder_forward.10} parent=11 // pred_check_branch
        %220 = sbr.rel (%p218) target = $region32
      $region31: #{decoder_forward.10} parent=11 // pred_region
        _
      $region32: #{decoder_forward.10} parent=11 // pred_fallthru
        _
      // Predicated region
      $region33: #{decoder_forward.10} parent=11 // pred_check
        %p221 = pneg %p165
      $region34: #{decoder_forward.10} parent=11 // pred_check_branch
        %223 = sbr.rel (%p221) target = $region36
      $region35: #{decoder_forward.10} parent=11 // pred_region
        _
      $region36: #{decoder_forward.10} parent=11 // pred_fallthru
        _
    $region12: #{decoder_forward.10} parent=5 // pred_fallthru
      _
    %p224 = scmp.lt.s32.totalorder %s13, 2
    // Predicated region
    $region37: #{decoder_forward.10} parent=5 // pred_check
      %p225 = pneg %p224
    $region38: #{decoder_forward.10} parent=5 // pred_check_branch
      %227 = sbr.rel (%p225) target = $region40
    $region39: #{decoder_forward.10} parent=5 // pred_region
      // Predicated region
      $region41: #{decoder_forward.10} parent=39 // pred_check
        %p228 = pneg %p33
      $region42: #{decoder_forward.10} parent=39 // pred_check_branch
        %230 = sbr.rel (%p228) target = $region44
      $region43: #{decoder_forward.10} parent=39 // pred_region
        %p231 = scmp.lt.s32.totalorder %s13, 1
        %s232 = scalar_select %p231, %s13, 1
        %s233 = smul.addr %s232, 8
        %s234 = scalar_lea.vmem %s0, %s233
      $region44: #{decoder_forward.10} parent=39 // pred_fallthru
        _
    $region40: #{decoder_forward.10} parent=5 // pred_fallthru
      _
    %p235 = scmp.le.s32.totalorder 1, %s13
    %p236 = scmp.lt.s32.totalorder %s13, 3
    %p237 = pnand %p235, %p236
    %p238 = pneg %p237
    // Predicated region
    $region45: #{decoder_forward.10} parent=5 // pred_check
      _
    $region46: #{decoder_forward.10} parent=5 // pred_check_branch
      %240 = sbr.rel (%p237) target = $region48
    $region47: #{decoder_forward.10} parent=5 // pred_region
      %s241 = ssub.s32 %s13, 1
      %p242 = scmp.lt.s32.totalorder %s18, 1
      %s243 = scalar_select %p242, %s18, 1
      %s244 = smul.addr %s243, 8
      %s245 = scalar_lea.vmem %s0, %s244
      %p246 = pneg %p39
      %p247 = pneg %p36
      %p248 = pneg %p60
      %p249 = pneg %p57
      %p250 = pneg %p81
      %p251 = pneg %p78
      %p252 = pneg %p102
      %p253 = pneg %p99
      %p254 = pneg %p123
      %p255 = pneg %p120
      %p256 = pneg %p144
      %p257 = pneg %p141
      %p258 = pneg %p165
      %p259 = pneg %p162
      %p260 = pneg %p191
      %p261 = pneg %p188
      %p262 = scmp.lt.s32.totalorder %s18, 1
      %s263 = scalar_select %p262, %s18, 1
      %s264 = smul.addr %s263, 8
      %s265 = scalar_lea.vmem %s7, %s264
      %p266 = scmp.lt.s32.totalorder %s18, 1
      %s267 = scalar_select %p266, %s18, 1
      %s268 = smul.addr %s267, 8
      %s269 = scalar_lea.vmem %s0, %s268
      %p270 = scmp.lt.s32.totalorder %s18, 1
      %s271 = scalar_select %p270, %s18, 1
      %s272 = smul.addr %s271, 8
      %s273 = scalar_lea.vmem %s7, %s272
      %v275 = vld [vmem:[%s269] sm:$0xff]
      %v276 = vpack.c.bf16 %v275, %v275
      %v277 = vld [vmem:[%s1] sm:$0xf]
      %v278 = vld [vmem:[%s1 + $0x4] sm:$0xf]
      %v279 = vld [vmem:[%s1 + $0x8] sm:$0xf]
      %v280 = vld [vmem:[%s1 + $0xc] sm:$0xf]
      %v281 = vld [vmem:[%s2] sm:$0x1]
      %v283 = vlaneseq
      %v284 = vshrl.u32 %v283, 7
      %v285 = vsub.s32 0, %v284
      %v286 = vrot.slane %v281, %v285
      %v292 = vunpack.c.l.b16 %v277
      %v293 = vunpack.c.l.b16 %v278
      %v294 = vunpack.c.l.b16 %v279
      %v295 = vunpack.c.l.b16 %v280
      %v296 = vpack.c.b16 %v293, %v292
      %v297 = vpack.c.b16 %v295, %v294
      %vm300 = vcmask 261120
      %v302 = vsel %vm300, %v276, 0
      %304 = vmatprep.subr.bf16.mxu0 0
      %305 = vmatpush1.bf16.msra.mxu0 %v296
      %306 = vmatprep.subr.bf16.mxu0 0
      %307 = vmatpush1.bf16.msra.mxu0 %v297
      %308 = vmatprep.subr.bf16.mxu0 0
      %309 = vmatpush1.bf16.msra.mxu0 0
      %310 = vmatprep.subr.bf16.mxu0 0
      %311 = vmatpush1.bf16.msra.mxu0 0
      %312 = vmatprep.subr.bf16.mxu0 0
      %313 = vmatpush1.bf16.msra.mxu0 0
      %314 = vmatprep.subr.bf16.mxu0 0
      %315 = vmatpush1.bf16.msra.mxu0 0
      %316 = vmatprep.subr.bf16.mxu0 0
      %317 = vmatpush1.bf16.msra.mxu0 0
      %318 = vmatprep.subr.bf16.mxu0 0
      %319 = vmatpush1.bf16.msra.mxu0 0
      %320 = vmatprep.subr.bf16.mxu0 0
      %321 = vmatpush1.bf16.msra.mxu0 0
      %322 = vmatprep.subr.bf16.mxu0 0
      %323 = vmatpush1.bf16.msra.mxu0 0
      %324 = vmatprep.subr.bf16.mxu0 0
      %325 = vmatpush1.bf16.msra.mxu0 0
      %326 = vmatprep.subr.bf16.mxu0 0
      %327 = vmatpush1.bf16.msra.mxu0 0
      %328 = vmatprep.subr.bf16.mxu0 0
      %329 = vmatpush1.bf16.msra.mxu0 0
      %330 = vmatprep.subr.bf16.mxu0 0
      %331 = vmatpush1.bf16.msra.mxu0 0
      %332 = vmatprep.subr.bf16.mxu0 0
      %333 = vmatpush1.bf16.msra.mxu0 0
      %334 = vmatprep.subr.bf16.mxu0 0
      %335 = vmatpush1.bf16.msra.mxu0 0
      %336 = vmatprep.mubr.bf16.mxu0 0
      %337 = vmatmul.mubr.bf16.gmra.mrb[0].mxu0 %v302
      %v338 = vpop.f32.mrb[0].mxu0
      %v339 = vadd.f32 %v286, %v338
      %v340 = vpop.f32.mrb[0].mxu0
      %v341 = vpop.f32.mrb[0].mxu0
      %v342 = vpop.f32.mrb[0].mxu0
      %343 = vdwg.mxu0
      %v344 = vpack.c.bf16 %v339, %v339
      %v345 = vlaneseq
      %v346 = vshrl.u32 %v345, 7
      %v347 = vlaneseq
      %v348 = vand.u32 %v347, 127
      %vm349 = vcmp.le.s32.totalorder %v348, %v346
      %351 = vrot.lane.b32.xlu0 %v344, 96
      %v352 = vpop.permute.xlu0 %351
      %vm353 = vcmask 64512
      %v355 = vsel %vm353, %v344, 0
      %v358 = vsel %vm353, %v352, 0
      %360 = vmatprep.subr.bf16.mxu0 0
      %361 = vmatpush1.bf16.xpose.msra.mxu0 %v358
      %362 = vmatprep.subr.bf16.mxu0 0
      %363 = vmatpush1.bf16.xpose.msra.mxu0 0
      %364 = vmatprep.subr.bf16.mxu0 0
      %365 = vmatpush1.bf16.xpose.msra.mxu0 0
      %366 = vmatprep.subr.bf16.mxu0 0
      %367 = vmatpush1.bf16.xpose.msra.mxu0 0
      %368 = vmatprep.subr.bf16.mxu0 0
      %369 = vmatpush1.bf16.xpose.msra.mxu0 0
      %370 = vmatprep.subr.bf16.mxu0 0
      %371 = vmatpush1.bf16.xpose.msra.mxu0 0
      %372 = vmatprep.subr.bf16.mxu0 0
      %373 = vmatpush1.bf16.xpose.msra.mxu0 0
      %374 = vmatprep.subr.bf16.mxu0 0
      %375 = vmatpush1.bf16.xpose.msra.mxu0 0
      %376 = vmatprep.subr.bf16.mxu0 0
      %377 = vmatpush1.bf16.xpose.msra.mxu0 0
      %378 = vmatprep.subr.bf16.mxu0 0
      %379 = vmatpush1.bf16.xpose.msra.mxu0 0
      %380 = vmatprep.subr.bf16.mxu0 0
      %381 = vmatpush1.bf16.xpose.msra.mxu0 0
      %382 = vmatprep.subr.bf16.mxu0 0
      %383 = vmatpush1.bf16.xpose.msra.mxu0 0
      %384 = vmatprep.subr.bf16.mxu0 0
      %385 = vmatpush1.bf16.xpose.msra.mxu0 0
      %386 = vmatprep.subr.bf16.mxu0 0
      %387 = vmatpush1.bf16.xpose.msra.mxu0 0
      %388 = vmatprep.subr.bf16.mxu0 0
      %389 = vmatpush1.bf16.xpose.msra.mxu0 0
      %390 = vmatprep.subr.bf16.mxu0 0
      %391 = vmatpush1.bf16.xpose.msra.mxu0 0
      %392 = vmatprep.mubr.bf16.mxu0 0
      %393 = vmatmul.mubr.bf16.gmra.mrb[0].mxu0 %v355
      %v394 = vpop.f32.mrb[0].mxu0
      %v395 = vadd.f32 0.0, %v394
      %v396 = vpop.f32.mrb[0].mxu0
      %v397 = vpop.f32.mrb[0].mxu0
      %v398 = vpop.f32.mrb[0].mxu0
      %399 = vdwg.mxu0
      %v400 = vmul.f32 %v395, 0.35355338
      %v401 = vsel %vm349, %v400, -1e+30
      %v402 = vsel %vm353, %v401, -inf
      %403 = vmax.xlane.f32.xlu0 %v402
      %v404 = vpop.xlane.xlu0 %403
      %v405 = vsub.f32 %v401, %v404
      %v406 = vmul.f32 %v405, 1.442695
      %v407 = vpow.pop %v406
      %v408 = vsel %vm353, %v407, 0.0
      %409 = vadd.xlane.f32.xlu0 %v408
      %v410 = vpop.xlane.xlu0 %409
      %v411 = vrcp.pop %v410
      %v412 = vmul.f32 %v407, %v411
      %v413 = vpack.c.bf16 %v412, %v412
      %414 = vrot.lane.b32.xlu0 %v344, 64
      %v415 = vpop.permute.xlu0 %414
      %v417 = vsel %vm353, %v413, 0
      %vm419 = vcmask 1043456
      %v421 = vsel %vm419, %v415, 0
      %423 = vmatprep.subr.bf16.mxu0 0
      %424 = vmatpush1.bf16.msra.mxu0 %v421
      %425 = vmatprep.subr.bf16.mxu0 0
      %426 = vmatpush1.bf16.msra.mxu0 0
      %427 = vmatprep.subr.bf16.mxu0 0
      %428 = vmatpush1.bf16.msra.mxu0 0
      %429 = vmatprep.subr.bf16.mxu0 0
      %430 = vmatpush1.bf16.msra.mxu0 0
      %431 = vmatprep.subr.bf16.mxu0 0
      %432 = vmatpush1.bf16.msra.mxu0 0
      %433 = vmatprep.subr.bf16.mxu0 0
      %434 = vmatpush1.bf16.msra.mxu0 0
      %435 = vmatprep.subr.bf16.mxu0 0
      %436 = vmatpush1.bf16.msra.mxu0 0
      %437 = vmatprep.subr.bf16.mxu0 0
      %438 = vmatpush1.bf16.msra.mxu0 0
      %439 = vmatprep.subr.bf16.mxu0 0
      %440 = vmatpush1.bf16.msra.mxu0 0
      %441 = vmatprep.subr.bf16.mxu0 0
      %442 = vmatpush1.bf16.msra.mxu0 0
      %443 = vmatprep.subr.bf16.mxu0 0
      %444 = vmatpush1.bf16.msra.mxu0 0
      %445 = vmatprep.subr.bf16.mxu0 0
      %446 = vmatpush1.bf16.msra.mxu0 0
      %447 = vmatprep.subr.bf16.mxu0 0
      %448 = vmatpush1.bf16.msra.mxu0 0
      %449 = vmatprep.subr.bf16.mxu0 0
      %450 = vmatpush1.bf16.msra.mxu0 0
      %451 = vmatprep.subr.bf16.mxu0 0
      %452 = vmatpush1.bf16.msra.mxu0 0
      %453 = vmatprep.subr.bf16.mxu0 0
      %454 = vmatpush1.bf16.msra.mxu0 0
      %455 = vmatprep.mubr.bf16.mxu0 0
      %456 = vmatmul.mubr.bf16.gmra.mrb[0].mxu0 %v417
      %v457 = vpop.f32.mrb[0].mxu0
      %v458 = vadd.f32 0.0, %v457
      %v459 = vpop.f32.mrb[0].mxu0
      %v460 = vpop.f32.mrb[0].mxu0
      %v461 = vpop.f32.mrb[0].mxu0
      %462 = vdwg.mxu0
      %463 = vst.msk [vmem:[#allocation2] sm:$0xff] %vm353, %v458
      %464 = vrot.lane.b32.xlu0 %v344, 120
      %v465 = vpop.permute.xlu0 %464
      %466 = vrot.lane.b32.xlu0 %v344, 88
      %v467 = vpop.permute.xlu0 %466
      %v469 = vsel %vm353, %v465, 0
      %v472 = vsel %vm353, %v467, 0
      %474 = vmatprep.subr.bf16.mxu0 0
      %475 = vmatpush1.bf16.xpose.msra.mxu0 %v472
      %476 = vmatprep.subr.bf16.mxu0 0
      %477 = vmatpush1.bf16.xpose.msra.mxu0 0
      %478 = vmatprep.subr.bf16.mxu0 0
      %479 = vmatpush1.bf16.xpose.msra.mxu0 0
      %480 = vmatprep.subr.bf16.mxu0 0
      %481 = vmatpush1.bf16.xpose.msra.mxu0 0
      %482 = vmatprep.subr.bf16.mxu0 0
      %483 = vmatpush1.bf16.xpose.msra.mxu0 0
      %484 = vmatprep.subr.bf16.mxu0 0
      %485 = vmatpush1.bf16.xpose.msra.mxu0 0
      %486 = vmatprep.subr.bf16.mxu0 0
      %487 = vmatpush1.bf16.xpose.msra.mxu0 0
      %488 = vmatprep.subr.bf16.mxu0 0
      %489 = vmatpush1.bf16.xpose.msra.mxu0 0
      %490 = vmatprep.subr.bf16.mxu0 0
      %491 = vmatpush1.bf16.xpose.msra.mxu0 0
      %492 = vmatprep.subr.bf16.mxu0 0
      %493 = vmatpush1.bf16.xpose.msra.mxu0 0
      %494 = vmatprep.subr.bf16.mxu0 0
      %495 = vmatpush1.bf16.xpose.msra.mxu0 0
      %496 = vmatprep.subr.bf16.mxu0 0
      %497 = vmatpush1.bf16.xpose.msra.mxu0 0
      %498 = vmatprep.subr.bf16.mxu0 0
      %499 = vmatpush1.bf16.xpose.msra.mxu0 0
      %500 = vmatprep.subr.bf16.mxu0 0
      %501 = vmatpush1.bf16.xpose.msra.mxu0 0
      %502 = vmatprep.subr.bf16.mxu0 0
      %503 = vmatpush1.bf16.xpose.msra.mxu0 0
      %504 = vmatprep.subr.bf16.mxu0 0
      %505 = vmatpush1.bf16.xpose.msra.mxu0 0
      %506 = vmatprep.mubr.bf16.mxu0 0
      %507 = vmatmul.mubr.bf16.gmra.mrb[0].mxu0 %v469
      %v508 = vpop.f32.mrb[0].mxu0
      %v509 = vadd.f32 0.0, %v508
      %v510 = vpop.f32.mrb[0].mxu0
      %v511 = vpop.f32.mrb[0].mxu0
      %v512 = vpop.f32.mrb[0].mxu0
      %513 = vdwg.mxu0
      %v514 = vmul.f32 %v509, 0.35355338
      %v515 = vsel %vm349, %v514, -1e+30
      %v516 = vsel %vm353, %v515, -inf
      %517 = vmax.xlane.f32.xlu0 %v516
      %v518 = vpop.xlane.xlu0 %517
      %v519 = vsub.f32 %v515, %v518
      %v520 = vmul.f32 %v519, 1.442695
      %v521 = vpow.pop %v520
      %v522 = vsel %vm353, %v521, 0.0
      %523 = vadd.xlane.f32.xlu0 %v522
      %v524 = vpop.xlane.xlu0 %523
      %v525 = vrcp.pop %v524
      %v526 = vmul.f32 %v521, %v525
      %v527 = vpack.c.bf16 %v526, %v526
      %528 = vrot.lane.b32.xlu0 %v344, 56
      %v529 = vpop.permute.xlu0 %528
      %v531 = vsel %vm353, %v527, 0
      %v534 = vsel %vm419, %v529, 0
      %536 = vmatprep.subr.bf16.mxu0 0
      %537 = vmatpush1.bf16.msra.mxu0 %v534
      %538 = vmatprep.subr.bf16.mxu0 0
      %539 = vmatpush1.bf16.msra.mxu0 0
      %540 = vmatprep.subr.bf16.mxu0 0
      %541 = vmatpush1.bf16.msra.mxu0 0
      %542 = vmatprep.subr.bf16.mxu0 0
      %543 = vmatpush1.bf16.msra.mxu0 0
      %544 = vmatprep.subr.bf16.mxu0 0
      %545 = vmatpush1.bf16.msra.mxu0 0
      %546 = vmatprep.subr.bf16.mxu0 0
      %547 = vmatpush1.bf16.msra.mxu0 0
      %548 = vmatprep.subr.bf16.mxu0 0
      %549 = vmatpush1.bf16.msra.mxu0 0
      %550 = vmatprep.subr.bf16.mxu0 0
      %551 = vmatpush1.bf16.msra.mxu0 0
      %552 = vmatprep.subr.bf16.mxu0 0
      %553 = vmatpush1.bf16.msra.mxu0 0
      %554 = vmatprep.subr.bf16.mxu0 0
      %555 = vmatpush1.bf16.msra.mxu0 0
      %556 = vmatprep.subr.bf16.mxu0 0
      %557 = vmatpush1.bf16.msra.mxu0 0
      %558 = vmatprep.subr.bf16.mxu0 0
      %559 = vmatpush1.bf16.msra.mxu0 0
      %560 = vmatprep.subr.bf16.mxu0 0
      %561 = vmatpush1.bf16.msra.mxu0 0
      %562 = vmatprep.subr.bf16.mxu0 0
      %563 = vmatpush1.bf16.msra.mxu0 0
      %564 = vmatprep.subr.bf16.mxu0 0
      %565 = vmatpush1.bf16.msra.mxu0 0
      %566 = vmatprep.subr.bf16.mxu0 0
      %567 = vmatpush1.bf16.msra.mxu0 0
      %568 = vmatprep.mubr.bf16.mxu0 0
      %569 = vmatmul.mubr.bf16.gmra.mrb[0].mxu0 %v531
      %v570 = vpop.f32.mrb[0].mxu0
      %v571 = vadd.f32 0.0, %v570
      %v572 = vpop.f32.mrb[0].mxu0
      %v573 = vpop.f32.mrb[0].mxu0
      %v574 = vpop.f32.mrb[0].mxu0
      %575 = vdwg.mxu0
      %577 = vrot.lane.b32.xlu0 %v571, 8
      %v578 = vpop.permute.xlu0 %577
      %vm580 = vcmask 130112
      %581 = vst.msk [vmem:[#allocation2] sm:$0xff] %vm580, %v578
      %582 = vrot.lane.b32.xlu0 %v344, 112
      %v583 = vpop.permute.xlu0 %582
      %584 = vrot.lane.b32.xlu0 %v344, 80
      %v585 = vpop.permute.xlu0 %584
      %v587 = vsel %vm353, %v583, 0
      %v590 = vsel %vm353, %v585, 0
      %592 = vmatprep.subr.bf16.mxu0 0
      %593 = vmatpush1.bf16.xpose.msra.mxu0 %v590
      %594 = vmatprep.subr.bf16.mxu0 0
      %595 = vmatpush1.bf16.xpose.msra.mxu0 0
      %596 = vmatprep.subr.bf16.mxu0 0
      %597 = vmatpush1.bf16.xpose.msra.mxu0 0
      %598 = vmatprep.subr.bf16.mxu0 0
      %599 = vmatpush1.bf16.xpose.msra.mxu0 0
      %600 = vmatprep.subr.bf16.mxu0 0
      %601 = vmatpush1.bf16.xpose.msra.mxu0 0
      %602 = vmatprep.subr.bf16.mxu0 0
      %603 = vmatpush1.bf16.xpose.msra.mxu0 0
      %604 = vmatprep.subr.bf16.mxu0 0
      %605 = vmatpush1.bf16.xpose.msra.mxu0 0
      %606 = vmatprep.subr.bf16.mxu0 0
      %607 = vmatpush1.bf16.xpose.msra.mxu0 0
      %608 = vmatprep.subr.bf16.mxu0 0
      %609 = vmatpush1.bf16.xpose.msra.mxu0 0
      %610 = vmatprep.subr.bf16.mxu0 0
      %611 = vmatpush1.bf16.xpose.msra.mxu0 0
      %612 = vmatprep.subr.bf16.mxu0 0
      %613 = vmatpush1.bf16.xpose.msra.mxu0 0
      %614 = vmatprep.subr.bf16.mxu0 0
      %615 = vmatpush1.bf16.xpose.msra.mxu0 0
      %616 = vmatprep.subr.bf16.mxu0 0
      %617 = vmatpush1.bf16.xpose.msra.mxu0 0
      %618 = vmatprep.subr.bf16.mxu0 0
      %619 = vmatpush1.bf16.xpose.msra.mxu0 0
      %620 = vmatprep.subr.bf16.mxu0 0
      %621 = vmatpush1.bf16.xpose.msra.mxu0 0
      %622 = vmatprep.subr.bf16.mxu0 0
      %623 = vmatpush1.bf16.xpose.msra.mxu0 0
      %624 = vmatprep.mubr.bf16.mxu0 0
      %625 = vmatmul.mubr.bf16.gmra.mrb[0].mxu0 %v587
      %v626 = vpop.f32.mrb[0].mxu0
      %v627 = vadd.f32 0.0, %v626
      %v628 = vpop.f32.mrb[0].mxu0
      %v629 = vpop.f32.mrb[0].mxu0
      %v630 = vpop.f32.mrb[0].mxu0
      %631 = vdwg.mxu0
      %v632 = vmul.f32 %v627, 0.35355338
      %v633 = vsel %vm349, %v632, -1e+30
      %v634 = vsel %vm353, %v633, -inf
      %635 = vmax.xlane.f32.xlu0 %v634
      %v636 = vpop.xlane.xlu0 %635
      %v637 = vsub.f32 %v633, %v636
      %v638 = vmul.f32 %v637, 1.442695
      %v639 = vpow.pop %v638
      %v640 = vsel %vm353, %v639, 0.0
      %641 = vadd.xlane.f32.xlu0 %v640
      %v642 = vpop.xlane.xlu0 %641
      %v643 = vrcp.pop %v642
      %v644 = vmul.f32 %v639, %v643
      %v645 = vpack.c.bf16 %v644, %v644
      %646 = vrot.lane.b32.xlu0 %v344, 48
      %v647 = vpop.permute.xlu0 %646
      %v649 = vsel %vm353, %v645, 0
      %v652 = vsel %vm419, %v647, 0
      %654 = vmatprep.subr.bf16.mxu0 0
      %655 = vmatpush1.bf16.msra.mxu0 %v652
      %656 = vmatprep.subr.bf16.mxu0 0
      %657 = vmatpush1.bf16.msra.mxu0 0
      %658 = vmatprep.subr.bf16.mxu0 0
      %659 = vmatpush1.bf16.msra.mxu0 0
      %660 = vmatprep.subr.bf16.mxu0 0
      %661 = vmatpush1.bf16.msra.mxu0 0
      %662 = vmatprep.subr.bf16.mxu0 0
      %663 = vmatpush1.bf16.msra.mxu0 0
      %664 = vmatprep.subr.bf16.mxu0 0
      %665 = vmatpush1.bf16.msra.mxu0 0
      %666 = vmatprep.subr.bf16.mxu0 0
      %667 = vmatpush1.bf16.msra.mxu0 0
      %668 = vmatprep.subr.bf16.mxu0 0
      %669 = vmatpush1.bf16.msra.mxu0 0
      %670 = vmatprep.subr.bf16.mxu0 0
      %671 = vmatpush1.bf16.msra.mxu0 0
      %672 = vmatprep.subr.bf16.mxu0 0
      %673 = vmatpush1.bf16.msra.mxu0 0
      %674 = vmatprep.subr.bf16.mxu0 0
      %675 = vmatpush1.bf16.msra.mxu0 0
      %676 = vmatprep.subr.bf16.mxu0 0
      %677 = vmatpush1.bf16.msra.mxu0 0
      %678 = vmatprep.subr.bf16.mxu0 0
      %679 = vmatpush1.bf16.msra.mxu0 0
      %680 = vmatprep.subr.bf16.mxu0 0
      %681 = vmatpush1.bf16.msra.mxu0 0
      %682 = vmatprep.subr.bf16.mxu0 0
      %683 = vmatpush1.bf16.msra.mxu0 0
      %684 = vmatprep.subr.bf16.mxu0 0
      %685 = vmatpush1.bf16.msra.mxu0 0
      %686 = vmatprep.mubr.bf16.mxu0 0
      %687 = vmatmul.mubr.bf16.gmra.mrb[0].mxu0 %v649
      %v688 = vpop.f32.mrb[0].mxu0
      %v689 = vadd.f32 0.0, %v688
      %v690 = vpop.f32.mrb[0].mxu0
      %v691 = vpop.f32.mrb[0].mxu0
      %v692 = vpop.f32.mrb[0].mxu0
      %693 = vdwg.mxu0
      %695 = vrot.lane.b32.xlu0 %v689, 16
      %v696 = vpop.permute.xlu0 %695
      %vm698 = vcmask 195712
      %699 = vst.msk [vmem:[#allocation2] sm:$0xff] %vm698, %v696
      %700 = vrot.lane.b32.xlu0 %v344, 104
      %v701 = vpop.permute.xlu0 %700
      %702 = vrot.lane.b32.xlu0 %v344, 72
      %v703 = vpop.permute.xlu0 %702
      %v705 = vsel %vm353, %v701, 0
      %v708 = vsel %vm353, %v703, 0
      %710 = vmatprep.subr.bf16.mxu0 0
      %711 = vmatpush1.bf16.xpose.msra.mxu0 %v708
      %712 = vmatprep.subr.bf16.mxu0 0
      %713 = vmatpush1.bf16.xpose.msra.mxu0 0
      %714 = vmatprep.subr.bf16.mxu0 0
      %715 = vmatpush1.bf16.xpose.msra.mxu0 0
      %716 = vmatprep.subr.bf16.mxu0 0
      %717 = vmatpush1.bf16.xpose.msra.mxu0 0
      %718 = vmatprep.subr.bf16.mxu0 0
      %719 = vmatpush1.bf16.xpose.msra.mxu0 0
      %720 = vmatprep.subr.bf16.mxu0 0
      %721 = vmatpush1.bf16.xpose.msra.mxu0 0
      %722 = vmatprep.subr.bf16.mxu0 0
      %723 = vmatpush1.bf16.xpose.msra.mxu0 0
      %724 = vmatprep.subr.bf16.mxu0 0
      %725 = vmatpush1.bf16.xpose.msra.mxu0 0
      %726 = vmatprep.subr.bf16.mxu0 0
      %727 = vmatpush1.bf16.xpose.msra.mxu0 0
      %728 = vmatprep.subr.bf16.mxu0 0
      %729 = vmatpush1.bf16.xpose.msra.mxu0 0
      %730 = vmatprep.subr.bf16.mxu0 0
      %731 = vmatpush1.bf16.xpose.msra.mxu0 0
      %732 = vmatprep.subr.bf16.mxu0 0
      %733 = vmatpush1.bf16.xpose.msra.mxu0 0
      %734 = vmatprep.subr.bf16.mxu0 0
      %735 = vmatpush1.bf16.xpose.msra.mxu0 0
      %736 = vmatprep.subr.bf16.mxu0 0
      %737 = vmatpush1.bf16.xpose.msra.mxu0 0
      %738 = vmatprep.subr.bf16.mxu0 0
      %739 = vmatpush1.bf16.xpose.msra.mxu0 0
      %740 = vmatprep.subr.bf16.mxu0 0
      %741 = vmatpush1.bf16.xpose.msra.mxu0 0
      %742 = vmatprep.mubr.bf16.mxu0 0
      %743 = vmatmul.mubr.bf16.gmra.mrb[0].mxu0 %v705
      %v744 = vpop.f32.mrb[0].mxu0
      %v745 = vadd.f32 0.0, %v744
      %v746 = vpop.f32.mrb[0].mxu0
      %v747 = vpop.f32.mrb[0].mxu0
      %v748 = vpop.f32.mrb[0].mxu0
      %749 = vdwg.mxu0
      %v750 = vmul.f32 %v745, 0.35355338
      %v751 = vsel %vm349, %v750, -1e+30
      %v752 = vsel %vm353, %v751, -inf
      %753 = vmax.xlane.f32.xlu0 %v752
      %v754 = vpop.xlane.xlu0 %753
      %v755 = vsub.f32 %v751, %v754
      %v756 = vmul.f32 %v755, 1.442695
      %v757 = vpow.pop %v756
      %v758 = vsel %vm353, %v757, 0.0
      %759 = vadd.xlane.f32.xlu0 %v758
      %v760 = vpop.xlane.xlu0 %759
      %v761 = vrcp.pop %v760
      %v762 = vmul.f32 %v757, %v761
      %v763 = vpack.c.bf16 %v762, %v762
      %764 = vrot.lane.b32.xlu0 %v344, 40
      %v765 = vpop.permute.xlu0 %764
      %v767 = vsel %vm353, %v763, 0
      %v770 = vsel %vm419, %v765, 0
      %772 = vmatprep.subr.bf16.mxu0 0
      %773 = vmatpush1.bf16.msra.mxu0 %v770
      %774 = vmatprep.subr.bf16.mxu0 0
      %775 = vmatpush1.bf16.msra.mxu0 0
      %776 = vmatprep.subr.bf16.mxu0 0
      %777 = vmatpush1.bf16.msra.mxu0 0
      %778 = vmatprep.subr.bf16.mxu0 0
      %779 = vmatpush1.bf16.msra.mxu0 0
      %780 = vmatprep.subr.bf16.mxu0 0
      %781 = vmatpush1.bf16.msra.mxu0 0
      %782 = vmatprep.subr.bf16.mxu0 0
      %783 = vmatpush1.bf16.msra.mxu0 0
      %784 = vmatprep.subr.bf16.mxu0 0
      %785 = vmatpush1.bf16.msra.mxu0 0
      %786 = vmatprep.subr.bf16.mxu0 0
      %787 = vmatpush1.bf16.msra.mxu0 0
      %788 = vmatprep.subr.bf16.mxu0 0
      %789 = vmatpush1.bf16.msra.mxu0 0
      %790 = vmatprep.subr.bf16.mxu0 0
      %791 = vmatpush1.bf16.msra.mxu0 0
      %792 = vmatprep.subr.bf16.mxu0 0
      %793 = vmatpush1.bf16.msra.mxu0 0
      %794 = vmatprep.subr.bf16.mxu0 0
      %795 = vmatpush1.bf16.msra.mxu0 0
      %796 = vmatprep.subr.bf16.mxu0 0
      %797 = vmatpush1.bf16.msra.mxu0 0
      %798 = vmatprep.subr.bf16.mxu0 0
      %799 = vmatpush1.bf16.msra.mxu0 0
      %800 = vmatprep.subr.bf16.mxu0 0
      %801 = vmatpush1.bf16.msra.mxu0 0
      %802 = vmatprep.subr.bf16.mxu0 0
      %803 = vmatpush1.bf16.msra.mxu0 0
      %804 = vmatprep.mubr.bf16.mxu0 0
      %805 = vmatmul.mubr.bf16.gmra.mrb[0].mxu0 %v767
      %v806 = vpop.f32.mrb[0].mxu0
      %v807 = vadd.f32 0.0, %v806
      %v808 = vpop.f32.mrb[0].mxu0
      %v809 = vpop.f32.mrb[0].mxu0
      %v810 = vpop.f32.mrb[0].mxu0
      %811 = vdwg.mxu0
      %813 = vrot.lane.b32.xlu0 %v807, 24
      %v814 = vpop.permute.xlu0 %813
      %vm816 = vcmask 261312
      %817 = vst.msk [vmem:[#allocation2] sm:$0xff] %vm816, %v814
      %v818 = vld [vmem:[#allocation2] sm:$0xff]
      %v819 = vpack.c.bf16 %v818, %v818
      %v820 = vld [vmem:[%s3] sm:$0xf]
      %v821 = vld [vmem:[%s3 + $0x4] sm:$0xf]
      %v822 = vld [vmem:[%s3 + $0x8] sm:$0xf]
      %v823 = vld [vmem:[%s3 + $0xc] sm:$0xf]
      %v824 = vld [vmem:[%s4] sm:$0x1]
      %v826 = vlaneseq
      %v827 = vshrl.u32 %v826, 7
      %v828 = vsub.s32 0, %v827
      %v829 = vrot.slane %v824, %v828
      %v835 = vunpack.c.l.b16 %v820
      %v836 = vunpack.c.l.b16 %v821
      %v837 = vunpack.c.l.b16 %v822
      %v838 = vunpack.c.l.b16 %v823
      %v839 = vpack.c.b16 %v836, %v835
      %v840 = vpack.c.b16 %v838, %v837
      %v844 = vsel %vm300, %v819, 0
      %846 = vmatprep.subr.bf16.mxu0 0
      %847 = vmatpush1.bf16.msra.mxu0 %v839
      %848 = vmatprep.subr.bf16.mxu0 0
      %849 = vmatpush1.bf16.msra.mxu0 %v840
      %850 = vmatprep.subr.bf16.mxu0 0
      %851 = vmatpush1.bf16.msra.mxu0 0
      %852 = vmatprep.subr.bf16.mxu0 0
      %853 = vmatpush1.bf16.msra.mxu0 0
      %854 = vmatprep.subr.bf16.mxu0 0
      %855 = vmatpush1.bf16.msra.mxu0 0
      %856 = vmatprep.subr.bf16.mxu0 0
      %857 = vmatpush1.bf16.msra.mxu0 0
      %858 = vmatprep.subr.bf16.mxu0 0
      %859 = vmatpush1.bf16.msra.mxu0 0
      %860 = vmatprep.subr.bf16.mxu0 0
      %861 = vmatpush1.bf16.msra.mxu0 0
      %862 = vmatprep.subr.bf16.mxu0 0
      %863 = vmatpush1.bf16.msra.mxu0 0
      %864 = vmatprep.subr.bf16.mxu0 0
      %865 = vmatpush1.bf16.msra.mxu0 0
      %866 = vmatprep.subr.bf16.mxu0 0
      %867 = vmatpush1.bf16.msra.mxu0 0
      %868 = vmatprep.subr.bf16.mxu0 0
      %869 = vmatpush1.bf16.msra.mxu0 0
      %870 = vmatprep.subr.bf16.mxu0 0
      %871 = vmatpush1.bf16.msra.mxu0 0
      %872 = vmatprep.subr.bf16.mxu0 0
      %873 = vmatpush1.bf16.msra.mxu0 0
      %874 = vmatprep.subr.bf16.mxu0 0
      %875 = vmatpush1.bf16.msra.mxu0 0
      %876 = vmatprep.subr.bf16.mxu0 0
      %877 = vmatpush1.bf16.msra.mxu0 0
      %878 = vmatprep.mubr.bf16.mxu0 0
      %879 = vmatmul.mubr.bf16.gmra.mrb[0].mxu0 %v844
      %v880 = vpop.f32.mrb[0].mxu0
      %v881 = vadd.f32 %v829, %v880
      %v882 = vpop.f32.mrb[0].mxu0
      %v883 = vpop.f32.mrb[0].mxu0
      %v884 = vpop.f32.mrb[0].mxu0
      %885 = vdwg.mxu0
      %v886 = vadd.f32 %v275, %v881
      %v887 = vld [vmem:[%s5] sm:$0x1]
      %v888 = vld [vmem:[%s6] sm:$0x1]
      %v889 = vsel %vm300, %v886, 0.0
      %890 = vadd.xlane.f32.xlu0 %v889
      %v891 = vpop.xlane.xlu0 %890
      %v892 = vrcp.pop 32.0
      %v893 = vmul.f32 %v891, %v892
      %v894 = vsub.f32 %v886, %v893
      %v895 = vmul.f32 %v894, %v894
      %v896 = vsel %vm300, %v895, 0.0
      %897 = vadd.xlane.f32.xlu0 %v896
      %v898 = vpop.xlane.xlu0 %897
      %v899 = vmul.f32 %v898, %v892
      %v900 = vadd.f32 %v899, 1e-05
      %v901 = vrsqrt.pop %v900
      %v902 = vmul.f32 %v894, %v901
      %v904 = vlaneseq
      %v905 = vshrl.u32 %v904, 7
      %v906 = vsub.s32 0, %v905
      %v907 = vrot.slane %v887, %v906
      %v909 = vmul.f32 %v902, %v907
      %v911 = vlaneseq
      %v912 = vshrl.u32 %v911, 7
      %v913 = vsub.s32 0, %v912
      %v914 = vrot.slane %v888, %v913
      %v916 = vadd.f32 %v909, %v914
      %917 = vst.msk [vmem:[%s273] sm:$0xff] %vm300, %v916
      %p918 = scmp.lt.s32.totalorder %s18, 1
      %s919 = scalar_select %p918, %s18, 1
      %s920 = smul.addr %s919, 8
      %s921 = scalar_lea.vmem %s7, %s920
      // Predicated region
      $region49: #{decoder_forward.10} parent=47 // pred_check
        %p922 = pneg %p188
      $region50: #{decoder_forward.10} parent=47 // pred_check_branch
        %924 = sbr.rel (%p922) target = $region52
      $region51: #{decoder_forward.10} parent=47 // pred_region
        _
      $region52: #{decoder_forward.10} parent=47 // pred_fallthru
        _
    $region48: #{decoder_forward.10} parent=5 // pred_fallthru
      _
    %p925 = scmp.le.s32.totalorder 2, %s13
    // Predicated region
    $region53: #{decoder_forward.10} parent=5 // pred_check
      %p926 = pneg %p925
    $region54: #{decoder_forward.10} parent=5 // pred_check_branch
      %928 = sbr.rel (%p926) target = $region56
    $region55: #{decoder_forward.10} parent=5 // pred_region
      %s929 = ssub.s32 %s13, 2
      // Predicated region
      $region57: #{decoder_forward.10} parent=55 // pred_check
        %p930 = pneg %p194
      $region58: #{decoder_forward.10} parent=55 // pred_check_branch
        %932 = sbr.rel (%p930) target = $region60
      $region59: #{decoder_forward.10} parent=55 // pred_region
        %p933 = scmp.lt.s32.totalorder %s19, 1
        %s934 = scalar_select %p933, %s19, 1
        %s935 = smul.addr %s934, 8
        %s936 = scalar_lea.vmem %s7, %s935
      $region60: #{decoder_forward.10} parent=55 // pred_fallthru
        _
    $region56: #{decoder_forward.10} parent=5 // pred_fallthru
      _
  $region6: #{decoder_forward.10} parent=0 // loop_footer
    %s17 = sadd.s32 1, %s13
  $region7: #{decoder_forward.10} parent=0 // loop_footer_branch
    %12 = sbr.rel target = $region3
  $region8: #{decoder_forward.10} parent=0 // loop_exit
    _

// kernel: decoder_forward.17
$region0: #{decoder_forward.17}
  #allocation0 [shape = 'u32[]', space=smem, size = 0x4, offset = 0x4, fixed_abs, tag = 'smem constant byte address 0x4 - core index']
  #allocation1 [shape = 'u32[144,128]{1,0:T(1,128)}', space=vmem, size = 0x12000, scoped, tag = 'internal scratch']
  %s0 = inlined_call_operand.vmem [shape: f32[16,32], index: 0, kind: input, shape index: {}]
  %s1 = inlined_call_operand.vmem [shape: f32[1,32], index: 1, kind: input, shape index: {}]
  %s2 = inlined_call_operand.vmem [shape: f32[1,32], index: 2, kind: input, shape index: {}]
  %s3 = inlined_call_operand.vmem [shape: bf16[32,128], index: 3, kind: input, shape index: {}]
  %s4 = inlined_call_operand.vmem [shape: f32[1,128], index: 4, kind: input, shape index: {}]
  %s5 = inlined_call_operand.vmem [shape: f32[16,128], index: 5, kind: output, shape index: {}]
  %s6 = sld [smem:[#allocation0]]
  $region30: #{decoder_forward.17} parent=0
    _
  %s8 = ssub.s32 1, %s6
  %s9 = scalar_select 0, %s8, %s6
  // Predicated region
  $region2: #{decoder_forward.17} parent=0 // pred_check
    _
  $region3: #{decoder_forward.17} parent=0 // pred_check_branch
    %11 = sbr.rel (0) target = $region5
  $region4: #{decoder_forward.17} parent=0 // pred_region
    _
  $region5: #{decoder_forward.17} parent=0 // pred_fallthru
    _
  // Predicated region
  $region6: #{decoder_forward.17} parent=0 // pred_check
    _
  $region7: #{decoder_forward.17} parent=0 // pred_check_branch
    %13 = sbr.rel (0) target = $region9
  $region8: #{decoder_forward.17} parent=0 // pred_region
    _
  $region9: #{decoder_forward.17} parent=0 // pred_fallthru
    _
  // Predicated region
  $region10: #{decoder_forward.17} parent=0 // pred_check
    _
  $region11: #{decoder_forward.17} parent=0 // pred_check_branch
    %15 = sbr.rel (0) target = $region13
  $region12: #{decoder_forward.17} parent=0 // pred_region
    _
  $region13: #{decoder_forward.17} parent=0 // pred_fallthru
    _
  // Predicated region
  $region14: #{decoder_forward.17} parent=0 // pred_check
    _
  $region15: #{decoder_forward.17} parent=0 // pred_check_branch
    %17 = sbr.rel (0) target = $region17
  $region16: #{decoder_forward.17} parent=0 // pred_region
    _
  $region17: #{decoder_forward.17} parent=0 // pred_fallthru
    _
  // Predicated region
  $region18: #{decoder_forward.17} parent=0 // pred_check
    _
  $region19: #{decoder_forward.17} parent=0 // pred_check_branch
    %19 = sbr.rel (0) target = $region21
  $region20: #{decoder_forward.17} parent=0 // pred_region
    _
  $region21: #{decoder_forward.17} parent=0 // pred_fallthru
    _
  %v21 = vld [vmem:[%s0] sm:$0xff]
  %v22 = vld [vmem:[%s0 + $0x8] sm:$0xff]
  %v23 = vld [vmem:[%s1] sm:$0x1]
  %v24 = vld [vmem:[%s2] sm:$0x1]
  %vm25 = vcmask 261120
  %v26 = vsel %vm25, %v21, 0.0
  %27 = vadd.xlane.f32.xlu0 %v26
  %v28 = vpop.xlane.xlu0 %27
  %v29 = vsel %vm25, %v22, 0.0
  %30 = vadd.xlane.f32.xlu0 %v29
  %v31 = vpop.xlane.xlu0 %30
  %v32 = vrcp.pop 32.0
  %v33 = vmul.f32 %v28, %v32
  %v34 = vmul.f32 %v31, %v32
  %v35 = vsub.f32 %v21, %v33
  %v36 = vsub.f32 %v22, %v34
  %v37 = vmul.f32 %v35, %v35
  %v38 = vmul.f32 %v36, %v36
  %v39 = vsel %vm25, %v37, 0.0
  %40 = vadd.xlane.f32.xlu0 %v39
  %v41 = vpop.xlane.xlu0 %40
  %v42 = vsel %vm25, %v38, 0.0
  %43 = vadd.xlane.f32.xlu0 %v42
  %v44 = vpop.xlane.xlu0 %43
  %v45 = vmul.f32 %v41, %v32
  %v46 = vmul.f32 %v44, %v32
  %v47 = vadd.f32 %v45, 1e-05
  %v48 = vadd.f32 %v46, 1e-05
  %v49 = vrsqrt.pop %v47
  %v50 = vrsqrt.pop %v48
  %v51 = vmul.f32 %v35, %v49
  %v52 = vmul.f32 %v36, %v50
  %v54 = vlaneseq
  %v55 = vshrl.u32 %v54, 7
  %v56 = vsub.s32 0, %v55
  %v57 = vrot.slane %v23, %v56
  %v59 = vmul.f32 %v51, %v57
  %v60 = vmul.f32 %v52, %v57
  %v62 = vlaneseq
  %v63 = vshrl.u32 %v62, 7
  %v64 = vsub.s32 0, %v63
  %v65 = vrot.slane %v24, %v64
  %v67 = vadd.f32 %v59, %v65
  %v68 = vadd.f32 %v60, %v65
  %v69 = vpack.c.bf16 %v68, %v67
  %v70 = vld [vmem:[%s3] sm:$0xf]
  %v71 = vld [vmem:[%s3 + $0x4] sm:$0xf]
  %v72 = vld [vmem:[%s3 + $0x8] sm:$0xf]
  %v73 = vld [vmem:[%s3 + $0xc] sm:$0xf]
  %v74 = vld [vmem:[%s4] sm:$0x1]
  %v76 = vlaneseq
  %v77 = vshrl.u32 %v76, 7
  %v78 = vsub.s32 0, %v77
  %v79 = vrot.slane %v74, %v78
  %v85 = vunpack.c.l.b16 %v70
  %v86 = vunpack.c.l.b16 %v71
  %v87 = vunpack.c.l.b16 %v72
  %v88 = vunpack.c.l.b16 %v73
  %v89 = vpack.c.b16 %v86, %v85
  %v90 = vpack.c.b16 %v88, %v87
  %v94 = vsel %vm25, %v69, 0
  %96 = vmatprep.subr.bf16.mxu0 0
  %97 = vmatpush1.bf16.msra.mxu0 %v89
  %98 = vmatprep.subr.bf16.mxu0 0
  %99 = vmatpush1.bf16.msra.mxu0 %v90
  %100 = vmatprep.subr.bf16.mxu0 0
  %101 = vmatpush1.bf16.msra.mxu0 0
  %102 = vmatprep.subr.bf16.mxu0 0
  %103 = vmatpush1.bf16.msra.mxu0 0
  %104 = vmatprep.subr.bf16.mxu0 0
  %105 = vmatpush1.bf16.msra.mxu0 0
  %106 = vmatprep.subr.bf16.mxu0 0
  %107 = vmatpush1.bf16.msra.mxu0 0
  %108 = vmatprep.subr.bf16.mxu0 0
  %109 = vmatpush1.bf16.msra.mxu0 0
  %110 = vmatprep.subr.bf16.mxu0 0
  %111 = vmatpush1.bf16.msra.mxu0 0
  %112 = vmatprep.subr.bf16.mxu0 0
  %113 = vmatpush1.bf16.msra.mxu0 0
  %114 = vmatprep.subr.bf16.mxu0 0
  %115 = vmatpush1.bf16.msra.mxu0 0
  %116 = vmatprep.subr.bf16.mxu0 0
  %117 = vmatpush1.bf16.msra.mxu0 0
  %118 = vmatprep.subr.bf16.mxu0 0
  %119 = vmatpush1.bf16.msra.mxu0 0
  %120 = vmatprep.subr.bf16.mxu0 0
  %121 = vmatpush1.bf16.msra.mxu0 0
  %122 = vmatprep.subr.bf16.mxu0 0
  %123 = vmatpush1.bf16.msra.mxu0 0
  %124 = vmatprep.subr.bf16.mxu0 0
  %125 = vmatpush1.bf16.msra.mxu0 0
  %126 = vmatprep.subr.bf16.mxu0 0
  %127 = vmatpush1.bf16.msra.mxu0 0
  %128 = vmatprep.mubr.bf16.mxu0 0
  %129 = vmatmul.mubr.bf16.gmra.mrb[0].mxu0 %v94
  %v130 = vpop.f32.mrb[0].mxu0
  %v131 = vadd.f32 %v79, %v130
  %v132 = vpop.f32.mrb[0].mxu0
  %v133 = vpop.f32.mrb[0].mxu0
  %v134 = vadd.f32 %v79, %v133
  %v135 = vpop.f32.mrb[0].mxu0
  %136 = vdwg.mxu0
  %137 = vst [vmem:[%s5] sm:$0xff] %v131
  %138 = vst [vmem:[%s5 + $0x8] sm:$0xff] %v134
  // Predicated region
  $region22: #{decoder_forward.17} parent=0 // pred_check
    _
  $region23: #{decoder_forward.17} parent=0 // pred_check_branch
    %140 = sbr.rel (0) target = $region25
  $region24: #{decoder_forward.17} parent=0 // pred_region
    _
  $region25: #{decoder_forward.17} parent=0 // pred_fallthru
    _
  // Predicated region
  $region26: #{decoder_forward.17} parent=0 // pred_check
    _
  $region27: #{decoder_forward.17} parent=0 // pred_check_branch
    %142 = sbr.rel (0) target = $region29
  $region28: #{decoder_forward.17} parent=0 // pred_region
    _
  $region29: #{decoder_forward.17} parent=0 // pred_fallthru
    _

</llo_original>
